<compile_context>
chip_gen: v7x
topology: tpu7x:2x2x1
jax: 0.10.0
libtpu: 0.0.40
codegen_flags: <defaults>
</compile_context>

<pallas_src>
import functools

import jax
import jax.numpy as jnp
from jax.experimental import pallas as pl
from jax.experimental.pallas import tpu as pltpu

KSIZE = 7
PAD = KSIZE // 2


def _round_up(a, b):
    return (a + b - 1) // b * b


def _largest_divisor_leq(n, cap, multiple_of=1):
    cap = max(1, min(n, cap))
    for d in range(cap, 0, -1):
        if n % d == 0 and d % multiple_of == 0:
            return d
    return None


def _vmem_capacity_bytes():
    try:
        info = pltpu.get_tpu_info()
        cap = getattr(info, "vmem_capacity_bytes", None)
        if cap:
            return int(cap)
    except Exception:
        pass
    return 64 * 1024 * 1024  # conservative: v7x per-core VMEM


def _spatial_attention_kernel(w_sref, x_ref, o_ref, sum_ref, max_ref, *,
                              c_total, ck, unroll, height, width):
    # w_sref : (2*KSIZE*KSIZE,) f32 SMEM   (scalar-prefetched conv weight, OIHW flat)
    # x_ref  : (1, ct, H*W) VMEM           (one channel chunk of one batch element)
    # o_ref  : (1, 1, H*W) VMEM
    # sum_ref, max_ref : (1, H*W) f32 VMEM (persist across the channel-chunk axis)
    hw = height * width
    ct = x_ref.shape[1]
    c = pl.program_id(1)
    nc = pl.num_programs(1)

    # ---- streaming channel reduction (sum + max), vreg-bounded sub-chunks ---
    def body(i, carry):
        s, m = carry
        start = pl.multiple_of(i * ck, ck)
        blk = x_ref[0, pl.ds(start, ck)].astype(jnp.float32)       # (ck, HW)
        return (s + jnp.sum(blk, axis=0, keepdims=True),
                jnp.maximum(m, jnp.max(blk, axis=0, keepdims=True)))

    part_sum, part_max = jax.lax.fori_loop(
        0, ct // ck, body,
        (jnp.zeros((1, hw), jnp.float32),
         jnp.full((1, hw), -jnp.inf, jnp.float32)),
        unroll=unroll)

    @pl.when(c == 0)
    def _init():
        sum_ref[...] = part_sum
        max_ref[...] = part_max

    @pl.when(c > 0)
    def _accumulate():
        sum_ref[...] = sum_ref[...] + part_sum
        max_ref[...] = jnp.maximum(max_ref[...], part_max)

    # ---- finalize: 7x7 conv (2 -> 1 ch) + sigmoid, flat (lane) domain -------
    @pl.when(c == nc - 1)
    def _finalize():
        avg = sum_ref[...] * jnp.float32(1.0 / c_total)            # (1, HW)
        mxm = max_ref[...]                                         # (1, HW)

        # hoist all 98 scalar weight reads out of the tap loops
        wv = [[[w_sref[ci * KSIZE * KSIZE + kh * KSIZE + kw]
                for kw in range(KSIZE)]
               for kh in range(KSIZE)]
              for ci in range(2)]

        # column index of every flat position, built without vector div/rem:
        # one (1, W) iota concatenated H times along the lane axis.
        col1 = jax.lax.broadcasted_iota(jnp.int32, (1, width), 1)
        col = jnp.concatenate([col1] * height, axis=1)             # (1, HW)

        col_ok = []
        for kw in range(KSIZE):
            dw = kw - PAD
            if dw < 0:
                col_ok.append(col >= -dw)
            elif dw > 0:
                col_ok.append(col < width - dw)
            else:
                col_ok.append(None)

        # zero padding of PAD*W+PAD flat positions on both ends makes every
        # out-of-range *row* read a zero; the column wrap is fixed by col_ok.
        padf = PAD * width + PAD
        zpad = jnp.zeros((1, padf), jnp.float32)

        acc = jnp.zeros((1, hw), jnp.float32)
        for ci, fmap in enumerate((avg, mxm)):
            pm = jnp.concatenate([zpad, fmap, zpad], axis=1)       # (1, HW+2*padf)
            for kw in range(KSIZE):
                dw = kw - PAD
                ok = col_ok[kw]
                for kh in range(KSIZE):
                    dh = kh - PAD
                    off = padf + dh * width + dw
                    tap = pm[:, off:off + hw]                      # lane-shifted view
                    if ok is not None:
                        tap = jnp.where(ok, tap, 0.0)
                    acc = acc + wv[ci][kh][kw] * tap

        o_ref[0] = jax.nn.sigmoid(acc).astype(o_ref.dtype)


def spatial_attention(x, w):
    """x: (N, C, H, W), w: (1, 2, 7, 7) -> sigmoid(conv7x7(mean(x,1)||max(x,1))): (N, 1, H, W)."""
    N, C, H, W = x.shape
    HW = H * W
    itemsize = x.dtype.itemsize
    sub_mult = {4: 8, 2: 16, 1: 32}.get(itemsize, 8)
    lanes = _round_up(HW, 128)

    # lane-dense layout: flatten spatial into the minor dim (free for NCHW).
    x_flat = x.reshape(N, C, HW)
    w_flat = w.reshape(-1).astype(jnp.float32)      # (2*KSIZE*KSIZE,), scalar prefetch

    # channel-chunk size from the *padded* VMEM footprint, generation-aware:
    # target ~VMEM/8 per (double-buffered) input block.
    vmem_cap = _vmem_capacity_bytes()
    target_buf = max(1 << 20, vmem_cap // 8)
    padded_bytes_per_chan = lanes * itemsize
    ct_cap = max(1, target_buf // padded_bytes_per_chan)
    if C <= ct_cap:
        ct = C                                       # single chunk (block == full C)
    else:
        ct = (_largest_divisor_leq(C, ct_cap, multiple_of=sub_mult)
              or _largest_divisor_leq(C, ct_cap)
              or C)
        # TODO(synk): for awkward/prime C this can degrade to tiny chunks; pad or
        # mask the last chunk instead of requiring an exact divisor.
    n_c_chunks = C // ct

    # inner vreg-bounded sub-chunk (<= ~16 vregs of f32 per load) for the
    # unrolled reduction loop.
    ck_cap = max(1, min(4 * sub_mult, (64 * 1024) // (lanes * 4)))
    ck = (_largest_divisor_leq(ct, ck_cap, multiple_of=min(sub_mult, ct))
          or _largest_divisor_leq(ct, ck_cap)
          or 1)
    n_sub = ct // ck
    unroll = n_sub if n_sub <= 8 else 4

    # explicit scoped-VMEM budget from the *tiled* footprint (lane dim rounded
    # up to 128, sublane dim to the dtype tiling), clamped to physical VMEM.
    in_block = _round_up(ct, sub_mult) * lanes * itemsize
    out_block = sub_mult * lanes * itemsize
    scratch = 2 * 8 * lanes * 4
    need = 2 * in_block + 2 * out_block + scratch + (1 << 20)
    vmem_limit = int(min(vmem_cap, max(32 * 1024 * 1024, need + need // 2)))

    kernel = functools.partial(_spatial_attention_kernel,
                               c_total=C, ck=ck, unroll=unroll,
                               height=H, width=W)

    out_flat = pl.pallas_call(
        kernel,
        out_shape=jax.ShapeDtypeStruct((N, 1, HW), x.dtype),
        grid_spec=pltpu.PrefetchScalarGridSpec(
            num_scalar_prefetch=1,
            grid=(N, n_c_chunks),
            in_specs=[
                pl.BlockSpec((1, ct, HW), lambda n, c, wref: (n, c, 0)),
            ],
            out_specs=pl.BlockSpec((1, 1, HW), lambda n, c, wref: (n, 0, 0)),
            scratch_shapes=[
                pltpu.VMEM((1, HW), jnp.float32),    # running channel sum
                pltpu.VMEM((1, HW), jnp.float32),    # running channel max
            ],
        ),
        compiler_params=pltpu.CompilerParams(
            dimension_semantics=("parallel", "arbitrary"),
            vmem_limit_bytes=vmem_limit,
        ),
    )(w_flat, x_flat)

    return out_flat.reshape(N, 1, H, W)


def spatial_attention_ref(x, w):
    """Pure-JAX reference matching the PyTorch forward exactly."""
    avg = jnp.mean(x, axis=1, keepdims=True)
    mx = jnp.max(x, axis=1, keepdims=True)
    xc = jnp.concatenate([avg, mx], axis=1)
    out = jax.lax.conv_general_dilated(
        xc, w, window_strides=(1, 1),
        padding=((PAD, PAD), (PAD, PAD)),
        dimension_numbers=("NCHW", "OIHW", "NCHW"),
    )
    return jax.nn.sigmoid(out)


if __name__ == "__main__":
    key = jax.random.PRNGKey(0)
    kx, kw = jax.random.split(key)

    # small NCHW input consistent with the module's forward
    x = jax.random.normal(kx, (2, 4, 16, 16), dtype=jnp.float32)
    # conv weight, shape from nn.Conv2d(2, 1, 7, bias=False)
    w = jax.random.normal(kw, (1, 2, KSIZE, KSIZE), dtype=jnp.float32) * 0.1

    out = jax.block_until_ready(spatial_attention(x, w))

    ref = spatial_attention_ref(x, w)
    assert out.shape == (2, 1, 16, 16)
    assert jnp.allclose(out, ref, atol=1e-5, rtol=1e-5), (
        float(jnp.max(jnp.abs(out - ref)))
    )
    print("KERNEL_OK")
</pallas_src>

<mosaic_0001>
module attributes {stable_mosaic.version = 11 : i64} {
  func.func @_spatial_attention_kernel(%arg0: i32, %arg1: i32, %arg2: memref<98xf32, #tpu.memory_space<smem>>, %arg3: memref<1x4x256xf32, #tpu.memory_space<vmem>>, %arg4: memref<1x1x256xf32, #tpu.memory_space<vmem>>, %arg5: memref<1x256xf32, #tpu.memory_space<vmem>>, %arg6: memref<1x256xf32, #tpu.memory_space<vmem>>) attributes {dimension_semantics = [#tpu.dimension_semantics<parallel>, #tpu.dimension_semantics<arbitrary>], iteration_bounds = array<i64: 2, 1>, scalar_prefetch = 1 : i64, scratch_operands = 2 : i64, tpu.core_type = #tpu.core_type<tc>, window_params = [{transform_indices = @transform_0, window_bounds = array<i64: 1, 4, 256>}, {transform_indices = @transform_1, window_bounds = array<i64: 1, 1, 256>}]} {
    %cst = arith.constant 0.000000e+00 : f32
    %0 = vector.broadcast %cst : f32 to vector<1x256xf32>
    %cst_0 = arith.constant 0xFF800000 : f32
    %1 = vector.broadcast %cst_0 : f32 to vector<1x256xf32>
    %c0_i32 = arith.constant 0 : i32
    %c4_i32 = arith.constant 4 : i32
    %2 = arith.muli %c0_i32, %c4_i32 : i32
    %3 = tpu.assume_multiple %2, 4 : i32
    %c0 = arith.constant 0 : index
    %4 = arith.index_cast %3 : i32 to index
    %c0_1 = arith.constant 0 : index
    %5 = vector.load %arg3[%c0, %4, %c0_1] : memref<1x4x256xf32, #tpu.memory_space<vmem>>, vector<1x4x256xf32>
    %6 = vector.shape_cast %5 : vector<1x4x256xf32> to vector<4x256xf32>
    %cst_2 = arith.constant dense<0.000000e+00> : vector<256xf32>
    %7 = vector.multi_reduction <add>, %6, %cst_2 [0] : vector<4x256xf32> to vector<256xf32>
    %8 = vector.shape_cast %7 : vector<256xf32> to vector<1x256xf32>
    %9 = arith.addf %0, %8 : vector<1x256xf32>
    %cst_3 = arith.constant dense<0xFF800000> : vector<256xf32>
    %10 = vector.multi_reduction <maximumf>, %6, %cst_3 [0] : vector<4x256xf32> to vector<256xf32>
    %11 = vector.shape_cast %10 : vector<256xf32> to vector<1x256xf32>
    %12 = arith.maximumf %1, %11 : vector<1x256xf32>
    %c1_i32 = arith.constant 1 : i32
    %c0_i32_4 = arith.constant 0 : i32
    %13 = arith.cmpi eq, %arg1, %c0_i32_4 : i32
    %14 = arith.extui %13 : i1 to i32
    %c0_i32_5 = arith.constant 0 : i32
    %15 = arith.cmpi ne, %14, %c0_i32_5 : i32
    scf.if %15 {
      %c0_10 = arith.constant 0 : index
      %c0_11 = arith.constant 0 : index
      %22 = vector.load %arg5[%c0_10, %c0_11] : memref<1x256xf32, #tpu.memory_space<vmem>>, vector<1x256xf32>
      tpu.vector_store %arg5[%c0_10, %c0_11], %9 {strides = array<i32>} : memref<1x256xf32, #tpu.memory_space<vmem>>, vector<1x256xf32>,
      %c0_12 = arith.constant 0 : index
      %c0_13 = arith.constant 0 : index
      %23 = vector.load %arg6[%c0_12, %c0_13] : memref<1x256xf32, #tpu.memory_space<vmem>>, vector<1x256xf32>
      tpu.vector_store %arg6[%c0_12, %c0_13], %12 {strides = array<i32>} : memref<1x256xf32, #tpu.memory_space<vmem>>, vector<1x256xf32>,
    } else {
    }
    %c0_i32_6 = arith.constant 0 : i32
    %16 = arith.cmpi sgt, %arg1, %c0_i32_6 : i32
    %17 = arith.extui %16 : i1 to i32
    %c0_i32_7 = arith.constant 0 : i32
    %18 = arith.cmpi ne, %17, %c0_i32_7 : i32
    scf.if %18 {
      %c0_10 = arith.constant 0 : index
      %c0_11 = arith.constant 0 : index
      %22 = vector.load %arg5[%c0_10, %c0_11] : memref<1x256xf32, #tpu.memory_space<vmem>>, vector<1x256xf32>
      %23 = arith.addf %22, %9 : vector<1x256xf32>
      %c0_12 = arith.constant 0 : index
      %c0_13 = arith.constant 0 : index
      %24 = vector.load %arg5[%c0_12, %c0_13] : memref<1x256xf32, #tpu.memory_space<vmem>>, vector<1x256xf32>
      tpu.vector_store %arg5[%c0_12, %c0_13], %23 {strides = array<i32>} : memref<1x256xf32, #tpu.memory_space<vmem>>, vector<1x256xf32>,
      %c0_14 = arith.constant 0 : index
      %c0_15 = arith.constant 0 : index
      %25 = vector.load %arg6[%c0_14, %c0_15] : memref<1x256xf32, #tpu.memory_space<vmem>>, vector<1x256xf32>
      %26 = arith.maximumf %25, %12 : vector<1x256xf32>
      %c0_16 = arith.constant 0 : index
      %c0_17 = arith.constant 0 : index
      %27 = vector.load %arg6[%c0_16, %c0_17] : memref<1x256xf32, #tpu.memory_space<vmem>>, vector<1x256xf32>
      tpu.vector_store %arg6[%c0_16, %c0_17], %26 {strides = array<i32>} : memref<1x256xf32, #tpu.memory_space<vmem>>, vector<1x256xf32>,
    } else {
    }
    %c0_i32_8 = arith.constant 0 : i32
    %19 = arith.cmpi eq, %arg1, %c0_i32_8 : i32
    %20 = arith.extui %19 : i1 to i32
    %c0_i32_9 = arith.constant 0 : i32
    %21 = arith.cmpi ne, %20, %c0_i32_9 : i32
    scf.if %21 {
      %c0_10 = arith.constant 0 : index
      %c0_11 = arith.constant 0 : index
      %22 = vector.load %arg5[%c0_10, %c0_11] : memref<1x256xf32, #tpu.memory_space<vmem>>, vector<1x256xf32>
      %cst_12 = arith.constant 2.500000e-01 : f32
      %23 = vector.broadcast %cst_12 : f32 to vector<1x256xf32>
      %24 = arith.mulf %22, %23 : vector<1x256xf32>
      %c0_13 = arith.constant 0 : index
      %c0_14 = arith.constant 0 : index
      %25 = vector.load %arg6[%c0_13, %c0_14] : memref<1x256xf32, #tpu.memory_space<vmem>>, vector<1x256xf32>
      %c0_15 = arith.constant 0 : index
      %26 = memref.load %arg2[%c0_15] : memref<98xf32, #tpu.memory_space<smem>>
      %c1 = arith.constant 1 : index
      %27 = memref.load %arg2[%c1] : memref<98xf32, #tpu.memory_space<smem>>
      %c2 = arith.constant 2 : index
      %28 = memref.load %arg2[%c2] : memref<98xf32, #tpu.memory_space<smem>>
      %c3 = arith.constant 3 : index
      %29 = memref.load %arg2[%c3] : memref<98xf32, #tpu.memory_space<smem>>
      %c4 = arith.constant 4 : index
      %30 = memref.load %arg2[%c4] : memref<98xf32, #tpu.memory_space<smem>>
      %c5 = arith.constant 5 : index
      %31 = memref.load %arg2[%c5] : memref<98xf32, #tpu.memory_space<smem>>
      %c6 = arith.constant 6 : index
      %32 = memref.load %arg2[%c6] : memref<98xf32, #tpu.memory_space<smem>>
      %c7 = arith.constant 7 : index
      %33 = memref.load %arg2[%c7] : memref<98xf32, #tpu.memory_space<smem>>
      %c8 = arith.constant 8 : index
      %34 = memref.load %arg2[%c8] : memref<98xf32, #tpu.memory_space<smem>>
      %c9 = arith.constant 9 : index
      %35 = memref.load %arg2[%c9] : memref<98xf32, #tpu.memory_space<smem>>
      %c10 = arith.constant 10 : index
      %36 = memref.load %arg2[%c10] : memref<98xf32, #tpu.memory_space<smem>>
      %c11 = arith.constant 11 : index
      %37 = memref.load %arg2[%c11] : memref<98xf32, #tpu.memory_space<smem>>
      %c12 = arith.constant 12 : index
      %38 = memref.load %arg2[%c12] : memref<98xf32, #tpu.memory_space<smem>>
      %c13 = arith.constant 13 : index
      %39 = memref.load %arg2[%c13] : memref<98xf32, #tpu.memory_space<smem>>
      %c14 = arith.constant 14 : index
      %40 = memref.load %arg2[%c14] : memref<98xf32, #tpu.memory_space<smem>>
      %c15 = arith.constant 15 : index
      %41 = memref.load %arg2[%c15] : memref<98xf32, #tpu.memory_space<smem>>
      %c16 = arith.constant 16 : index
      %42 = memref.load %arg2[%c16] : memref<98xf32, #tpu.memory_space<smem>>
      %c17 = arith.constant 17 : index
      %43 = memref.load %arg2[%c17] : memref<98xf32, #tpu.memory_space<smem>>
      %c18 = arith.constant 18 : index
      %44 = memref.load %arg2[%c18] : memref<98xf32, #tpu.memory_space<smem>>
      %c19 = arith.constant 19 : index
      %45 = memref.load %arg2[%c19] : memref<98xf32, #tpu.memory_space<smem>>
      %c20 = arith.constant 20 : index
      %46 = memref.load %arg2[%c20] : memref<98xf32, #tpu.memory_space<smem>>
      %c21 = arith.constant 21 : index
      %47 = memref.load %arg2[%c21] : memref<98xf32, #tpu.memory_space<smem>>
      %c22 = arith.constant 22 : index
      %48 = memref.load %arg2[%c22] : memref<98xf32, #tpu.memory_space<smem>>
      %c23 = arith.constant 23 : index
      %49 = memref.load %arg2[%c23] : memref<98xf32, #tpu.memory_space<smem>>
      %c24 = arith.constant 24 : index
      %50 = memref.load %arg2[%c24] : memref<98xf32, #tpu.memory_space<smem>>
      %c25 = arith.constant 25 : index
      %51 = memref.load %arg2[%c25] : memref<98xf32, #tpu.memory_space<smem>>
      %c26 = arith.constant 26 : index
      %52 = memref.load %arg2[%c26] : memref<98xf32, #tpu.memory_space<smem>>
      %c27 = arith.constant 27 : index
      %53 = memref.load %arg2[%c27] : memref<98xf32, #tpu.memory_space<smem>>
      %c28 = arith.constant 28 : index
      %54 = memref.load %arg2[%c28] : memref<98xf32, #tpu.memory_space<smem>>
      %c29 = arith.constant 29 : index
      %55 = memref.load %arg2[%c29] : memref<98xf32, #tpu.memory_space<smem>>
      %c30 = arith.constant 30 : index
      %56 = memref.load %arg2[%c30] : memref<98xf32, #tpu.memory_space<smem>>
      %c31 = arith.constant 31 : index
      %57 = memref.load %arg2[%c31] : memref<98xf32, #tpu.memory_space<smem>>
      %c32 = arith.constant 32 : index
      %58 = memref.load %arg2[%c32] : memref<98xf32, #tpu.memory_space<smem>>
      %c33 = arith.constant 33 : index
      %59 = memref.load %arg2[%c33] : memref<98xf32, #tpu.memory_space<smem>>
      %c34 = arith.constant 34 : index
      %60 = memref.load %arg2[%c34] : memref<98xf32, #tpu.memory_space<smem>>
      %c35 = arith.constant 35 : index
      %61 = memref.load %arg2[%c35] : memref<98xf32, #tpu.memory_space<smem>>
      %c36 = arith.constant 36 : index
      %62 = memref.load %arg2[%c36] : memref<98xf32, #tpu.memory_space<smem>>
      %c37 = arith.constant 37 : index
      %63 = memref.load %arg2[%c37] : memref<98xf32, #tpu.memory_space<smem>>
      %c38 = arith.constant 38 : index
      %64 = memref.load %arg2[%c38] : memref<98xf32, #tpu.memory_space<smem>>
      %c39 = arith.constant 39 : index
      %65 = memref.load %arg2[%c39] : memref<98xf32, #tpu.memory_space<smem>>
      %c40 = arith.constant 40 : index
      %66 = memref.load %arg2[%c40] : memref<98xf32, #tpu.memory_space<smem>>
      %c41 = arith.constant 41 : index
      %67 = memref.load %arg2[%c41] : memref<98xf32, #tpu.memory_space<smem>>
      %c42 = arith.constant 42 : index
      %68 = memref.load %arg2[%c42] : memref<98xf32, #tpu.memory_space<smem>>
      %c43 = arith.constant 43 : index
      %69 = memref.load %arg2[%c43] : memref<98xf32, #tpu.memory_space<smem>>
      %c44 = arith.constant 44 : index
      %70 = memref.load %arg2[%c44] : memref<98xf32, #tpu.memory_space<smem>>
      %c45 = arith.constant 45 : index
      %71 = memref.load %arg2[%c45] : memref<98xf32, #tpu.memory_space<smem>>
      %c46 = arith.constant 46 : index
      %72 = memref.load %arg2[%c46] : memref<98xf32, #tpu.memory_space<smem>>
      %c47 = arith.constant 47 : index
      %73 = memref.load %arg2[%c47] : memref<98xf32, #tpu.memory_space<smem>>
      %c48 = arith.constant 48 : index
      %74 = memref.load %arg2[%c48] : memref<98xf32, #tpu.memory_space<smem>>
      %c49 = arith.constant 49 : index
      %75 = memref.load %arg2[%c49] : memref<98xf32, #tpu.memory_space<smem>>
      %c50 = arith.constant 50 : index
      %76 = memref.load %arg2[%c50] : memref<98xf32, #tpu.memory_space<smem>>
      %c51 = arith.constant 51 : index
      %77 = memref.load %arg2[%c51] : memref<98xf32, #tpu.memory_space<smem>>
      %c52 = arith.constant 52 : index
      %78 = memref.load %arg2[%c52] : memref<98xf32, #tpu.memory_space<smem>>
      %c53 = arith.constant 53 : index
      %79 = memref.load %arg2[%c53] : memref<98xf32, #tpu.memory_space<smem>>
      %c54 = arith.constant 54 : index
      %80 = memref.load %arg2[%c54] : memref<98xf32, #tpu.memory_space<smem>>
      %c55 = arith.constant 55 : index
      %81 = memref.load %arg2[%c55] : memref<98xf32, #tpu.memory_space<smem>>
      %c56 = arith.constant 56 : index
      %82 = memref.load %arg2[%c56] : memref<98xf32, #tpu.memory_space<smem>>
      %c57 = arith.constant 57 : index
      %83 = memref.load %arg2[%c57] : memref<98xf32, #tpu.memory_space<smem>>
      %c58 = arith.constant 58 : index
      %84 = memref.load %arg2[%c58] : memref<98xf32, #tpu.memory_space<smem>>
      %c59 = arith.constant 59 : index
      %85 = memref.load %arg2[%c59] : memref<98xf32, #tpu.memory_space<smem>>
      %c60 = arith.constant 60 : index
      %86 = memref.load %arg2[%c60] : memref<98xf32, #tpu.memory_space<smem>>
      %c61 = arith.constant 61 : index
      %87 = memref.load %arg2[%c61] : memref<98xf32, #tpu.memory_space<smem>>
      %c62 = arith.constant 62 : index
      %88 = memref.load %arg2[%c62] : memref<98xf32, #tpu.memory_space<smem>>
      %c63 = arith.constant 63 : index
      %89 = memref.load %arg2[%c63] : memref<98xf32, #tpu.memory_space<smem>>
      %c64 = arith.constant 64 : index
      %90 = memref.load %arg2[%c64] : memref<98xf32, #tpu.memory_space<smem>>
      %c65 = arith.constant 65 : index
      %91 = memref.load %arg2[%c65] : memref<98xf32, #tpu.memory_space<smem>>
      %c66 = arith.constant 66 : index
      %92 = memref.load %arg2[%c66] : memref<98xf32, #tpu.memory_space<smem>>
      %c67 = arith.constant 67 : index
      %93 = memref.load %arg2[%c67] : memref<98xf32, #tpu.memory_space<smem>>
      %c68 = arith.constant 68 : index
      %94 = memref.load %arg2[%c68] : memref<98xf32, #tpu.memory_space<smem>>
      %c69 = arith.constant 69 : index
      %95 = memref.load %arg2[%c69] : memref<98xf32, #tpu.memory_space<smem>>
      %c70 = arith.constant 70 : index
      %96 = memref.load %arg2[%c70] : memref<98xf32, #tpu.memory_space<smem>>
      %c71 = arith.constant 71 : index
      %97 = memref.load %arg2[%c71] : memref<98xf32, #tpu.memory_space<smem>>
      %c72 = arith.constant 72 : index
      %98 = memref.load %arg2[%c72] : memref<98xf32, #tpu.memory_space<smem>>
      %c73 = arith.constant 73 : index
      %99 = memref.load %arg2[%c73] : memref<98xf32, #tpu.memory_space<smem>>
      %c74 = arith.constant 74 : index
      %100 = memref.load %arg2[%c74] : memref<98xf32, #tpu.memory_space<smem>>
      %c75 = arith.constant 75 : index
      %101 = memref.load %arg2[%c75] : memref<98xf32, #tpu.memory_space<smem>>
      %c76 = arith.constant 76 : index
      %102 = memref.load %arg2[%c76] : memref<98xf32, #tpu.memory_space<smem>>
      %c77 = arith.constant 77 : index
      %103 = memref.load %arg2[%c77] : memref<98xf32, #tpu.memory_space<smem>>
      %c78 = arith.constant 78 : index
      %104 = memref.load %arg2[%c78] : memref<98xf32, #tpu.memory_space<smem>>
      %c79 = arith.constant 79 : index
      %105 = memref.load %arg2[%c79] : memref<98xf32, #tpu.memory_space<smem>>
      %c80 = arith.constant 80 : index
      %106 = memref.load %arg2[%c80] : memref<98xf32, #tpu.memory_space<smem>>
      %c81 = arith.constant 81 : index
      %107 = memref.load %arg2[%c81] : memref<98xf32, #tpu.memory_space<smem>>
      %c82 = arith.constant 82 : index
      %108 = memref.load %arg2[%c82] : memref<98xf32, #tpu.memory_space<smem>>
      %c83 = arith.constant 83 : index
      %109 = memref.load %arg2[%c83] : memref<98xf32, #tpu.memory_space<smem>>
      %c84 = arith.constant 84 : index
      %110 = memref.load %arg2[%c84] : memref<98xf32, #tpu.memory_space<smem>>
      %c85 = arith.constant 85 : index
      %111 = memref.load %arg2[%c85] : memref<98xf32, #tpu.memory_space<smem>>
      %c86 = arith.constant 86 : index
      %112 = memref.load %arg2[%c86] : memref<98xf32, #tpu.memory_space<smem>>
      %c87 = arith.constant 87 : index
      %113 = memref.load %arg2[%c87] : memref<98xf32, #tpu.memory_space<smem>>
      %c88 = arith.constant 88 : index
      %114 = memref.load %arg2[%c88] : memref<98xf32, #tpu.memory_space<smem>>
      %c89 = arith.constant 89 : index
      %115 = memref.load %arg2[%c89] : memref<98xf32, #tpu.memory_space<smem>>
      %c90 = arith.constant 90 : index
      %116 = memref.load %arg2[%c90] : memref<98xf32, #tpu.memory_space<smem>>
      %c91 = arith.constant 91 : index
      %117 = memref.load %arg2[%c91] : memref<98xf32, #tpu.memory_space<smem>>
      %c92 = arith.constant 92 : index
      %118 = memref.load %arg2[%c92] : memref<98xf32, #tpu.memory_space<smem>>
      %c93 = arith.constant 93 : index
      %119 = memref.load %arg2[%c93] : memref<98xf32, #tpu.memory_space<smem>>
      %c94 = arith.constant 94 : index
      %120 = memref.load %arg2[%c94] : memref<98xf32, #tpu.memory_space<smem>>
      %c95 = arith.constant 95 : index
      %121 = memref.load %arg2[%c95] : memref<98xf32, #tpu.memory_space<smem>>
      %c96 = arith.constant 96 : index
      %122 = memref.load %arg2[%c96] : memref<98xf32, #tpu.memory_space<smem>>
      %c97 = arith.constant 97 : index
      %123 = memref.load %arg2[%c97] : memref<98xf32, #tpu.memory_space<smem>>
      %124 = tpu.iota {dimensions = array<i32: 1>} : vector<1x16xi32>
      %125 = tpu.concatenate %124, %124, %124, %124, %124, %124, %124, %124, %124, %124, %124, %124, %124, %124, %124, %124 in 1 : vector<1x16xi32>, vector<1x16xi32>, vector<1x16xi32>, vector<1x16xi32>, vector<1x16xi32>, vector<1x16xi32>, vector<1x16xi32>, vector<1x16xi32>, vector<1x16xi32>, vector<1x16xi32>, vector<1x16xi32>, vector<1x16xi32>, vector<1x16xi32>, vector<1x16xi32>, vector<1x16xi32>, vector<1x16xi32> -> vector<1x256xi32>
      %c3_i32 = arith.constant 3 : i32
      %126 = vector.broadcast %c3_i32 : i32 to vector<1x256xi32>
      %127 = arith.cmpi sge, %125, %126 : vector<1x256xi32>
      %c2_i32 = arith.constant 2 : i32
      %128 = vector.broadcast %c2_i32 : i32 to vector<1x256xi32>
      %129 = arith.cmpi sge, %125, %128 : vector<1x256xi32>
      %c1_i32_16 = arith.constant 1 : i32
      %130 = vector.broadcast %c1_i32_16 : i32 to vector<1x256xi32>
      %131 = arith.cmpi sge, %125, %130 : vector<1x256xi32>
      %c15_i32 = arith.constant 15 : i32
      %132 = vector.broadcast %c15_i32 : i32 to vector<1x256xi32>
      %133 = arith.cmpi slt, %125, %132 : vector<1x256xi32>
      %c14_i32 = arith.constant 14 : i32
      %134 = vector.broadcast %c14_i32 : i32 to vector<1x256xi32>
      %135 = arith.cmpi slt, %125, %134 : vector<1x256xi32>
      %c13_i32 = arith.constant 13 : i32
      %136 = vector.broadcast %c13_i32 : i32 to vector<1x256xi32>
      %137 = arith.cmpi slt, %125, %136 : vector<1x256xi32>
      %cst_17 = arith.constant 0.000000e+00 : f32
      %138 = vector.broadcast %cst_17 : f32 to vector<1x51xf32>
      %cst_18 = arith.constant 0.000000e+00 : f32
      %139 = vector.broadcast %cst_18 : f32 to vector<1x256xf32>
      %140 = tpu.concatenate %138, %24, %138 in 1 : vector<1x51xf32>, vector<1x256xf32>, vector<1x51xf32> -> vector<1x358xf32>
      %141 = vector.extract_strided_slice %140 {offsets = [0, 0], sizes = [1, 256], strides = [1, 1]} : vector<1x358xf32> to vector<1x256xf32>
      %cst_19 = arith.constant 0.000000e+00 : f32
      %142 = vector.broadcast %cst_19 : f32 to vector<1x256xf32>
      %143 = arith.select %127, %141, %142 : vector<1x256xi1>, vector<1x256xf32>
      %144 = vector.broadcast %26 : f32 to vector<1x256xf32>
      %145 = arith.mulf %144, %143 : vector<1x256xf32>
      %146 = arith.addf %139, %145 : vector<1x256xf32>
      %147 = vector.extract_strided_slice %140 {offsets = [0, 16], sizes = [1, 256], strides = [1, 1]} : vector<1x358xf32> to vector<1x256xf32>
      %cst_20 = arith.constant 0.000000e+00 : f32
      %148 = vector.broadcast %cst_20 : f32 to vector<1x256xf32>
      %149 = arith.select %127, %147, %148 : vector<1x256xi1>, vector<1x256xf32>
      %150 = vector.broadcast %33 : f32 to vector<1x256xf32>
      %151 = arith.mulf %150, %149 : vector<1x256xf32>
      %152 = arith.addf %146, %151 : vector<1x256xf32>
      %153 = vector.extract_strided_slice %140 {offsets = [0, 32], sizes = [1, 256], strides = [1, 1]} : vector<1x358xf32> to vector<1x256xf32>
      %cst_21 = arith.constant 0.000000e+00 : f32
      %154 = vector.broadcast %cst_21 : f32 to vector<1x256xf32>
      %155 = arith.select %127, %153, %154 : vector<1x256xi1>, vector<1x256xf32>
      %156 = vector.broadcast %40 : f32 to vector<1x256xf32>
      %157 = arith.mulf %156, %155 : vector<1x256xf32>
      %158 = arith.addf %152, %157 : vector<1x256xf32>
      %159 = vector.extract_strided_slice %140 {offsets = [0, 48], sizes = [1, 256], strides = [1, 1]} : vector<1x358xf32> to vector<1x256xf32>
      %cst_22 = arith.constant 0.000000e+00 : f32
      %160 = vector.broadcast %cst_22 : f32 to vector<1x256xf32>
      %161 = arith.select %127, %159, %160 : vector<1x256xi1>, vector<1x256xf32>
      %162 = vector.broadcast %47 : f32 to vector<1x256xf32>
      %163 = arith.mulf %162, %161 : vector<1x256xf32>
      %164 = arith.addf %158, %163 : vector<1x256xf32>
      %165 = vector.extract_strided_slice %140 {offsets = [0, 64], sizes = [1, 256], strides = [1, 1]} : vector<1x358xf32> to vector<1x256xf32>
      %cst_23 = arith.constant 0.000000e+00 : f32
      %166 = vector.broadcast %cst_23 : f32 to vector<1x256xf32>
      %167 = arith.select %127, %165, %166 : vector<1x256xi1>, vector<1x256xf32>
      %168 = vector.broadcast %54 : f32 to vector<1x256xf32>
      %169 = arith.mulf %168, %167 : vector<1x256xf32>
      %170 = arith.addf %164, %169 : vector<1x256xf32>
      %171 = vector.extract_strided_slice %140 {offsets = [0, 80], sizes = [1, 256], strides = [1, 1]} : vector<1x358xf32> to vector<1x256xf32>
      %cst_24 = arith.constant 0.000000e+00 : f32
      %172 = vector.broadcast %cst_24 : f32 to vector<1x256xf32>
      %173 = arith.select %127, %171, %172 : vector<1x256xi1>, vector<1x256xf32>
      %174 = vector.broadcast %61 : f32 to vector<1x256xf32>
      %175 = arith.mulf %174, %173 : vector<1x256xf32>
      %176 = arith.addf %170, %175 : vector<1x256xf32>
      %177 = vector.extract_strided_slice %140 {offsets = [0, 96], sizes = [1, 256], strides = [1, 1]} : vector<1x358xf32> to vector<1x256xf32>
      %cst_25 = arith.constant 0.000000e+00 : f32
      %178 = vector.broadcast %cst_25 : f32 to vector<1x256xf32>
      %179 = arith.select %127, %177, %178 : vector<1x256xi1>, vector<1x256xf32>
      %180 = vector.broadcast %68 : f32 to vector<1x256xf32>
      %181 = arith.mulf %180, %179 : vector<1x256xf32>
      %182 = arith.addf %176, %181 : vector<1x256xf32>
      %183 = vector.extract_strided_slice %140 {offsets = [0, 1], sizes = [1, 256], strides = [1, 1]} : vector<1x358xf32> to vector<1x256xf32>
      %cst_26 = arith.constant 0.000000e+00 : f32
      %184 = vector.broadcast %cst_26 : f32 to vector<1x256xf32>
      %185 = arith.select %129, %183, %184 : vector<1x256xi1>, vector<1x256xf32>
      %186 = vector.broadcast %27 : f32 to vector<1x256xf32>
      %187 = arith.mulf %186, %185 : vector<1x256xf32>
      %188 = arith.addf %182, %187 : vector<1x256xf32>
      %189 = vector.extract_strided_slice %140 {offsets = [0, 17], sizes = [1, 256], strides = [1, 1]} : vector<1x358xf32> to vector<1x256xf32>
      %cst_27 = arith.constant 0.000000e+00 : f32
      %190 = vector.broadcast %cst_27 : f32 to vector<1x256xf32>
      %191 = arith.select %129, %189, %190 : vector<1x256xi1>, vector<1x256xf32>
      %192 = vector.broadcast %34 : f32 to vector<1x256xf32>
      %193 = arith.mulf %192, %191 : vector<1x256xf32>
      %194 = arith.addf %188, %193 : vector<1x256xf32>
      %195 = vector.extract_strided_slice %140 {offsets = [0, 33], sizes = [1, 256], strides = [1, 1]} : vector<1x358xf32> to vector<1x256xf32>
      %cst_28 = arith.constant 0.000000e+00 : f32
      %196 = vector.broadcast %cst_28 : f32 to vector<1x256xf32>
      %197 = arith.select %129, %195, %196 : vector<1x256xi1>, vector<1x256xf32>
      %198 = vector.broadcast %41 : f32 to vector<1x256xf32>
      %199 = arith.mulf %198, %197 : vector<1x256xf32>
      %200 = arith.addf %194, %199 : vector<1x256xf32>
      %201 = vector.extract_strided_slice %140 {offsets = [0, 49], sizes = [1, 256], strides = [1, 1]} : vector<1x358xf32> to vector<1x256xf32>
      %cst_29 = arith.constant 0.000000e+00 : f32
      %202 = vector.broadcast %cst_29 : f32 to vector<1x256xf32>
      %203 = arith.select %129, %201, %202 : vector<1x256xi1>, vector<1x256xf32>
      %204 = vector.broadcast %48 : f32 to vector<1x256xf32>
      %205 = arith.mulf %204, %203 : vector<1x256xf32>
      %206 = arith.addf %200, %205 : vector<1x256xf32>
      %207 = vector.extract_strided_slice %140 {offsets = [0, 65], sizes = [1, 256], strides = [1, 1]} : vector<1x358xf32> to vector<1x256xf32>
      %cst_30 = arith.constant 0.000000e+00 : f32
      %208 = vector.broadcast %cst_30 : f32 to vector<1x256xf32>
      %209 = arith.select %129, %207, %208 : vector<1x256xi1>, vector<1x256xf32>
      %210 = vector.broadcast %55 : f32 to vector<1x256xf32>
      %211 = arith.mulf %210, %209 : vector<1x256xf32>
      %212 = arith.addf %206, %211 : vector<1x256xf32>
      %213 = vector.extract_strided_slice %140 {offsets = [0, 81], sizes = [1, 256], strides = [1, 1]} : vector<1x358xf32> to vector<1x256xf32>
      %cst_31 = arith.constant 0.000000e+00 : f32
      %214 = vector.broadcast %cst_31 : f32 to vector<1x256xf32>
      %215 = arith.select %129, %213, %214 : vector<1x256xi1>, vector<1x256xf32>
      %216 = vector.broadcast %62 : f32 to vector<1x256xf32>
      %217 = arith.mulf %216, %215 : vector<1x256xf32>
      %218 = arith.addf %212, %217 : vector<1x256xf32>
      %219 = vector.extract_strided_slice %140 {offsets = [0, 97], sizes = [1, 256], strides = [1, 1]} : vector<1x358xf32> to vector<1x256xf32>
      %cst_32 = arith.constant 0.000000e+00 : f32
      %220 = vector.broadcast %cst_32 : f32 to vector<1x256xf32>
      %221 = arith.select %129, %219, %220 : vector<1x256xi1>, vector<1x256xf32>
      %222 = vector.broadcast %69 : f32 to vector<1x256xf32>
      %223 = arith.mulf %222, %221 : vector<1x256xf32>
      %224 = arith.addf %218, %223 : vector<1x256xf32>
      %225 = vector.extract_strided_slice %140 {offsets = [0, 2], sizes = [1, 256], strides = [1, 1]} : vector<1x358xf32> to vector<1x256xf32>
      %cst_33 = arith.constant 0.000000e+00 : f32
      %226 = vector.broadcast %cst_33 : f32 to vector<1x256xf32>
      %227 = arith.select %131, %225, %226 : vector<1x256xi1>, vector<1x256xf32>
      %228 = vector.broadcast %28 : f32 to vector<1x256xf32>
      %229 = arith.mulf %228, %227 : vector<1x256xf32>
      %230 = arith.addf %224, %229 : vector<1x256xf32>
      %231 = vector.extract_strided_slice %140 {offsets = [0, 18], sizes = [1, 256], strides = [1, 1]} : vector<1x358xf32> to vector<1x256xf32>
      %cst_34 = arith.constant 0.000000e+00 : f32
      %232 = vector.broadcast %cst_34 : f32 to vector<1x256xf32>
      %233 = arith.select %131, %231, %232 : vector<1x256xi1>, vector<1x256xf32>
      %234 = vector.broadcast %35 : f32 to vector<1x256xf32>
      %235 = arith.mulf %234, %233 : vector<1x256xf32>
      %236 = arith.addf %230, %235 : vector<1x256xf32>
      %237 = vector.extract_strided_slice %140 {offsets = [0, 34], sizes = [1, 256], strides = [1, 1]} : vector<1x358xf32> to vector<1x256xf32>
      %cst_35 = arith.constant 0.000000e+00 : f32
      %238 = vector.broadcast %cst_35 : f32 to vector<1x256xf32>
      %239 = arith.select %131, %237, %238 : vector<1x256xi1>, vector<1x256xf32>
      %240 = vector.broadcast %42 : f32 to vector<1x256xf32>
      %241 = arith.mulf %240, %239 : vector<1x256xf32>
      %242 = arith.addf %236, %241 : vector<1x256xf32>
      %243 = vector.extract_strided_slice %140 {offsets = [0, 50], sizes = [1, 256], strides = [1, 1]} : vector<1x358xf32> to vector<1x256xf32>
      %cst_36 = arith.constant 0.000000e+00 : f32
      %244 = vector.broadcast %cst_36 : f32 to vector<1x256xf32>
      %245 = arith.select %131, %243, %244 : vector<1x256xi1>, vector<1x256xf32>
      %246 = vector.broadcast %49 : f32 to vector<1x256xf32>
      %247 = arith.mulf %246, %245 : vector<1x256xf32>
      %248 = arith.addf %242, %247 : vector<1x256xf32>
      %249 = vector.extract_strided_slice %140 {offsets = [0, 66], sizes = [1, 256], strides = [1, 1]} : vector<1x358xf32> to vector<1x256xf32>
      %cst_37 = arith.constant 0.000000e+00 : f32
      %250 = vector.broadcast %cst_37 : f32 to vector<1x256xf32>
      %251 = arith.select %131, %249, %250 : vector<1x256xi1>, vector<1x256xf32>
      %252 = vector.broadcast %56 : f32 to vector<1x256xf32>
      %253 = arith.mulf %252, %251 : vector<1x256xf32>
      %254 = arith.addf %248, %253 : vector<1x256xf32>
      %255 = vector.extract_strided_slice %140 {offsets = [0, 82], sizes = [1, 256], strides = [1, 1]} : vector<1x358xf32> to vector<1x256xf32>
      %cst_38 = arith.constant 0.000000e+00 : f32
      %256 = vector.broadcast %cst_38 : f32 to vector<1x256xf32>
      %257 = arith.select %131, %255, %256 : vector<1x256xi1>, vector<1x256xf32>
      %258 = vector.broadcast %63 : f32 to vector<1x256xf32>
      %259 = arith.mulf %258, %257 : vector<1x256xf32>
      %260 = arith.addf %254, %259 : vector<1x256xf32>
      %261 = vector.extract_strided_slice %140 {offsets = [0, 98], sizes = [1, 256], strides = [1, 1]} : vector<1x358xf32> to vector<1x256xf32>
      %cst_39 = arith.constant 0.000000e+00 : f32
      %262 = vector.broadcast %cst_39 : f32 to vector<1x256xf32>
      %263 = arith.select %131, %261, %262 : vector<1x256xi1>, vector<1x256xf32>
      %264 = vector.broadcast %70 : f32 to vector<1x256xf32>
      %265 = arith.mulf %264, %263 : vector<1x256xf32>
      %266 = arith.addf %260, %265 : vector<1x256xf32>
      %267 = vector.extract_strided_slice %140 {offsets = [0, 3], sizes = [1, 256], strides = [1, 1]} : vector<1x358xf32> to vector<1x256xf32>
      %268 = vector.broadcast %29 : f32 to vector<1x256xf32>
      %269 = arith.mulf %268, %267 : vector<1x256xf32>
      %270 = arith.addf %266, %269 : vector<1x256xf32>
      %271 = vector.extract_strided_slice %140 {offsets = [0, 19], sizes = [1, 256], strides = [1, 1]} : vector<1x358xf32> to vector<1x256xf32>
      %272 = vector.broadcast %36 : f32 to vector<1x256xf32>
      %273 = arith.mulf %272, %271 : vector<1x256xf32>
      %274 = arith.addf %270, %273 : vector<1x256xf32>
      %275 = vector.extract_strided_slice %140 {offsets = [0, 35], sizes = [1, 256], strides = [1, 1]} : vector<1x358xf32> to vector<1x256xf32>
      %276 = vector.broadcast %43 : f32 to vector<1x256xf32>
      %277 = arith.mulf %276, %275 : vector<1x256xf32>
      %278 = arith.addf %274, %277 : vector<1x256xf32>
      %279 = vector.extract_strided_slice %140 {offsets = [0, 51], sizes = [1, 256], strides = [1, 1]} : vector<1x358xf32> to vector<1x256xf32>
      %280 = vector.broadcast %50 : f32 to vector<1x256xf32>
      %281 = arith.mulf %280, %279 : vector<1x256xf32>
      %282 = arith.addf %278, %281 : vector<1x256xf32>
      %283 = vector.extract_strided_slice %140 {offsets = [0, 67], sizes = [1, 256], strides = [1, 1]} : vector<1x358xf32> to vector<1x256xf32>
      %284 = vector.broadcast %57 : f32 to vector<1x256xf32>
      %285 = arith.mulf %284, %283 : vector<1x256xf32>
      %286 = arith.addf %282, %285 : vector<1x256xf32>
      %287 = vector.extract_strided_slice %140 {offsets = [0, 83], sizes = [1, 256], strides = [1, 1]} : vector<1x358xf32> to vector<1x256xf32>
      %288 = vector.broadcast %64 : f32 to vector<1x256xf32>
      %289 = arith.mulf %288, %287 : vector<1x256xf32>
      %290 = arith.addf %286, %289 : vector<1x256xf32>
      %291 = vector.extract_strided_slice %140 {offsets = [0, 99], sizes = [1, 256], strides = [1, 1]} : vector<1x358xf32> to vector<1x256xf32>
      %292 = vector.broadcast %71 : f32 to vector<1x256xf32>
      %293 = arith.mulf %292, %291 : vector<1x256xf32>
      %294 = arith.addf %290, %293 : vector<1x256xf32>
      %295 = vector.extract_strided_slice %140 {offsets = [0, 4], sizes = [1, 256], strides = [1, 1]} : vector<1x358xf32> to vector<1x256xf32>
      %cst_40 = arith.constant 0.000000e+00 : f32
      %296 = vector.broadcast %cst_40 : f32 to vector<1x256xf32>
      %297 = arith.select %133, %295, %296 : vector<1x256xi1>, vector<1x256xf32>
      %298 = vector.broadcast %30 : f32 to vector<1x256xf32>
      %299 = arith.mulf %298, %297 : vector<1x256xf32>
      %300 = arith.addf %294, %299 : vector<1x256xf32>
      %301 = vector.extract_strided_slice %140 {offsets = [0, 20], sizes = [1, 256], strides = [1, 1]} : vector<1x358xf32> to vector<1x256xf32>
      %cst_41 = arith.constant 0.000000e+00 : f32
      %302 = vector.broadcast %cst_41 : f32 to vector<1x256xf32>
      %303 = arith.select %133, %301, %302 : vector<1x256xi1>, vector<1x256xf32>
      %304 = vector.broadcast %37 : f32 to vector<1x256xf32>
      %305 = arith.mulf %304, %303 : vector<1x256xf32>
      %306 = arith.addf %300, %305 : vector<1x256xf32>
      %307 = vector.extract_strided_slice %140 {offsets = [0, 36], sizes = [1, 256], strides = [1, 1]} : vector<1x358xf32> to vector<1x256xf32>
      %cst_42 = arith.constant 0.000000e+00 : f32
      %308 = vector.broadcast %cst_42 : f32 to vector<1x256xf32>
      %309 = arith.select %133, %307, %308 : vector<1x256xi1>, vector<1x256xf32>
      %310 = vector.broadcast %44 : f32 to vector<1x256xf32>
      %311 = arith.mulf %310, %309 : vector<1x256xf32>
      %312 = arith.addf %306, %311 : vector<1x256xf32>
      %313 = vector.extract_strided_slice %140 {offsets = [0, 52], sizes = [1, 256], strides = [1, 1]} : vector<1x358xf32> to vector<1x256xf32>
      %cst_43 = arith.constant 0.000000e+00 : f32
      %314 = vector.broadcast %cst_43 : f32 to vector<1x256xf32>
      %315 = arith.select %133, %313, %314 : vector<1x256xi1>, vector<1x256xf32>
      %316 = vector.broadcast %51 : f32 to vector<1x256xf32>
      %317 = arith.mulf %316, %315 : vector<1x256xf32>
      %318 = arith.addf %312, %317 : vector<1x256xf32>
      %319 = vector.extract_strided_slice %140 {offsets = [0, 68], sizes = [1, 256], strides = [1, 1]} : vector<1x358xf32> to vector<1x256xf32>
      %cst_44 = arith.constant 0.000000e+00 : f32
      %320 = vector.broadcast %cst_44 : f32 to vector<1x256xf32>
      %321 = arith.select %133, %319, %320 : vector<1x256xi1>, vector<1x256xf32>
      %322 = vector.broadcast %58 : f32 to vector<1x256xf32>
      %323 = arith.mulf %322, %321 : vector<1x256xf32>
      %324 = arith.addf %318, %323 : vector<1x256xf32>
      %325 = vector.extract_strided_slice %140 {offsets = [0, 84], sizes = [1, 256], strides = [1, 1]} : vector<1x358xf32> to vector<1x256xf32>
      %cst_45 = arith.constant 0.000000e+00 : f32
      %326 = vector.broadcast %cst_45 : f32 to vector<1x256xf32>
      %327 = arith.select %133, %325, %326 : vector<1x256xi1>, vector<1x256xf32>
      %328 = vector.broadcast %65 : f32 to vector<1x256xf32>
      %329 = arith.mulf %328, %327 : vector<1x256xf32>
      %330 = arith.addf %324, %329 : vector<1x256xf32>
      %331 = vector.extract_strided_slice %140 {offsets = [0, 100], sizes = [1, 256], strides = [1, 1]} : vector<1x358xf32> to vector<1x256xf32>
      %cst_46 = arith.constant 0.000000e+00 : f32
      %332 = vector.broadcast %cst_46 : f32 to vector<1x256xf32>
      %333 = arith.select %133, %331, %332 : vector<1x256xi1>, vector<1x256xf32>
      %334 = vector.broadcast %72 : f32 to vector<1x256xf32>
      %335 = arith.mulf %334, %333 : vector<1x256xf32>
      %336 = arith.addf %330, %335 : vector<1x256xf32>
      %337 = vector.extract_strided_slice %140 {offsets = [0, 5], sizes = [1, 256], strides = [1, 1]} : vector<1x358xf32> to vector<1x256xf32>
      %cst_47 = arith.constant 0.000000e+00 : f32
      %338 = vector.broadcast %cst_47 : f32 to vector<1x256xf32>
      %339 = arith.select %135, %337, %338 : vector<1x256xi1>, vector<1x256xf32>
      %340 = vector.broadcast %31 : f32 to vector<1x256xf32>
      %341 = arith.mulf %340, %339 : vector<1x256xf32>
      %342 = arith.addf %336, %341 : vector<1x256xf32>
      %343 = vector.extract_strided_slice %140 {offsets = [0, 21], sizes = [1, 256], strides = [1, 1]} : vector<1x358xf32> to vector<1x256xf32>
      %cst_48 = arith.constant 0.000000e+00 : f32
      %344 = vector.broadcast %cst_48 : f32 to vector<1x256xf32>
      %345 = arith.select %135, %343, %344 : vector<1x256xi1>, vector<1x256xf32>
      %346 = vector.broadcast %38 : f32 to vector<1x256xf32>
      %347 = arith.mulf %346, %345 : vector<1x256xf32>
      %348 = arith.addf %342, %347 : vector<1x256xf32>
      %349 = vector.extract_strided_slice %140 {offsets = [0, 37], sizes = [1, 256], strides = [1, 1]} : vector<1x358xf32> to vector<1x256xf32>
      %cst_49 = arith.constant 0.000000e+00 : f32
      %350 = vector.broadcast %cst_49 : f32 to vector<1x256xf32>
      %351 = arith.select %135, %349, %350 : vector<1x256xi1>, vector<1x256xf32>
      %352 = vector.broadcast %45 : f32 to vector<1x256xf32>
      %353 = arith.mulf %352, %351 : vector<1x256xf32>
      %354 = arith.addf %348, %353 : vector<1x256xf32>
      %355 = vector.extract_strided_slice %140 {offsets = [0, 53], sizes = [1, 256], strides = [1, 1]} : vector<1x358xf32> to vector<1x256xf32>
      %cst_50 = arith.constant 0.000000e+00 : f32
      %356 = vector.broadcast %cst_50 : f32 to vector<1x256xf32>
      %357 = arith.select %135, %355, %356 : vector<1x256xi1>, vector<1x256xf32>
      %358 = vector.broadcast %52 : f32 to vector<1x256xf32>
      %359 = arith.mulf %358, %357 : vector<1x256xf32>
      %360 = arith.addf %354, %359 : vector<1x256xf32>
      %361 = vector.extract_strided_slice %140 {offsets = [0, 69], sizes = [1, 256], strides = [1, 1]} : vector<1x358xf32> to vector<1x256xf32>
      %cst_51 = arith.constant 0.000000e+00 : f32
      %362 = vector.broadcast %cst_51 : f32 to vector<1x256xf32>
      %363 = arith.select %135, %361, %362 : vector<1x256xi1>, vector<1x256xf32>
      %364 = vector.broadcast %59 : f32 to vector<1x256xf32>
      %365 = arith.mulf %364, %363 : vector<1x256xf32>
      %366 = arith.addf %360, %365 : vector<1x256xf32>
      %367 = vector.extract_strided_slice %140 {offsets = [0, 85], sizes = [1, 256], strides = [1, 1]} : vector<1x358xf32> to vector<1x256xf32>
      %cst_52 = arith.constant 0.000000e+00 : f32
      %368 = vector.broadcast %cst_52 : f32 to vector<1x256xf32>
      %369 = arith.select %135, %367, %368 : vector<1x256xi1>, vector<1x256xf32>
      %370 = vector.broadcast %66 : f32 to vector<1x256xf32>
      %371 = arith.mulf %370, %369 : vector<1x256xf32>
      %372 = arith.addf %366, %371 : vector<1x256xf32>
      %373 = vector.extract_strided_slice %140 {offsets = [0, 101], sizes = [1, 256], strides = [1, 1]} : vector<1x358xf32> to vector<1x256xf32>
      %cst_53 = arith.constant 0.000000e+00 : f32
      %374 = vector.broadcast %cst_53 : f32 to vector<1x256xf32>
      %375 = arith.select %135, %373, %374 : vector<1x256xi1>, vector<1x256xf32>
      %376 = vector.broadcast %73 : f32 to vector<1x256xf32>
      %377 = arith.mulf %376, %375 : vector<1x256xf32>
      %378 = arith.addf %372, %377 : vector<1x256xf32>
      %379 = vector.extract_strided_slice %140 {offsets = [0, 6], sizes = [1, 256], strides = [1, 1]} : vector<1x358xf32> to vector<1x256xf32>
      %cst_54 = arith.constant 0.000000e+00 : f32
      %380 = vector.broadcast %cst_54 : f32 to vector<1x256xf32>
      %381 = arith.select %137, %379, %380 : vector<1x256xi1>, vector<1x256xf32>
      %382 = vector.broadcast %32 : f32 to vector<1x256xf32>
      %383 = arith.mulf %382, %381 : vector<1x256xf32>
      %384 = arith.addf %378, %383 : vector<1x256xf32>
      %385 = vector.extract_strided_slice %140 {offsets = [0, 22], sizes = [1, 256], strides = [1, 1]} : vector<1x358xf32> to vector<1x256xf32>
      %cst_55 = arith.constant 0.000000e+00 : f32
      %386 = vector.broadcast %cst_55 : f32 to vector<1x256xf32>
      %387 = arith.select %137, %385, %386 : vector<1x256xi1>, vector<1x256xf32>
      %388 = vector.broadcast %39 : f32 to vector<1x256xf32>
      %389 = arith.mulf %388, %387 : vector<1x256xf32>
      %390 = arith.addf %384, %389 : vector<1x256xf32>
      %391 = vector.extract_strided_slice %140 {offsets = [0, 38], sizes = [1, 256], strides = [1, 1]} : vector<1x358xf32> to vector<1x256xf32>
      %cst_56 = arith.constant 0.000000e+00 : f32
      %392 = vector.broadcast %cst_56 : f32 to vector<1x256xf32>
      %393 = arith.select %137, %391, %392 : vector<1x256xi1>, vector<1x256xf32>
      %394 = vector.broadcast %46 : f32 to vector<1x256xf32>
      %395 = arith.mulf %394, %393 : vector<1x256xf32>
      %396 = arith.addf %390, %395 : vector<1x256xf32>
      %397 = vector.extract_strided_slice %140 {offsets = [0, 54], sizes = [1, 256], strides = [1, 1]} : vector<1x358xf32> to vector<1x256xf32>
      %cst_57 = arith.constant 0.000000e+00 : f32
      %398 = vector.broadcast %cst_57 : f32 to vector<1x256xf32>
      %399 = arith.select %137, %397, %398 : vector<1x256xi1>, vector<1x256xf32>
      %400 = vector.broadcast %53 : f32 to vector<1x256xf32>
      %401 = arith.mulf %400, %399 : vector<1x256xf32>
      %402 = arith.addf %396, %401 : vector<1x256xf32>
      %403 = vector.extract_strided_slice %140 {offsets = [0, 70], sizes = [1, 256], strides = [1, 1]} : vector<1x358xf32> to vector<1x256xf32>
      %cst_58 = arith.constant 0.000000e+00 : f32
      %404 = vector.broadcast %cst_58 : f32 to vector<1x256xf32>
      %405 = arith.select %137, %403, %404 : vector<1x256xi1>, vector<1x256xf32>
      %406 = vector.broadcast %60 : f32 to vector<1x256xf32>
      %407 = arith.mulf %406, %405 : vector<1x256xf32>
      %408 = arith.addf %402, %407 : vector<1x256xf32>
      %409 = vector.extract_strided_slice %140 {offsets = [0, 86], sizes = [1, 256], strides = [1, 1]} : vector<1x358xf32> to vector<1x256xf32>
      %cst_59 = arith.constant 0.000000e+00 : f32
      %410 = vector.broadcast %cst_59 : f32 to vector<1x256xf32>
      %411 = arith.select %137, %409, %410 : vector<1x256xi1>, vector<1x256xf32>
      %412 = vector.broadcast %67 : f32 to vector<1x256xf32>
      %413 = arith.mulf %412, %411 : vector<1x256xf32>
      %414 = arith.addf %408, %413 : vector<1x256xf32>
      %415 = vector.extract_strided_slice %140 {offsets = [0, 102], sizes = [1, 256], strides = [1, 1]} : vector<1x358xf32> to vector<1x256xf32>
      %cst_60 = arith.constant 0.000000e+00 : f32
      %416 = vector.broadcast %cst_60 : f32 to vector<1x256xf32>
      %417 = arith.select %137, %415, %416 : vector<1x256xi1>, vector<1x256xf32>
      %418 = vector.broadcast %74 : f32 to vector<1x256xf32>
      %419 = arith.mulf %418, %417 : vector<1x256xf32>
      %420 = arith.addf %414, %419 : vector<1x256xf32>
      %421 = tpu.concatenate %138, %25, %138 in 1 : vector<1x51xf32>, vector<1x256xf32>, vector<1x51xf32> -> vector<1x358xf32>
      %422 = vector.extract_strided_slice %421 {offsets = [0, 0], sizes = [1, 256], strides = [1, 1]} : vector<1x358xf32> to vector<1x256xf32>
      %cst_61 = arith.constant 0.000000e+00 : f32
      %423 = vector.broadcast %cst_61 : f32 to vector<1x256xf32>
      %424 = arith.select %127, %422, %423 : vector<1x256xi1>, vector<1x256xf32>
      %425 = vector.broadcast %75 : f32 to vector<1x256xf32>
      %426 = arith.mulf %425, %424 : vector<1x256xf32>
      %427 = arith.addf %420, %426 : vector<1x256xf32>
      %428 = vector.extract_strided_slice %421 {offsets = [0, 16], sizes = [1, 256], strides = [1, 1]} : vector<1x358xf32> to vector<1x256xf32>
      %cst_62 = arith.constant 0.000000e+00 : f32
      %429 = vector.broadcast %cst_62 : f32 to vector<1x256xf32>
      %430 = arith.select %127, %428, %429 : vector<1x256xi1>, vector<1x256xf32>
      %431 = vector.broadcast %82 : f32 to vector<1x256xf32>
      %432 = arith.mulf %431, %430 : vector<1x256xf32>
      %433 = arith.addf %427, %432 : vector<1x256xf32>
      %434 = vector.extract_strided_slice %421 {offsets = [0, 32], sizes = [1, 256], strides = [1, 1]} : vector<1x358xf32> to vector<1x256xf32>
      %cst_63 = arith.constant 0.000000e+00 : f32
      %435 = vector.broadcast %cst_63 : f32 to vector<1x256xf32>
      %436 = arith.select %127, %434, %435 : vector<1x256xi1>, vector<1x256xf32>
      %437 = vector.broadcast %89 : f32 to vector<1x256xf32>
      %438 = arith.mulf %437, %436 : vector<1x256xf32>
      %439 = arith.addf %433, %438 : vector<1x256xf32>
      %440 = vector.extract_strided_slice %421 {offsets = [0, 48], sizes = [1, 256], strides = [1, 1]} : vector<1x358xf32> to vector<1x256xf32>
      %cst_64 = arith.constant 0.000000e+00 : f32
      %441 = vector.broadcast %cst_64 : f32 to vector<1x256xf32>
      %442 = arith.select %127, %440, %441 : vector<1x256xi1>, vector<1x256xf32>
      %443 = vector.broadcast %96 : f32 to vector<1x256xf32>
      %444 = arith.mulf %443, %442 : vector<1x256xf32>
      %445 = arith.addf %439, %444 : vector<1x256xf32>
      %446 = vector.extract_strided_slice %421 {offsets = [0, 64], sizes = [1, 256], strides = [1, 1]} : vector<1x358xf32> to vector<1x256xf32>
      %cst_65 = arith.constant 0.000000e+00 : f32
      %447 = vector.broadcast %cst_65 : f32 to vector<1x256xf32>
      %448 = arith.select %127, %446, %447 : vector<1x256xi1>, vector<1x256xf32>
      %449 = vector.broadcast %103 : f32 to vector<1x256xf32>
      %450 = arith.mulf %449, %448 : vector<1x256xf32>
      %451 = arith.addf %445, %450 : vector<1x256xf32>
      %452 = vector.extract_strided_slice %421 {offsets = [0, 80], sizes = [1, 256], strides = [1, 1]} : vector<1x358xf32> to vector<1x256xf32>
      %cst_66 = arith.constant 0.000000e+00 : f32
      %453 = vector.broadcast %cst_66 : f32 to vector<1x256xf32>
      %454 = arith.select %127, %452, %453 : vector<1x256xi1>, vector<1x256xf32>
      %455 = vector.broadcast %110 : f32 to vector<1x256xf32>
      %456 = arith.mulf %455, %454 : vector<1x256xf32>
      %457 = arith.addf %451, %456 : vector<1x256xf32>
      %458 = vector.extract_strided_slice %421 {offsets = [0, 96], sizes = [1, 256], strides = [1, 1]} : vector<1x358xf32> to vector<1x256xf32>
      %cst_67 = arith.constant 0.000000e+00 : f32
      %459 = vector.broadcast %cst_67 : f32 to vector<1x256xf32>
      %460 = arith.select %127, %458, %459 : vector<1x256xi1>, vector<1x256xf32>
      %461 = vector.broadcast %117 : f32 to vector<1x256xf32>
      %462 = arith.mulf %461, %460 : vector<1x256xf32>
      %463 = arith.addf %457, %462 : vector<1x256xf32>
      %464 = vector.extract_strided_slice %421 {offsets = [0, 1], sizes = [1, 256], strides = [1, 1]} : vector<1x358xf32> to vector<1x256xf32>
      %cst_68 = arith.constant 0.000000e+00 : f32
      %465 = vector.broadcast %cst_68 : f32 to vector<1x256xf32>
      %466 = arith.select %129, %464, %465 : vector<1x256xi1>, vector<1x256xf32>
      %467 = vector.broadcast %76 : f32 to vector<1x256xf32>
      %468 = arith.mulf %467, %466 : vector<1x256xf32>
      %469 = arith.addf %463, %468 : vector<1x256xf32>
      %470 = vector.extract_strided_slice %421 {offsets = [0, 17], sizes = [1, 256], strides = [1, 1]} : vector<1x358xf32> to vector<1x256xf32>
      %cst_69 = arith.constant 0.000000e+00 : f32
      %471 = vector.broadcast %cst_69 : f32 to vector<1x256xf32>
      %472 = arith.select %129, %470, %471 : vector<1x256xi1>, vector<1x256xf32>
      %473 = vector.broadcast %83 : f32 to vector<1x256xf32>
      %474 = arith.mulf %473, %472 : vector<1x256xf32>
      %475 = arith.addf %469, %474 : vector<1x256xf32>
      %476 = vector.extract_strided_slice %421 {offsets = [0, 33], sizes = [1, 256], strides = [1, 1]} : vector<1x358xf32> to vector<1x256xf32>
      %cst_70 = arith.constant 0.000000e+00 : f32
      %477 = vector.broadcast %cst_70 : f32 to vector<1x256xf32>
      %478 = arith.select %129, %476, %477 : vector<1x256xi1>, vector<1x256xf32>
      %479 = vector.broadcast %90 : f32 to vector<1x256xf32>
      %480 = arith.mulf %479, %478 : vector<1x256xf32>
      %481 = arith.addf %475, %480 : vector<1x256xf32>
      %482 = vector.extract_strided_slice %421 {offsets = [0, 49], sizes = [1, 256], strides = [1, 1]} : vector<1x358xf32> to vector<1x256xf32>
      %cst_71 = arith.constant 0.000000e+00 : f32
      %483 = vector.broadcast %cst_71 : f32 to vector<1x256xf32>
      %484 = arith.select %129, %482, %483 : vector<1x256xi1>, vector<1x256xf32>
      %485 = vector.broadcast %97 : f32 to vector<1x256xf32>
      %486 = arith.mulf %485, %484 : vector<1x256xf32>
      %487 = arith.addf %481, %486 : vector<1x256xf32>
      %488 = vector.extract_strided_slice %421 {offsets = [0, 65], sizes = [1, 256], strides = [1, 1]} : vector<1x358xf32> to vector<1x256xf32>
      %cst_72 = arith.constant 0.000000e+00 : f32
      %489 = vector.broadcast %cst_72 : f32 to vector<1x256xf32>
      %490 = arith.select %129, %488, %489 : vector<1x256xi1>, vector<1x256xf32>
      %491 = vector.broadcast %104 : f32 to vector<1x256xf32>
      %492 = arith.mulf %491, %490 : vector<1x256xf32>
      %493 = arith.addf %487, %492 : vector<1x256xf32>
      %494 = vector.extract_strided_slice %421 {offsets = [0, 81], sizes = [1, 256], strides = [1, 1]} : vector<1x358xf32> to vector<1x256xf32>
      %cst_73 = arith.constant 0.000000e+00 : f32
      %495 = vector.broadcast %cst_73 : f32 to vector<1x256xf32>
      %496 = arith.select %129, %494, %495 : vector<1x256xi1>, vector<1x256xf32>
      %497 = vector.broadcast %111 : f32 to vector<1x256xf32>
      %498 = arith.mulf %497, %496 : vector<1x256xf32>
      %499 = arith.addf %493, %498 : vector<1x256xf32>
      %500 = vector.extract_strided_slice %421 {offsets = [0, 97], sizes = [1, 256], strides = [1, 1]} : vector<1x358xf32> to vector<1x256xf32>
      %cst_74 = arith.constant 0.000000e+00 : f32
      %501 = vector.broadcast %cst_74 : f32 to vector<1x256xf32>
      %502 = arith.select %129, %500, %501 : vector<1x256xi1>, vector<1x256xf32>
      %503 = vector.broadcast %118 : f32 to vector<1x256xf32>
      %504 = arith.mulf %503, %502 : vector<1x256xf32>
      %505 = arith.addf %499, %504 : vector<1x256xf32>
      %506 = vector.extract_strided_slice %421 {offsets = [0, 2], sizes = [1, 256], strides = [1, 1]} : vector<1x358xf32> to vector<1x256xf32>
      %cst_75 = arith.constant 0.000000e+00 : f32
      %507 = vector.broadcast %cst_75 : f32 to vector<1x256xf32>
      %508 = arith.select %131, %506, %507 : vector<1x256xi1>, vector<1x256xf32>
      %509 = vector.broadcast %77 : f32 to vector<1x256xf32>
      %510 = arith.mulf %509, %508 : vector<1x256xf32>
      %511 = arith.addf %505, %510 : vector<1x256xf32>
      %512 = vector.extract_strided_slice %421 {offsets = [0, 18], sizes = [1, 256], strides = [1, 1]} : vector<1x358xf32> to vector<1x256xf32>
      %cst_76 = arith.constant 0.000000e+00 : f32
      %513 = vector.broadcast %cst_76 : f32 to vector<1x256xf32>
      %514 = arith.select %131, %512, %513 : vector<1x256xi1>, vector<1x256xf32>
      %515 = vector.broadcast %84 : f32 to vector<1x256xf32>
      %516 = arith.mulf %515, %514 : vector<1x256xf32>
      %517 = arith.addf %511, %516 : vector<1x256xf32>
      %518 = vector.extract_strided_slice %421 {offsets = [0, 34], sizes = [1, 256], strides = [1, 1]} : vector<1x358xf32> to vector<1x256xf32>
      %cst_77 = arith.constant 0.000000e+00 : f32
      %519 = vector.broadcast %cst_77 : f32 to vector<1x256xf32>
      %520 = arith.select %131, %518, %519 : vector<1x256xi1>, vector<1x256xf32>
      %521 = vector.broadcast %91 : f32 to vector<1x256xf32>
      %522 = arith.mulf %521, %520 : vector<1x256xf32>
      %523 = arith.addf %517, %522 : vector<1x256xf32>
      %524 = vector.extract_strided_slice %421 {offsets = [0, 50], sizes = [1, 256], strides = [1, 1]} : vector<1x358xf32> to vector<1x256xf32>
      %cst_78 = arith.constant 0.000000e+00 : f32
      %525 = vector.broadcast %cst_78 : f32 to vector<1x256xf32>
      %526 = arith.select %131, %524, %525 : vector<1x256xi1>, vector<1x256xf32>
      %527 = vector.broadcast %98 : f32 to vector<1x256xf32>
      %528 = arith.mulf %527, %526 : vector<1x256xf32>
      %529 = arith.addf %523, %528 : vector<1x256xf32>
      %530 = vector.extract_strided_slice %421 {offsets = [0, 66], sizes = [1, 256], strides = [1, 1]} : vector<1x358xf32> to vector<1x256xf32>
      %cst_79 = arith.constant 0.000000e+00 : f32
      %531 = vector.broadcast %cst_79 : f32 to vector<1x256xf32>
      %532 = arith.select %131, %530, %531 : vector<1x256xi1>, vector<1x256xf32>
      %533 = vector.broadcast %105 : f32 to vector<1x256xf32>
      %534 = arith.mulf %533, %532 : vector<1x256xf32>
      %535 = arith.addf %529, %534 : vector<1x256xf32>
      %536 = vector.extract_strided_slice %421 {offsets = [0, 82], sizes = [1, 256], strides = [1, 1]} : vector<1x358xf32> to vector<1x256xf32>
      %cst_80 = arith.constant 0.000000e+00 : f32
      %537 = vector.broadcast %cst_80 : f32 to vector<1x256xf32>
      %538 = arith.select %131, %536, %537 : vector<1x256xi1>, vector<1x256xf32>
      %539 = vector.broadcast %112 : f32 to vector<1x256xf32>
      %540 = arith.mulf %539, %538 : vector<1x256xf32>
      %541 = arith.addf %535, %540 : vector<1x256xf32>
      %542 = vector.extract_strided_slice %421 {offsets = [0, 98], sizes = [1, 256], strides = [1, 1]} : vector<1x358xf32> to vector<1x256xf32>
      %cst_81 = arith.constant 0.000000e+00 : f32
      %543 = vector.broadcast %cst_81 : f32 to vector<1x256xf32>
      %544 = arith.select %131, %542, %543 : vector<1x256xi1>, vector<1x256xf32>
      %545 = vector.broadcast %119 : f32 to vector<1x256xf32>
      %546 = arith.mulf %545, %544 : vector<1x256xf32>
      %547 = arith.addf %541, %546 : vector<1x256xf32>
      %548 = vector.extract_strided_slice %421 {offsets = [0, 3], sizes = [1, 256], strides = [1, 1]} : vector<1x358xf32> to vector<1x256xf32>
      %549 = vector.broadcast %78 : f32 to vector<1x256xf32>
      %550 = arith.mulf %549, %548 : vector<1x256xf32>
      %551 = arith.addf %547, %550 : vector<1x256xf32>
      %552 = vector.extract_strided_slice %421 {offsets = [0, 19], sizes = [1, 256], strides = [1, 1]} : vector<1x358xf32> to vector<1x256xf32>
      %553 = vector.broadcast %85 : f32 to vector<1x256xf32>
      %554 = arith.mulf %553, %552 : vector<1x256xf32>
      %555 = arith.addf %551, %554 : vector<1x256xf32>
      %556 = vector.extract_strided_slice %421 {offsets = [0, 35], sizes = [1, 256], strides = [1, 1]} : vector<1x358xf32> to vector<1x256xf32>
      %557 = vector.broadcast %92 : f32 to vector<1x256xf32>
      %558 = arith.mulf %557, %556 : vector<1x256xf32>
      %559 = arith.addf %555, %558 : vector<1x256xf32>
      %560 = vector.extract_strided_slice %421 {offsets = [0, 51], sizes = [1, 256], strides = [1, 1]} : vector<1x358xf32> to vector<1x256xf32>
      %561 = vector.broadcast %99 : f32 to vector<1x256xf32>
      %562 = arith.mulf %561, %560 : vector<1x256xf32>
      %563 = arith.addf %559, %562 : vector<1x256xf32>
      %564 = vector.extract_strided_slice %421 {offsets = [0, 67], sizes = [1, 256], strides = [1, 1]} : vector<1x358xf32> to vector<1x256xf32>
      %565 = vector.broadcast %106 : f32 to vector<1x256xf32>
      %566 = arith.mulf %565, %564 : vector<1x256xf32>
      %567 = arith.addf %563, %566 : vector<1x256xf32>
      %568 = vector.extract_strided_slice %421 {offsets = [0, 83], sizes = [1, 256], strides = [1, 1]} : vector<1x358xf32> to vector<1x256xf32>
      %569 = vector.broadcast %113 : f32 to vector<1x256xf32>
      %570 = arith.mulf %569, %568 : vector<1x256xf32>
      %571 = arith.addf %567, %570 : vector<1x256xf32>
      %572 = vector.extract_strided_slice %421 {offsets = [0, 99], sizes = [1, 256], strides = [1, 1]} : vector<1x358xf32> to vector<1x256xf32>
      %573 = vector.broadcast %120 : f32 to vector<1x256xf32>
      %574 = arith.mulf %573, %572 : vector<1x256xf32>
      %575 = arith.addf %571, %574 : vector<1x256xf32>
      %576 = vector.extract_strided_slice %421 {offsets = [0, 4], sizes = [1, 256], strides = [1, 1]} : vector<1x358xf32> to vector<1x256xf32>
      %cst_82 = arith.constant 0.000000e+00 : f32
      %577 = vector.broadcast %cst_82 : f32 to vector<1x256xf32>
      %578 = arith.select %133, %576, %577 : vector<1x256xi1>, vector<1x256xf32>
      %579 = vector.broadcast %79 : f32 to vector<1x256xf32>
      %580 = arith.mulf %579, %578 : vector<1x256xf32>
      %581 = arith.addf %575, %580 : vector<1x256xf32>
      %582 = vector.extract_strided_slice %421 {offsets = [0, 20], sizes = [1, 256], strides = [1, 1]} : vector<1x358xf32> to vector<1x256xf32>
      %cst_83 = arith.constant 0.000000e+00 : f32
      %583 = vector.broadcast %cst_83 : f32 to vector<1x256xf32>
      %584 = arith.select %133, %582, %583 : vector<1x256xi1>, vector<1x256xf32>
      %585 = vector.broadcast %86 : f32 to vector<1x256xf32>
      %586 = arith.mulf %585, %584 : vector<1x256xf32>
      %587 = arith.addf %581, %586 : vector<1x256xf32>
      %588 = vector.extract_strided_slice %421 {offsets = [0, 36], sizes = [1, 256], strides = [1, 1]} : vector<1x358xf32> to vector<1x256xf32>
      %cst_84 = arith.constant 0.000000e+00 : f32
      %589 = vector.broadcast %cst_84 : f32 to vector<1x256xf32>
      %590 = arith.select %133, %588, %589 : vector<1x256xi1>, vector<1x256xf32>
      %591 = vector.broadcast %93 : f32 to vector<1x256xf32>
      %592 = arith.mulf %591, %590 : vector<1x256xf32>
      %593 = arith.addf %587, %592 : vector<1x256xf32>
      %594 = vector.extract_strided_slice %421 {offsets = [0, 52], sizes = [1, 256], strides = [1, 1]} : vector<1x358xf32> to vector<1x256xf32>
      %cst_85 = arith.constant 0.000000e+00 : f32
      %595 = vector.broadcast %cst_85 : f32 to vector<1x256xf32>
      %596 = arith.select %133, %594, %595 : vector<1x256xi1>, vector<1x256xf32>
      %597 = vector.broadcast %100 : f32 to vector<1x256xf32>
      %598 = arith.mulf %597, %596 : vector<1x256xf32>
      %599 = arith.addf %593, %598 : vector<1x256xf32>
      %600 = vector.extract_strided_slice %421 {offsets = [0, 68], sizes = [1, 256], strides = [1, 1]} : vector<1x358xf32> to vector<1x256xf32>
      %cst_86 = arith.constant 0.000000e+00 : f32
      %601 = vector.broadcast %cst_86 : f32 to vector<1x256xf32>
      %602 = arith.select %133, %600, %601 : vector<1x256xi1>, vector<1x256xf32>
      %603 = vector.broadcast %107 : f32 to vector<1x256xf32>
      %604 = arith.mulf %603, %602 : vector<1x256xf32>
      %605 = arith.addf %599, %604 : vector<1x256xf32>
      %606 = vector.extract_strided_slice %421 {offsets = [0, 84], sizes = [1, 256], strides = [1, 1]} : vector<1x358xf32> to vector<1x256xf32>
      %cst_87 = arith.constant 0.000000e+00 : f32
      %607 = vector.broadcast %cst_87 : f32 to vector<1x256xf32>
      %608 = arith.select %133, %606, %607 : vector<1x256xi1>, vector<1x256xf32>
      %609 = vector.broadcast %114 : f32 to vector<1x256xf32>
      %610 = arith.mulf %609, %608 : vector<1x256xf32>
      %611 = arith.addf %605, %610 : vector<1x256xf32>
      %612 = vector.extract_strided_slice %421 {offsets = [0, 100], sizes = [1, 256], strides = [1, 1]} : vector<1x358xf32> to vector<1x256xf32>
      %cst_88 = arith.constant 0.000000e+00 : f32
      %613 = vector.broadcast %cst_88 : f32 to vector<1x256xf32>
      %614 = arith.select %133, %612, %613 : vector<1x256xi1>, vector<1x256xf32>
      %615 = vector.broadcast %121 : f32 to vector<1x256xf32>
      %616 = arith.mulf %615, %614 : vector<1x256xf32>
      %617 = arith.addf %611, %616 : vector<1x256xf32>
      %618 = vector.extract_strided_slice %421 {offsets = [0, 5], sizes = [1, 256], strides = [1, 1]} : vector<1x358xf32> to vector<1x256xf32>
      %cst_89 = arith.constant 0.000000e+00 : f32
      %619 = vector.broadcast %cst_89 : f32 to vector<1x256xf32>
      %620 = arith.select %135, %618, %619 : vector<1x256xi1>, vector<1x256xf32>
      %621 = vector.broadcast %80 : f32 to vector<1x256xf32>
      %622 = arith.mulf %621, %620 : vector<1x256xf32>
      %623 = arith.addf %617, %622 : vector<1x256xf32>
      %624 = vector.extract_strided_slice %421 {offsets = [0, 21], sizes = [1, 256], strides = [1, 1]} : vector<1x358xf32> to vector<1x256xf32>
      %cst_90 = arith.constant 0.000000e+00 : f32
      %625 = vector.broadcast %cst_90 : f32 to vector<1x256xf32>
      %626 = arith.select %135, %624, %625 : vector<1x256xi1>, vector<1x256xf32>
      %627 = vector.broadcast %87 : f32 to vector<1x256xf32>
      %628 = arith.mulf %627, %626 : vector<1x256xf32>
      %629 = arith.addf %623, %628 : vector<1x256xf32>
      %630 = vector.extract_strided_slice %421 {offsets = [0, 37], sizes = [1, 256], strides = [1, 1]} : vector<1x358xf32> to vector<1x256xf32>
      %cst_91 = arith.constant 0.000000e+00 : f32
      %631 = vector.broadcast %cst_91 : f32 to vector<1x256xf32>
      %632 = arith.select %135, %630, %631 : vector<1x256xi1>, vector<1x256xf32>
      %633 = vector.broadcast %94 : f32 to vector<1x256xf32>
      %634 = arith.mulf %633, %632 : vector<1x256xf32>
      %635 = arith.addf %629, %634 : vector<1x256xf32>
      %636 = vector.extract_strided_slice %421 {offsets = [0, 53], sizes = [1, 256], strides = [1, 1]} : vector<1x358xf32> to vector<1x256xf32>
      %cst_92 = arith.constant 0.000000e+00 : f32
      %637 = vector.broadcast %cst_92 : f32 to vector<1x256xf32>
      %638 = arith.select %135, %636, %637 : vector<1x256xi1>, vector<1x256xf32>
      %639 = vector.broadcast %101 : f32 to vector<1x256xf32>
      %640 = arith.mulf %639, %638 : vector<1x256xf32>
      %641 = arith.addf %635, %640 : vector<1x256xf32>
      %642 = vector.extract_strided_slice %421 {offsets = [0, 69], sizes = [1, 256], strides = [1, 1]} : vector<1x358xf32> to vector<1x256xf32>
      %cst_93 = arith.constant 0.000000e+00 : f32
      %643 = vector.broadcast %cst_93 : f32 to vector<1x256xf32>
      %644 = arith.select %135, %642, %643 : vector<1x256xi1>, vector<1x256xf32>
      %645 = vector.broadcast %108 : f32 to vector<1x256xf32>
      %646 = arith.mulf %645, %644 : vector<1x256xf32>
      %647 = arith.addf %641, %646 : vector<1x256xf32>
      %648 = vector.extract_strided_slice %421 {offsets = [0, 85], sizes = [1, 256], strides = [1, 1]} : vector<1x358xf32> to vector<1x256xf32>
      %cst_94 = arith.constant 0.000000e+00 : f32
      %649 = vector.broadcast %cst_94 : f32 to vector<1x256xf32>
      %650 = arith.select %135, %648, %649 : vector<1x256xi1>, vector<1x256xf32>
      %651 = vector.broadcast %115 : f32 to vector<1x256xf32>
      %652 = arith.mulf %651, %650 : vector<1x256xf32>
      %653 = arith.addf %647, %652 : vector<1x256xf32>
      %654 = vector.extract_strided_slice %421 {offsets = [0, 101], sizes = [1, 256], strides = [1, 1]} : vector<1x358xf32> to vector<1x256xf32>
      %cst_95 = arith.constant 0.000000e+00 : f32
      %655 = vector.broadcast %cst_95 : f32 to vector<1x256xf32>
      %656 = arith.select %135, %654, %655 : vector<1x256xi1>, vector<1x256xf32>
      %657 = vector.broadcast %122 : f32 to vector<1x256xf32>
      %658 = arith.mulf %657, %656 : vector<1x256xf32>
      %659 = arith.addf %653, %658 : vector<1x256xf32>
      %660 = vector.extract_strided_slice %421 {offsets = [0, 6], sizes = [1, 256], strides = [1, 1]} : vector<1x358xf32> to vector<1x256xf32>
      %cst_96 = arith.constant 0.000000e+00 : f32
      %661 = vector.broadcast %cst_96 : f32 to vector<1x256xf32>
      %662 = arith.select %137, %660, %661 : vector<1x256xi1>, vector<1x256xf32>
      %663 = vector.broadcast %81 : f32 to vector<1x256xf32>
      %664 = arith.mulf %663, %662 : vector<1x256xf32>
      %665 = arith.addf %659, %664 : vector<1x256xf32>
      %666 = vector.extract_strided_slice %421 {offsets = [0, 22], sizes = [1, 256], strides = [1, 1]} : vector<1x358xf32> to vector<1x256xf32>
      %cst_97 = arith.constant 0.000000e+00 : f32
      %667 = vector.broadcast %cst_97 : f32 to vector<1x256xf32>
      %668 = arith.select %137, %666, %667 : vector<1x256xi1>, vector<1x256xf32>
      %669 = vector.broadcast %88 : f32 to vector<1x256xf32>
      %670 = arith.mulf %669, %668 : vector<1x256xf32>
      %671 = arith.addf %665, %670 : vector<1x256xf32>
      %672 = vector.extract_strided_slice %421 {offsets = [0, 38], sizes = [1, 256], strides = [1, 1]} : vector<1x358xf32> to vector<1x256xf32>
      %cst_98 = arith.constant 0.000000e+00 : f32
      %673 = vector.broadcast %cst_98 : f32 to vector<1x256xf32>
      %674 = arith.select %137, %672, %673 : vector<1x256xi1>, vector<1x256xf32>
      %675 = vector.broadcast %95 : f32 to vector<1x256xf32>
      %676 = arith.mulf %675, %674 : vector<1x256xf32>
      %677 = arith.addf %671, %676 : vector<1x256xf32>
      %678 = vector.extract_strided_slice %421 {offsets = [0, 54], sizes = [1, 256], strides = [1, 1]} : vector<1x358xf32> to vector<1x256xf32>
      %cst_99 = arith.constant 0.000000e+00 : f32
      %679 = vector.broadcast %cst_99 : f32 to vector<1x256xf32>
      %680 = arith.select %137, %678, %679 : vector<1x256xi1>, vector<1x256xf32>
      %681 = vector.broadcast %102 : f32 to vector<1x256xf32>
      %682 = arith.mulf %681, %680 : vector<1x256xf32>
      %683 = arith.addf %677, %682 : vector<1x256xf32>
      %684 = vector.extract_strided_slice %421 {offsets = [0, 70], sizes = [1, 256], strides = [1, 1]} : vector<1x358xf32> to vector<1x256xf32>
      %cst_100 = arith.constant 0.000000e+00 : f32
      %685 = vector.broadcast %cst_100 : f32 to vector<1x256xf32>
      %686 = arith.select %137, %684, %685 : vector<1x256xi1>, vector<1x256xf32>
      %687 = vector.broadcast %109 : f32 to vector<1x256xf32>
      %688 = arith.mulf %687, %686 : vector<1x256xf32>
      %689 = arith.addf %683, %688 : vector<1x256xf32>
      %690 = vector.extract_strided_slice %421 {offsets = [0, 86], sizes = [1, 256], strides = [1, 1]} : vector<1x358xf32> to vector<1x256xf32>
      %cst_101 = arith.constant 0.000000e+00 : f32
      %691 = vector.broadcast %cst_101 : f32 to vector<1x256xf32>
      %692 = arith.select %137, %690, %691 : vector<1x256xi1>, vector<1x256xf32>
      %693 = vector.broadcast %116 : f32 to vector<1x256xf32>
      %694 = arith.mulf %693, %692 : vector<1x256xf32>
      %695 = arith.addf %689, %694 : vector<1x256xf32>
      %696 = vector.extract_strided_slice %421 {offsets = [0, 102], sizes = [1, 256], strides = [1, 1]} : vector<1x358xf32> to vector<1x256xf32>
      %cst_102 = arith.constant 0.000000e+00 : f32
      %697 = vector.broadcast %cst_102 : f32 to vector<1x256xf32>
      %698 = arith.select %137, %696, %697 : vector<1x256xi1>, vector<1x256xf32>
      %699 = vector.broadcast %123 : f32 to vector<1x256xf32>
      %700 = arith.mulf %699, %698 : vector<1x256xf32>
      %701 = arith.addf %695, %700 : vector<1x256xf32>
      %702 = arith.negf %701 : vector<1x256xf32>
      %703 = math.exp %702 : vector<1x256xf32>
      %cst_103 = arith.constant 1.000000e+00 : f32
      %704 = vector.broadcast %cst_103 : f32 to vector<1x256xf32>
      %705 = arith.addf %704, %703 : vector<1x256xf32>
      %706 = arith.divf %704, %705 : vector<1x256xf32>
      %c0_104 = arith.constant 0 : index
      %c0_105 = arith.constant 0 : index
      %c0_106 = arith.constant 0 : index
      %707 = vector.load %arg4[%c0_104, %c0_105, %c0_106] : memref<1x1x256xf32, #tpu.memory_space<vmem>>, vector<1x1x256xf32>
      %708 = vector.shape_cast %707 : vector<1x1x256xf32> to vector<1x256xf32>
      %709 = vector.shape_cast %706 : vector<1x256xf32> to vector<1x1x256xf32>
      tpu.vector_store %arg4[%c0_104, %c0_105, %c0_106], %709 {strides = array<i32>} : memref<1x1x256xf32, #tpu.memory_space<vmem>>, vector<1x1x256xf32>,
    } else {
    }
    return
  }
  func.func @transform_0(%arg0: i32, %arg1: i32, %arg2: memref<98xf32, #tpu.memory_space<smem>>) -> (i32, i32, i32) {
    %c0_i32 = arith.constant 0 : i32
    %c0_i32_0 = arith.constant 0 : i32
    return %arg0, %arg1, %c0_i32 : i32, i32, i32
  }
  func.func @transform_1(%arg0: i32, %arg1: i32, %arg2: memref<98xf32, #tpu.memory_space<smem>>) -> (i32, i32, i32) {
    %c0_i32 = arith.constant 0 : i32
    %c0_i32_0 = arith.constant 0 : i32
    %c0_i32_1 = arith.constant 0 : i32
    return %arg0, %c0_i32, %c0_i32_0 : i32, i32, i32
  }
}

</mosaic_0001>

<llo_original>
// kernel: tpu_custom_call.1
$region0: #{tpu_custom_call.1}
  #allocation0 [shape = 'u32[]', space=smem, size = 0x4, offset = 0x4, fixed_abs, tag = 'smem constant byte address 0x4 - core index']
  #allocation1 [shape = 'u32[144,128]{1,0:T(1,128)}', space=vmem, size = 0x12000, scoped, tag = 'internal scratch']
  #allocation2 [shape = 'f32[1,256]{1,0:T(1,128)}', space=vmem, size = 0x400, scoped, tag = 'scratch operand']
  #allocation3 [shape = 'f32[1,256]{1,0:T(1,128)}', space=vmem, size = 0x400, scoped, tag = 'scratch operand']
  #allocation4 [shape = 's32[1]{0}', space=sflag, size = 0x4, scoped, tag = 'scoped memory for tpu_custom_call.1']
  #allocation5 [shape = 'u8[512]{0}', space=smem, size = 0x200, scoped, tag = 'prefetched SMEM operand 0']
  %s0 = inlined_call_operand.hbm [shape: f32[98], index: 0, kind: input, shape index: {}]
  %s1 = inlined_call_operand.hbm [shape: f32[2,4,256], index: 1, kind: input, shape index: {}]
  %s2 = inlined_call_operand.hbm [shape: f32[2,1,256], index: 2, kind: output, shape index: {}]
  %s3 = sld [smem:[#allocation0]]
  $region53: #{tpu_custom_call.1} parent=0
    _
  %s5 = ssub.s32 1, %s3
  %s6 = scalar_select 0, %s5, %s3
  %8 = dma.hbm_to_smem %s0, 16, [#allocation5], [#allocation4]
  %9 = dma.done [#allocation4], 16
  %10 = sfence
  $region1: #{tpu_custom_call.1} parent=0
    #allocation6 [shape = 'u8[8192]{0}', space=vmem, size = 0x2000, scoped, tag = 'input window, operand 1']
    #allocation7 [shape = 's32[2]{0}', space=sflag, size = 0x8, scoped, tag = 'scoped memory for tpu_custom_call.1']
    #allocation8 [shape = 's32[2]{0}', space=sflag, size = 0x8, scoped, tag = 'scoped memory for tpu_custom_call.1']
    #allocation9 [shape = 'u8[2048]{0}', space=vmem, size = 0x800, scoped, tag = 'output window, operand 0']
    %11 = vsyncpa [#allocation7], 0
    %s12 = scalar_lea.sflag [#allocation7], 1
    %13 = vsyncpa %s12, 0
    %14 = vsyncpa [#allocation8], 0
    %s15 = scalar_lea.sflag [#allocation8], 1
    %16 = vsyncpa %s15, 0
    loop: start=0, step=1, limit=4
    $region2: #{tpu_custom_call.1} parent=1 // loop_pre_header
      _
    $region3: #{tpu_custom_call.1} parent=1 // loop_header
      %s18 = sphi 0, %s22
      %p19 = scmp.ge.s32.totalorder %s18, 4
      %s25 = sphi 0, %s37
      %s26 = sphi 0, %s33
      %s27 = sphi 0, %s25
      %s28 = sphi 0, %s26
      %s29 = sphi 0, %s27
      %s30 = sphi 0, %s28
      %s42 = sphi 0, %s44
      %s45 = sphi 0, %s42
      %s46 = sphi 0, %s45
      %s62 = sphi 0, %s46
      %s68 = sphi 0, %s70
      %s71 = sphi 0, %s68
      %s72 = sphi 0, %s71
      %s88 = sphi 0, %s72
    $region4: #{tpu_custom_call.1} parent=1 // loop_header_branch
      %21 = sbr.rel (%p19) target = $region8
    $region5: #{tpu_custom_call.1} parent=1 // loop_body
      %s23 = ssub.s32 %s18, 1
      %s24 = ssub.s32 %s18, 2
      %s31 = sadd.s32 1, %s26
      %p32 = scmp.ge.s32.totalorder %s31, 1
      %s33 = scalar_select %p32, 0, %s31
      %s34 = sadd.s32 1, %s25
      %s35 = scalar_select %p32, %s34, %s25
      %p36 = scmp.ge.s32.totalorder %s35, 2
      %s37 = scalar_select %p36, 0, %s35
      %s38 = ssub.s32 %s25, %s37
      %s39 = ssub.s32 %s26, %s33
      %s40 = sor.u32 %s38, %s39
      %p41 = scmp.eq.s32.totalorder %s40, 0
      %s43 = sadd.s32 %s42, 1
      %s44 = scalar_select %p41, %s42, %s43
      %p47 = pneg %p41
      %p48 = scmp.eq.s32.totalorder %s18, 1
      %p49 = por %p47, %p48
      %p50 = scmp.ne.s32.totalorder %s42, %s45
      %p51 = scmp.eq.s32.totalorder %s18, 0
      %p52 = por %p50, %p51
      %p53 = scmp.ne.s32.totalorder %s42, %s45
      %p54 = scmp.eq.s32.totalorder %s23, 1
      %p55 = por %p53, %p54
      %p56 = scmp.ne.s32.totalorder %s45, %s46
      %p57 = scmp.eq.s32.totalorder %s23, 0
      %p58 = por %p56, %p57
      %p59 = scmp.ne.s32.totalorder %s45, %s46
      %p60 = scmp.eq.s32.totalorder %s24, 1
      %p61 = por %p59, %p60
      %p63 = scmp.ne.s32.totalorder %s46, %s62
      %p64 = scmp.eq.s32.totalorder %s24, 0
      %p65 = por %p63, %p64
      %s66 = ssub.s32 %s25, %s37
      %p67 = scmp.eq.s32.totalorder %s66, 0
      %s69 = sadd.s32 %s68, 1
      %s70 = scalar_select %p67, %s68, %s69
      %p73 = pneg %p67
      %p74 = scmp.eq.s32.totalorder %s18, 1
      %p75 = por %p73, %p74
      %p76 = scmp.ne.s32.totalorder %s68, %s71
      %p77 = scmp.eq.s32.totalorder %s18, 0
      %p78 = por %p76, %p77
      %p79 = scmp.ne.s32.totalorder %s68, %s71
      %p80 = scmp.eq.s32.totalorder %s23, 1
      %p81 = por %p79, %p80
      %p82 = scmp.ne.s32.totalorder %s71, %s72
      %p83 = scmp.eq.s32.totalorder %s23, 0
      %p84 = por %p82, %p83
      %p85 = scmp.ne.s32.totalorder %s71, %s72
      %p86 = scmp.eq.s32.totalorder %s24, 1
      %p87 = por %p85, %p86
      %p89 = scmp.ne.s32.totalorder %s72, %s88
      %p90 = scmp.eq.s32.totalorder %s24, 0
      %p91 = por %p89, %p90
      %p92 = scmp.le.s32.totalorder 1, %s18
      %p93 = scmp.lt.s32.totalorder %s18, 3
      %p94 = pnand %p92, %p93
      %p95 = pneg %p94
      // Predicated region
      $region9: #{tpu_custom_call.1} parent=5 // pred_check
        _
      $region10: #{tpu_custom_call.1} parent=5 // pred_check_branch
        %97 = sbr.rel (%p94) target = $region12
      $region11: #{tpu_custom_call.1} parent=5 // pred_region
        %s98 = ssub.s32 %s18, 1
      $region12: #{tpu_custom_call.1} parent=5 // pred_fallthru
        _
      %p99 = scmp.lt.s32.totalorder %s18, 2
      // Predicated region
      $region13: #{tpu_custom_call.1} parent=5 // pred_check
        %p100 = pneg %p99
      $region14: #{tpu_custom_call.1} parent=5 // pred_check_branch
        %102 = sbr.rel (%p100) target = $region16
      $region15: #{tpu_custom_call.1} parent=5 // pred_region
        // Predicated region
        $region17: #{tpu_custom_call.1} parent=15 // pred_check
          %p103 = pneg %p52
        $region18: #{tpu_custom_call.1} parent=15 // pred_check_branch
          %105 = sbr.rel (%p103) target = $region20
        $region19: #{tpu_custom_call.1} parent=15 // pred_region
          %s106 = sand.u32 %s42, 1
          %s107 = scalar_lea.sflag [#allocation7], %s106
          %s108 = sand.u32 %s42, 1
          %s109 = smul.addr %s108, 8
          %s110 = scalar_lea.vmem [#allocation6], %s109
          %s112 = ssub.s32 128, 128
          %113 = vsyncadd %s107, %s112
          %s114 = smul.addr %s26, 2
          %s115 = smul.addr %s25, 2
          %s116 = sadd.s32 %s114, %s115
          %s117 = smul.addr %s116, 64
          %s118 = scalar_lea.hbm %s1, %s117
          %s120 = sshll.u32 %s110, 4
          %s121 = int_to_ptr.vmem [resolvable:$true] %s120
          %123 = dma.hbm_to_vmem [thread:$0]  %s118, 128, %s121, %s107
        $region20: #{tpu_custom_call.1} parent=15 // pred_fallthru
          _
      $region16: #{tpu_custom_call.1} parent=5 // pred_fallthru
        _
      %p124 = scmp.le.s32.totalorder 1, %s18
      %p125 = scmp.lt.s32.totalorder %s18, 3
      %p126 = pnand %p124, %p125
      %p127 = pneg %p126
      // Predicated region
      $region21: #{tpu_custom_call.1} parent=5 // pred_check
        _
      $region22: #{tpu_custom_call.1} parent=5 // pred_check_branch
        %129 = sbr.rel (%p126) target = $region24
      $region23: #{tpu_custom_call.1} parent=5 // pred_region
        %s130 = ssub.s32 %s18, 1
        %s131 = sand.u32 %s45, 1
        %s132 = scalar_lea.sflag [#allocation7], %s131
        %s133 = sand.u32 %s45, 1
        %s134 = smul.addr %s133, 8
        %s135 = scalar_lea.vmem [#allocation6], %s134
        // Predicated region
        $region25: #{tpu_custom_call.1} parent=23 // pred_check
          %p136 = pneg %p58
        $region26: #{tpu_custom_call.1} parent=23 // pred_check_branch
          %138 = sbr.rel (%p136) target = $region28
        $region27: #{tpu_custom_call.1} parent=23 // pred_region
          %139 = dma.done %s132, 128
        $region28: #{tpu_custom_call.1} parent=23 // pred_fallthru
          _
        %s140 = sand.u32 %s45, 1
        %s141 = scalar_lea.sflag [#allocation7], %s140
        %s142 = sand.u32 %s45, 1
        %s143 = smul.addr %s142, 8
        %s144 = scalar_lea.vmem [#allocation6], %s143
        %p145 = pneg %p58
        %p146 = pneg %p55
        %p147 = pneg %p84
        %p148 = pneg %p81
        %s149 = sand.u32 %s71, 1
        %s150 = scalar_lea.sflag [#allocation8], %s149
        %s151 = sand.u32 %s71, 1
        %s152 = smul.addr %s151, 2
        %s153 = scalar_lea.vmem [#allocation9], %s152
        %s154 = smul.u32 0, 2
        %s155 = smul.addr %s154, 4
        %s156 = scalar_lea.vmem %s135, %s155 [#allocation6]
        %v157 = vld [vmem:[%s156] sm:$0xff]
        %v159 = vcombine.high %v157, %v157
        %vm161 = vcmask 1043456
        %v162 = vsel %vm161, %v157, 0.0
        %v163 = vrot.slane %v162, 4
        %v164 = vadd.f32 %v162, %v163
        %v165 = vrot.slane %v164, 2
        %v166 = vadd.f32 %v164, %v165
        %v167 = vrot.slane %v166, 1
        %v168 = vadd.f32 %v166, %v167
        %v169 = vsel %vm161, %v159, 0.0
        %v170 = vrot.slane %v169, 4
        %v171 = vadd.f32 %v169, %v170
        %v172 = vrot.slane %v171, 2
        %v173 = vadd.f32 %v171, %v172
        %v174 = vrot.slane %v173, 1
        %v175 = vadd.f32 %v173, %v174
        %v176 = vadd.f32 %v168, 0.0
        %v177 = vadd.f32 %v175, 0.0
        %v178 = vsel %vm161, %v157, -inf
        %v179 = vrot.slane %v178, 4
        %v180 = vmax.f32 %v178, %v179
        %v181 = vrot.slane %v180, 2
        %v182 = vmax.f32 %v180, %v181
        %v183 = vrot.slane %v182, 1
        %v184 = vmax.f32 %v182, %v183
        %v185 = vsel %vm161, %v159, -inf
        %v186 = vrot.slane %v185, 4
        %v187 = vmax.f32 %v185, %v186
        %v188 = vrot.slane %v187, 2
        %v189 = vmax.f32 %v187, %v188
        %v190 = vrot.slane %v189, 1
        %v191 = vmax.f32 %v189, %v190
        %p192 = scmp.eq.s32.totalorder %s28, 0
        // Predicated region
        $region29: #{tpu_custom_call.1} parent=23 // pred_check
          %p193 = pneg %p192
        $region30: #{tpu_custom_call.1} parent=23 // pred_check_branch
          %195 = sbr.rel (%p193) target = $region32
        $region31: #{tpu_custom_call.1} parent=23 // pred_region
          %v198 = vcombine.low %v176, %v177
          %v200 = vunpack.c.l.s4 1966171168
          %v201 = vunpack.c.0.s8 %v200
          %v202 = vlaneseq
          %v203 = vshrl.u32 %v202, 7
          %v204 = vsub.s32 %v201, %v203
          %v205 = vrot.slane %v198, %v204
          %v207 = vunpack.c.l.s4 1966171168
          %v208 = vunpack.c.0.s8 %v207
          %v209 = vlaneseq
          %v210 = vshrl.u32 %v209, 7
          %v211 = vsub.s32 %v208, %v210
          %v212 = vrot.slane %v205, %v211
          %v214 = vlaneseq
          %vm215 = vcmp.ge.s32.totalorder %v214, 0
          %vm216 = vcmp.lt.s32.totalorder %v214, 256
          %vm217 = vmand %vm215, %vm216
          %218 = vst.msk [vmem:[#allocation2] sm:$0x3] %vm217, %v212
          %v221 = vcombine.low %v184, %v191
          %v223 = vunpack.c.l.s4 1966171168
          %v224 = vunpack.c.0.s8 %v223
          %v225 = vlaneseq
          %v226 = vshrl.u32 %v225, 7
          %v227 = vsub.s32 %v224, %v226
          %v228 = vrot.slane %v221, %v227
          %v230 = vunpack.c.l.s4 1966171168
          %v231 = vunpack.c.0.s8 %v230
          %v232 = vlaneseq
          %v233 = vshrl.u32 %v232, 7
          %v234 = vsub.s32 %v231, %v233
          %v235 = vrot.slane %v228, %v234
          %237 = vst.msk [vmem:[#allocation3] sm:$0x3] %vm217, %v235
        $region32: #{tpu_custom_call.1} parent=23 // pred_fallthru
          _
        %p238 = scmp.gt.s32.totalorder %s28, 0
        // Predicated region
        $region33: #{tpu_custom_call.1} parent=23 // pred_check
          %p239 = pneg %p238
        $region34: #{tpu_custom_call.1} parent=23 // pred_check_branch
          %241 = sbr.rel (%p239) target = $region36
        $region35: #{tpu_custom_call.1} parent=23 // pred_region
          %v242 = vld [vmem:[#allocation2] sm:$0x3]
          %v245 = vcombine.low %v176, %v177
          %v247 = vunpack.c.l.s4 1966171168
          %v248 = vunpack.c.0.s8 %v247
          %v249 = vlaneseq
          %v250 = vshrl.u32 %v249, 7
          %v251 = vsub.s32 %v248, %v250
          %v252 = vrot.slane %v245, %v251
          %v254 = vunpack.c.l.s4 1966171168
          %v255 = vunpack.c.0.s8 %v254
          %v256 = vlaneseq
          %v257 = vshrl.u32 %v256, 7
          %v258 = vsub.s32 %v255, %v257
          %v259 = vrot.slane %v252, %v258
          %v261 = vadd.f32 %v242, %v259
          %v262 = vlaneseq
          %vm263 = vcmp.ge.s32.totalorder %v262, 0
          %vm264 = vcmp.lt.s32.totalorder %v262, 256
          %vm265 = vmand %vm263, %vm264
          %266 = vst.msk [vmem:[#allocation2] sm:$0x3] %vm265, %v261
          %v267 = vld [vmem:[#allocation3] sm:$0x3]
          %v270 = vcombine.low %v184, %v191
          %v272 = vunpack.c.l.s4 1966171168
          %v273 = vunpack.c.0.s8 %v272
          %v274 = vlaneseq
          %v275 = vshrl.u32 %v274, 7
          %v276 = vsub.s32 %v273, %v275
          %v277 = vrot.slane %v270, %v276
          %v279 = vunpack.c.l.s4 1966171168
          %v280 = vunpack.c.0.s8 %v279
          %v281 = vlaneseq
          %v282 = vshrl.u32 %v281, 7
          %v283 = vsub.s32 %v280, %v282
          %v284 = vrot.slane %v277, %v283
          %v286 = vmax.f32 %v267, %v284
          %287 = vst.msk [vmem:[#allocation3] sm:$0x3] %vm265, %v286
        $region36: #{tpu_custom_call.1} parent=23 // pred_fallthru
          _
        // Predicated region
        $region37: #{tpu_custom_call.1} parent=23 // pred_check
          %p288 = pneg %p192
        $region38: #{tpu_custom_call.1} parent=23 // pred_check_branch
          %290 = sbr.rel (%p288) target = $region40
        $region39: #{tpu_custom_call.1} parent=23 // pred_region
          %v291 = vld [vmem:[#allocation2] sm:$0x3]
          %v292 = vmul.f32 %v291, 0.25
          %v293 = vld [vmem:[#allocation3] sm:$0x3]
          %s294 = sld [smem:[#allocation5]]
          %s295 = sld [smem:[#allocation5 + $0x1]]
          %s296 = sld [smem:[#allocation5 + $0x2]]
          %s297 = sld [smem:[#allocation5 + $0x3]]
          %s298 = sld [smem:[#allocation5 + $0x4]]
          %s299 = sld [smem:[#allocation5 + $0x5]]
          %s300 = sld [smem:[#allocation5 + $0x6]]
          %s301 = sld [smem:[#allocation5 + $0x7]]
          %s302 = sld [smem:[#allocation5 + $0x8]]
          %s303 = sld [smem:[#allocation5 + $0x9]]
          %s304 = sld [smem:[#allocation5 + $0xa]]
          %s305 = sld [smem:[#allocation5 + $0xb]]
          %s306 = sld [smem:[#allocation5 + $0xc]]
          %s307 = sld [smem:[#allocation5 + $0xd]]
          %s308 = sld [smem:[#allocation5 + $0xe]]
          %s309 = sld [smem:[#allocation5 + $0xf]]
          %s310 = sld [smem:[#allocation5 + $0x10]]
          %s311 = sld [smem:[#allocation5 + $0x11]]
          %s312 = sld [smem:[#allocation5 + $0x12]]
          %s313 = sld [smem:[#allocation5 + $0x13]]
          %s314 = sld [smem:[#allocation5 + $0x14]]
          %s315 = sld [smem:[#allocation5 + $0x15]]
          %s316 = sld [smem:[#allocation5 + $0x16]]
          %s317 = sld [smem:[#allocation5 + $0x17]]
          %s318 = sld [smem:[#allocation5 + $0x18]]
          %s319 = sld [smem:[#allocation5 + $0x19]]
          %s320 = sld [smem:[#allocation5 + $0x1a]]
          %s321 = sld [smem:[#allocation5 + $0x1b]]
          %s322 = sld [smem:[#allocation5 + $0x1c]]
          %s323 = sld [smem:[#allocation5 + $0x1d]]
          %s324 = sld [smem:[#allocation5 + $0x1e]]
          %s325 = sld [smem:[#allocation5 + $0x1f]]
          %s326 = sld [smem:[#allocation5 + $0x20]]
          %s327 = sld [smem:[#allocation5 + $0x21]]
          %s328 = sld [smem:[#allocation5 + $0x22]]
          %s329 = sld [smem:[#allocation5 + $0x23]]
          %s330 = sld [smem:[#allocation5 + $0x24]]
          %s331 = sld [smem:[#allocation5 + $0x25]]
          %s332 = sld [smem:[#allocation5 + $0x26]]
          %s333 = sld [smem:[#allocation5 + $0x27]]
          %s334 = sld [smem:[#allocation5 + $0x28]]
          %s335 = sld [smem:[#allocation5 + $0x29]]
          %s336 = sld [smem:[#allocation5 + $0x2a]]
          %s337 = sld [smem:[#allocation5 + $0x2b]]
          %s338 = sld [smem:[#allocation5 + $0x2c]]
          %s339 = sld [smem:[#allocation5 + $0x2d]]
          %s340 = sld [smem:[#allocation5 + $0x2e]]
          %s341 = sld [smem:[#allocation5 + $0x2f]]
          %s342 = sld [smem:[#allocation5 + $0x30]]
          %s343 = sld [smem:[#allocation5 + $0x31]]
          %s344 = sld [smem:[#allocation5 + $0x32]]
          %s345 = sld [smem:[#allocation5 + $0x33]]
          %s346 = sld [smem:[#allocation5 + $0x34]]
          %s347 = sld [smem:[#allocation5 + $0x35]]
          %s348 = sld [smem:[#allocation5 + $0x36]]
          %s349 = sld [smem:[#allocation5 + $0x37]]
          %s350 = sld [smem:[#allocation5 + $0x38]]
          %s351 = sld [smem:[#allocation5 + $0x39]]
          %s352 = sld [smem:[#allocation5 + $0x3a]]
          %s353 = sld [smem:[#allocation5 + $0x3b]]
          %s354 = sld [smem:[#allocation5 + $0x3c]]
          %s355 = sld [smem:[#allocation5 + $0x3d]]
          %s356 = sld [smem:[#allocation5 + $0x3e]]
          %s357 = sld [smem:[#allocation5 + $0x3f]]
          %s358 = sld [smem:[#allocation5 + $0x40]]
          %s359 = sld [smem:[#allocation5 + $0x41]]
          %s360 = sld [smem:[#allocation5 + $0x42]]
          %s361 = sld [smem:[#allocation5 + $0x43]]
          %s362 = sld [smem:[#allocation5 + $0x44]]
          %s363 = sld [smem:[#allocation5 + $0x45]]
          %s364 = sld [smem:[#allocation5 + $0x46]]
          %s365 = sld [smem:[#allocation5 + $0x47]]
          %s366 = sld [smem:[#allocation5 + $0x48]]
          %s367 = sld [smem:[#allocation5 + $0x49]]
          %s368 = sld [smem:[#allocation5 + $0x4a]]
          %s369 = sld [smem:[#allocation5 + $0x4b]]
          %s370 = sld [smem:[#allocation5 + $0x4c]]
          %s371 = sld [smem:[#allocation5 + $0x4d]]
          %s372 = sld [smem:[#allocation5 + $0x4e]]
          %s373 = sld [smem:[#allocation5 + $0x4f]]
          %s374 = sld [smem:[#allocation5 + $0x50]]
          %s375 = sld [smem:[#allocation5 + $0x51]]
          %s376 = sld [smem:[#allocation5 + $0x52]]
          %s377 = sld [smem:[#allocation5 + $0x53]]
          %s378 = sld [smem:[#allocation5 + $0x54]]
          %s379 = sld [smem:[#allocation5 + $0x55]]
          %s380 = sld [smem:[#allocation5 + $0x56]]
          %s381 = sld [smem:[#allocation5 + $0x57]]
          %s382 = sld [smem:[#allocation5 + $0x58]]
          %s383 = sld [smem:[#allocation5 + $0x59]]
          %s384 = sld [smem:[#allocation5 + $0x5a]]
          %s385 = sld [smem:[#allocation5 + $0x5b]]
          %s386 = sld [smem:[#allocation5 + $0x5c]]
          %s387 = sld [smem:[#allocation5 + $0x5d]]
          %s388 = sld [smem:[#allocation5 + $0x5e]]
          %s389 = sld [smem:[#allocation5 + $0x5f]]
          %s390 = sld [smem:[#allocation5 + $0x60]]
          %s391 = sld [smem:[#allocation5 + $0x61]]
          %v392 = vlaneseq
          %v393 = vand.u32 %v392, 127
          %394 = vrot.lane.b32.xlu0 %v393, 16
          %v395 = vpop.permute.xlu0 %394
          %396 = vrot.lane.b32.xlu0 %v393, 32
          %v397 = vpop.permute.xlu0 %396
          %398 = vrot.lane.b32.xlu0 %v393, 48
          %v399 = vpop.permute.xlu0 %398
          %400 = vrot.lane.b32.xlu0 %v393, 64
          %v401 = vpop.permute.xlu0 %400
          %402 = vrot.lane.b32.xlu0 %v393, 80
          %v403 = vpop.permute.xlu0 %402
          %404 = vrot.lane.b32.xlu0 %v393, 96
          %v405 = vpop.permute.xlu0 %404
          %406 = vrot.lane.b32.xlu0 %v393, 112
          %v407 = vpop.permute.xlu0 %406
          %vm408 = vcmask 130048
          %v409 = vsel %vm408, %v393, %v395
          %vm410 = vcmask 261120
          %v411 = vsel %vm410, %v409, %v397
          %vm412 = vcmask 392192
          %v413 = vsel %vm412, %v411, %v399
          %vm414 = vcmask 523264
          %v415 = vsel %vm414, %v413, %v401
          %vm416 = vcmask 654336
          %v417 = vsel %vm416, %v415, %v403
          %vm418 = vcmask 785408
          %v419 = vsel %vm418, %v417, %v405
          %vm420 = vcmask 916480
          %v421 = vsel %vm420, %v419, %v407
          %vm422 = vcmp.ge.s32.totalorder %v421, 3
          %vm423 = vcmp.ge.s32.totalorder %v421, 2
          %vm424 = vcmp.ge.s32.totalorder %v421, 1
          %vm425 = vcmp.lt.s32.totalorder %v421, 15
          %vm426 = vcmp.lt.s32.totalorder %v421, 14
          %vm427 = vcmp.lt.s32.totalorder %v421, 13
          %v429 = vlaneseq
          %v430 = vshrl.u32 %v429, 7
          %v431 = vsub.s32 0, %v430
          %v432 = vrot.slane %v292, %v431
          %v433 = vlaneseq
          %v434 = vshrl.u32 %v433, 7
          %v435 = vsub.s32 1, %v434
          %v436 = vrot.slane %v292, %v435
          %437 = vrot.lane.b32.xlu0 %v432, 51
          %v438 = vpop.permute.xlu0 %437
          %439 = vrot.lane.b32.xlu0 %v436, 51
          %v440 = vpop.permute.xlu0 %439
          %vm441 = vcmask 416768
          %v442 = vsel %vm441, %v438, %v440
          %v446 = vsel %vm441, 0.0, %v438
          %v447 = vsel %vm441, %v440, 0.0
          %v448 = vsel %vm422, %v446, 0.0
          %v449 = vsel %vm422, %v442, 0.0
          %v450 = vstv %s294
          %v451 = vmul.f32 %v450, %v448
          %v452 = vmul.f32 %v450, %v449
          %v453 = vadd.f32 %v451, 0.0
          %v454 = vadd.f32 %v452, 0.0
          %457 = vrot.lane.b32.xlu0 %v446, 112
          %v458 = vpop.permute.xlu0 %457
          %459 = vrot.lane.b32.xlu0 %v442, 112
          %v460 = vpop.permute.xlu0 %459
          %461 = vrot.lane.b32.xlu0 %v447, 112
          %v462 = vpop.permute.xlu0 %461
          %v463 = vsel %vm420, %v458, %v460
          %v464 = vsel %vm420, %v460, %v462
          %v467 = vsel %vm422, %v463, 0.0
          %v468 = vsel %vm422, %v464, 0.0
          %v469 = vstv %s301
          %v470 = vmul.f32 %v469, %v467
          %v471 = vmul.f32 %v469, %v468
          %v472 = vadd.f32 %v453, %v470
          %v473 = vadd.f32 %v454, %v471
          %474 = vrot.lane.b32.xlu0 %v446, 96
          %v475 = vpop.permute.xlu0 %474
          %476 = vrot.lane.b32.xlu0 %v442, 96
          %v477 = vpop.permute.xlu0 %476
          %478 = vrot.lane.b32.xlu0 %v447, 96
          %v479 = vpop.permute.xlu0 %478
          %v480 = vsel %vm418, %v475, %v477
          %v481 = vsel %vm418, %v477, %v479
          %v484 = vsel %vm422, %v480, 0.0
          %v485 = vsel %vm422, %v481, 0.0
          %v486 = vstv %s308
          %v487 = vmul.f32 %v486, %v484
          %v488 = vmul.f32 %v486, %v485
          %v489 = vadd.f32 %v472, %v487
          %v490 = vadd.f32 %v473, %v488
          %491 = vrot.lane.b32.xlu0 %v446, 80
          %v492 = vpop.permute.xlu0 %491
          %493 = vrot.lane.b32.xlu0 %v442, 80
          %v494 = vpop.permute.xlu0 %493
          %495 = vrot.lane.b32.xlu0 %v447, 80
          %v496 = vpop.permute.xlu0 %495
          %v497 = vsel %vm416, %v492, %v494
          %v498 = vsel %vm416, %v494, %v496
          %v501 = vsel %vm422, %v497, 0.0
          %v502 = vsel %vm422, %v498, 0.0
          %v503 = vstv %s315
          %v504 = vmul.f32 %v503, %v501
          %v505 = vmul.f32 %v503, %v502
          %v506 = vadd.f32 %v489, %v504
          %v507 = vadd.f32 %v490, %v505
          %508 = vrot.lane.b32.xlu0 %v446, 64
          %v509 = vpop.permute.xlu0 %508
          %510 = vrot.lane.b32.xlu0 %v442, 64
          %v511 = vpop.permute.xlu0 %510
          %512 = vrot.lane.b32.xlu0 %v447, 64
          %v513 = vpop.permute.xlu0 %512
          %v514 = vsel %vm414, %v509, %v511
          %v515 = vsel %vm414, %v511, %v513
          %v518 = vsel %vm422, %v514, 0.0
          %v519 = vsel %vm422, %v515, 0.0
          %v520 = vstv %s322
          %v521 = vmul.f32 %v520, %v518
          %v522 = vmul.f32 %v520, %v519
          %v523 = vadd.f32 %v506, %v521
          %v524 = vadd.f32 %v507, %v522
          %525 = vrot.lane.b32.xlu0 %v446, 48
          %v526 = vpop.permute.xlu0 %525
          %527 = vrot.lane.b32.xlu0 %v442, 48
          %v528 = vpop.permute.xlu0 %527
          %529 = vrot.lane.b32.xlu0 %v447, 48
          %v530 = vpop.permute.xlu0 %529
          %v531 = vsel %vm412, %v526, %v528
          %v532 = vsel %vm412, %v528, %v530
          %v535 = vsel %vm422, %v531, 0.0
          %v536 = vsel %vm422, %v532, 0.0
          %v537 = vstv %s329
          %v538 = vmul.f32 %v537, %v535
          %v539 = vmul.f32 %v537, %v536
          %v540 = vadd.f32 %v523, %v538
          %v541 = vadd.f32 %v524, %v539
          %542 = vrot.lane.b32.xlu0 %v446, 32
          %v543 = vpop.permute.xlu0 %542
          %544 = vrot.lane.b32.xlu0 %v442, 32
          %v545 = vpop.permute.xlu0 %544
          %546 = vrot.lane.b32.xlu0 %v447, 32
          %v547 = vpop.permute.xlu0 %546
          %v548 = vsel %vm410, %v543, %v545
          %v549 = vsel %vm410, %v545, %v547
          %v552 = vsel %vm422, %v548, 0.0
          %v553 = vsel %vm422, %v549, 0.0
          %v554 = vstv %s336
          %v555 = vmul.f32 %v554, %v552
          %v556 = vmul.f32 %v554, %v553
          %v557 = vadd.f32 %v540, %v555
          %v558 = vadd.f32 %v541, %v556
          %559 = vrot.lane.b32.xlu0 %v446, 127
          %v560 = vpop.permute.xlu0 %559
          %561 = vrot.lane.b32.xlu0 %v442, 127
          %v562 = vpop.permute.xlu0 %561
          %563 = vrot.lane.b32.xlu0 %v447, 127
          %v564 = vpop.permute.xlu0 %563
          %vm565 = vcmask 1039360
          %v566 = vsel %vm565, %v560, %v562
          %v567 = vsel %vm565, %v562, %v564
          %v570 = vsel %vm423, %v566, 0.0
          %v571 = vsel %vm423, %v567, 0.0
          %v572 = vstv %s295
          %v573 = vmul.f32 %v572, %v570
          %v574 = vmul.f32 %v572, %v571
          %v575 = vadd.f32 %v557, %v573
          %v576 = vadd.f32 %v558, %v574
          %577 = vrot.lane.b32.xlu0 %v446, 111
          %v578 = vpop.permute.xlu0 %577
          %579 = vrot.lane.b32.xlu0 %v442, 111
          %v580 = vpop.permute.xlu0 %579
          %581 = vrot.lane.b32.xlu0 %v447, 111
          %v582 = vpop.permute.xlu0 %581
          %vm583 = vcmask 908288
          %v584 = vsel %vm583, %v578, %v580
          %v585 = vsel %vm583, %v580, %v582
          %v588 = vsel %vm423, %v584, 0.0
          %v589 = vsel %vm423, %v585, 0.0
          %v590 = vstv %s302
          %v591 = vmul.f32 %v590, %v588
          %v592 = vmul.f32 %v590, %v589
          %v593 = vadd.f32 %v575, %v591
          %v594 = vadd.f32 %v576, %v592
          %595 = vrot.lane.b32.xlu0 %v446, 95
          %v596 = vpop.permute.xlu0 %595
          %597 = vrot.lane.b32.xlu0 %v442, 95
          %v598 = vpop.permute.xlu0 %597
          %599 = vrot.lane.b32.xlu0 %v447, 95
          %v600 = vpop.permute.xlu0 %599
          %vm601 = vcmask 777216
          %v602 = vsel %vm601, %v596, %v598
          %v603 = vsel %vm601, %v598, %v600
          %v606 = vsel %vm423, %v602, 0.0
          %v607 = vsel %vm423, %v603, 0.0
          %v608 = vstv %s309
          %v609 = vmul.f32 %v608, %v606
          %v610 = vmul.f32 %v608, %v607
          %v611 = vadd.f32 %v593, %v609
          %v612 = vadd.f32 %v594, %v610
          %613 = vrot.lane.b32.xlu0 %v446, 79
          %v614 = vpop.permute.xlu0 %613
          %615 = vrot.lane.b32.xlu0 %v442, 79
          %v616 = vpop.permute.xlu0 %615
          %617 = vrot.lane.b32.xlu0 %v447, 79
          %v618 = vpop.permute.xlu0 %617
          %vm619 = vcmask 646144
          %v620 = vsel %vm619, %v614, %v616
          %v621 = vsel %vm619, %v616, %v618
          %v624 = vsel %vm423, %v620, 0.0
          %v625 = vsel %vm423, %v621, 0.0
          %v626 = vstv %s316
          %v627 = vmul.f32 %v626, %v624
          %v628 = vmul.f32 %v626, %v625
          %v629 = vadd.f32 %v611, %v627
          %v630 = vadd.f32 %v612, %v628
          %631 = vrot.lane.b32.xlu0 %v446, 63
          %v632 = vpop.permute.xlu0 %631
          %633 = vrot.lane.b32.xlu0 %v442, 63
          %v634 = vpop.permute.xlu0 %633
          %635 = vrot.lane.b32.xlu0 %v447, 63
          %v636 = vpop.permute.xlu0 %635
          %vm637 = vcmask 515072
          %v638 = vsel %vm637, %v632, %v634
          %v639 = vsel %vm637, %v634, %v636
          %v642 = vsel %vm423, %v638, 0.0
          %v643 = vsel %vm423, %v639, 0.0
          %v644 = vstv %s323
          %v645 = vmul.f32 %v644, %v642
          %v646 = vmul.f32 %v644, %v643
          %v647 = vadd.f32 %v629, %v645
          %v648 = vadd.f32 %v630, %v646
          %649 = vrot.lane.b32.xlu0 %v446, 47
          %v650 = vpop.permute.xlu0 %649
          %651 = vrot.lane.b32.xlu0 %v442, 47
          %v652 = vpop.permute.xlu0 %651
          %653 = vrot.lane.b32.xlu0 %v447, 47
          %v654 = vpop.permute.xlu0 %653
          %vm655 = vcmask 384000
          %v656 = vsel %vm655, %v650, %v652
          %v657 = vsel %vm655, %v652, %v654
          %v660 = vsel %vm423, %v656, 0.0
          %v661 = vsel %vm423, %v657, 0.0
          %v662 = vstv %s330
          %v663 = vmul.f32 %v662, %v660
          %v664 = vmul.f32 %v662, %v661
          %v665 = vadd.f32 %v647, %v663
          %v666 = vadd.f32 %v648, %v664
          %667 = vrot.lane.b32.xlu0 %v446, 31
          %v668 = vpop.permute.xlu0 %667
          %669 = vrot.lane.b32.xlu0 %v442, 31
          %v670 = vpop.permute.xlu0 %669
          %671 = vrot.lane.b32.xlu0 %v447, 31
          %v672 = vpop.permute.xlu0 %671
          %vm673 = vcmask 252928
          %v674 = vsel %vm673, %v668, %v670
          %v675 = vsel %vm673, %v670, %v672
          %v678 = vsel %vm423, %v674, 0.0
          %v679 = vsel %vm423, %v675, 0.0
          %v680 = vstv %s337
          %v681 = vmul.f32 %v680, %v678
          %v682 = vmul.f32 %v680, %v679
          %v683 = vadd.f32 %v665, %v681
          %v684 = vadd.f32 %v666, %v682
          %685 = vrot.lane.b32.xlu0 %v446, 126
          %v686 = vpop.permute.xlu0 %685
          %687 = vrot.lane.b32.xlu0 %v442, 126
          %v688 = vpop.permute.xlu0 %687
          %689 = vrot.lane.b32.xlu0 %v447, 126
          %v690 = vpop.permute.xlu0 %689
          %vm691 = vcmask 1031168
          %v692 = vsel %vm691, %v686, %v688
          %v693 = vsel %vm691, %v688, %v690
          %v696 = vsel %vm424, %v692, 0.0
          %v697 = vsel %vm424, %v693, 0.0
          %v698 = vstv %s296
          %v699 = vmul.f32 %v698, %v696
          %v700 = vmul.f32 %v698, %v697
          %v701 = vadd.f32 %v683, %v699
          %v702 = vadd.f32 %v684, %v700
          %703 = vrot.lane.b32.xlu0 %v446, 110
          %v704 = vpop.permute.xlu0 %703
          %705 = vrot.lane.b32.xlu0 %v442, 110
          %v706 = vpop.permute.xlu0 %705
          %707 = vrot.lane.b32.xlu0 %v447, 110
          %v708 = vpop.permute.xlu0 %707
          %vm709 = vcmask 900096
          %v710 = vsel %vm709, %v704, %v706
          %v711 = vsel %vm709, %v706, %v708
          %v714 = vsel %vm424, %v710, 0.0
          %v715 = vsel %vm424, %v711, 0.0
          %v716 = vstv %s303
          %v717 = vmul.f32 %v716, %v714
          %v718 = vmul.f32 %v716, %v715
          %v719 = vadd.f32 %v701, %v717
          %v720 = vadd.f32 %v702, %v718
          %721 = vrot.lane.b32.xlu0 %v446, 94
          %v722 = vpop.permute.xlu0 %721
          %723 = vrot.lane.b32.xlu0 %v442, 94
          %v724 = vpop.permute.xlu0 %723
          %725 = vrot.lane.b32.xlu0 %v447, 94
          %v726 = vpop.permute.xlu0 %725
          %vm727 = vcmask 769024
          %v728 = vsel %vm727, %v722, %v724
          %v729 = vsel %vm727, %v724, %v726
          %v732 = vsel %vm424, %v728, 0.0
          %v733 = vsel %vm424, %v729, 0.0
          %v734 = vstv %s310
          %v735 = vmul.f32 %v734, %v732
          %v736 = vmul.f32 %v734, %v733
          %v737 = vadd.f32 %v719, %v735
          %v738 = vadd.f32 %v720, %v736
          %739 = vrot.lane.b32.xlu0 %v446, 78
          %v740 = vpop.permute.xlu0 %739
          %741 = vrot.lane.b32.xlu0 %v442, 78
          %v742 = vpop.permute.xlu0 %741
          %743 = vrot.lane.b32.xlu0 %v447, 78
          %v744 = vpop.permute.xlu0 %743
          %vm745 = vcmask 637952
          %v746 = vsel %vm745, %v740, %v742
          %v747 = vsel %vm745, %v742, %v744
          %v750 = vsel %vm424, %v746, 0.0
          %v751 = vsel %vm424, %v747, 0.0
          %v752 = vstv %s317
          %v753 = vmul.f32 %v752, %v750
          %v754 = vmul.f32 %v752, %v751
          %v755 = vadd.f32 %v737, %v753
          %v756 = vadd.f32 %v738, %v754
          %757 = vrot.lane.b32.xlu0 %v446, 62
          %v758 = vpop.permute.xlu0 %757
          %759 = vrot.lane.b32.xlu0 %v442, 62
          %v760 = vpop.permute.xlu0 %759
          %761 = vrot.lane.b32.xlu0 %v447, 62
          %v762 = vpop.permute.xlu0 %761
          %vm763 = vcmask 506880
          %v764 = vsel %vm763, %v758, %v760
          %v765 = vsel %vm763, %v760, %v762
          %v768 = vsel %vm424, %v764, 0.0
          %v769 = vsel %vm424, %v765, 0.0
          %v770 = vstv %s324
          %v771 = vmul.f32 %v770, %v768
          %v772 = vmul.f32 %v770, %v769
          %v773 = vadd.f32 %v755, %v771
          %v774 = vadd.f32 %v756, %v772
          %775 = vrot.lane.b32.xlu0 %v446, 46
          %v776 = vpop.permute.xlu0 %775
          %777 = vrot.lane.b32.xlu0 %v442, 46
          %v778 = vpop.permute.xlu0 %777
          %779 = vrot.lane.b32.xlu0 %v447, 46
          %v780 = vpop.permute.xlu0 %779
          %vm781 = vcmask 375808
          %v782 = vsel %vm781, %v776, %v778
          %v783 = vsel %vm781, %v778, %v780
          %v786 = vsel %vm424, %v782, 0.0
          %v787 = vsel %vm424, %v783, 0.0
          %v788 = vstv %s331
          %v789 = vmul.f32 %v788, %v786
          %v790 = vmul.f32 %v788, %v787
          %v791 = vadd.f32 %v773, %v789
          %v792 = vadd.f32 %v774, %v790
          %793 = vrot.lane.b32.xlu0 %v446, 30
          %v794 = vpop.permute.xlu0 %793
          %795 = vrot.lane.b32.xlu0 %v442, 30
          %v796 = vpop.permute.xlu0 %795
          %797 = vrot.lane.b32.xlu0 %v447, 30
          %v798 = vpop.permute.xlu0 %797
          %vm799 = vcmask 244736
          %v800 = vsel %vm799, %v794, %v796
          %v801 = vsel %vm799, %v796, %v798
          %v804 = vsel %vm424, %v800, 0.0
          %v805 = vsel %vm424, %v801, 0.0
          %v806 = vstv %s338
          %v807 = vmul.f32 %v806, %v804
          %v808 = vmul.f32 %v806, %v805
          %v809 = vadd.f32 %v791, %v807
          %v810 = vadd.f32 %v792, %v808
          %v811 = vstv %s297
          %v812 = vmul.f32 %v811, %v446
          %v813 = vmul.f32 %v811, %v442
          %v814 = vmul.f32 %v811, %v447
          %818 = vrot.lane.b32.xlu0 %v812, 125
          %v819 = vpop.permute.xlu0 %818
          %820 = vrot.lane.b32.xlu0 %v813, 125
          %v821 = vpop.permute.xlu0 %820
          %822 = vrot.lane.b32.xlu0 %v814, 125
          %v823 = vpop.permute.xlu0 %822
          %vm824 = vcmask 1022976
          %v825 = vsel %vm824, %v819, %v821
          %v826 = vsel %vm824, %v821, %v823
          %v829 = vadd.f32 %v809, %v825
          %v830 = vadd.f32 %v810, %v826
          %v831 = vstv %s304
          %v832 = vmul.f32 %v831, %v446
          %v833 = vmul.f32 %v831, %v442
          %v834 = vmul.f32 %v831, %v447
          %838 = vrot.lane.b32.xlu0 %v832, 109
          %v839 = vpop.permute.xlu0 %838
          %840 = vrot.lane.b32.xlu0 %v833, 109
          %v841 = vpop.permute.xlu0 %840
          %842 = vrot.lane.b32.xlu0 %v834, 109
          %v843 = vpop.permute.xlu0 %842
          %vm844 = vcmask 891904
          %v845 = vsel %vm844, %v839, %v841
          %v846 = vsel %vm844, %v841, %v843
          %v849 = vadd.f32 %v829, %v845
          %v850 = vadd.f32 %v830, %v846
          %v851 = vstv %s311
          %v852 = vmul.f32 %v851, %v446
          %v853 = vmul.f32 %v851, %v442
          %v854 = vmul.f32 %v851, %v447
          %858 = vrot.lane.b32.xlu0 %v852, 93
          %v859 = vpop.permute.xlu0 %858
          %860 = vrot.lane.b32.xlu0 %v853, 93
          %v861 = vpop.permute.xlu0 %860
          %862 = vrot.lane.b32.xlu0 %v854, 93
          %v863 = vpop.permute.xlu0 %862
          %vm864 = vcmask 760832
          %v865 = vsel %vm864, %v859, %v861
          %v866 = vsel %vm864, %v861, %v863
          %v869 = vadd.f32 %v849, %v865
          %v870 = vadd.f32 %v850, %v866
          %v871 = vstv %s318
          %v872 = vmul.f32 %v871, %v446
          %v873 = vmul.f32 %v871, %v442
          %v874 = vmul.f32 %v871, %v447
          %878 = vrot.lane.b32.xlu0 %v872, 77
          %v879 = vpop.permute.xlu0 %878
          %880 = vrot.lane.b32.xlu0 %v873, 77
          %v881 = vpop.permute.xlu0 %880
          %882 = vrot.lane.b32.xlu0 %v874, 77
          %v883 = vpop.permute.xlu0 %882
          %vm884 = vcmask 629760
          %v885 = vsel %vm884, %v879, %v881
          %v886 = vsel %vm884, %v881, %v883
          %v889 = vadd.f32 %v869, %v885
          %v890 = vadd.f32 %v870, %v886
          %v891 = vstv %s325
          %v892 = vmul.f32 %v891, %v446
          %v893 = vmul.f32 %v891, %v442
          %v894 = vmul.f32 %v891, %v447
          %898 = vrot.lane.b32.xlu0 %v892, 61
          %v899 = vpop.permute.xlu0 %898
          %900 = vrot.lane.b32.xlu0 %v893, 61
          %v901 = vpop.permute.xlu0 %900
          %902 = vrot.lane.b32.xlu0 %v894, 61
          %v903 = vpop.permute.xlu0 %902
          %vm904 = vcmask 498688
          %v905 = vsel %vm904, %v899, %v901
          %v906 = vsel %vm904, %v901, %v903
          %v909 = vadd.f32 %v889, %v905
          %v910 = vadd.f32 %v890, %v906
          %v911 = vstv %s332
          %v912 = vmul.f32 %v911, %v446
          %v913 = vmul.f32 %v911, %v442
          %v914 = vmul.f32 %v911, %v447
          %918 = vrot.lane.b32.xlu0 %v912, 45
          %v919 = vpop.permute.xlu0 %918
          %920 = vrot.lane.b32.xlu0 %v913, 45
          %v921 = vpop.permute.xlu0 %920
          %922 = vrot.lane.b32.xlu0 %v914, 45
          %v923 = vpop.permute.xlu0 %922
          %vm924 = vcmask 367616
          %v925 = vsel %vm924, %v919, %v921
          %v926 = vsel %vm924, %v921, %v923
          %v929 = vadd.f32 %v909, %v925
          %v930 = vadd.f32 %v910, %v926
          %v931 = vstv %s339
          %v932 = vmul.f32 %v931, %v446
          %v933 = vmul.f32 %v931, %v442
          %v934 = vmul.f32 %v931, %v447
          %938 = vrot.lane.b32.xlu0 %v932, 29
          %v939 = vpop.permute.xlu0 %938
          %940 = vrot.lane.b32.xlu0 %v933, 29
          %v941 = vpop.permute.xlu0 %940
          %942 = vrot.lane.b32.xlu0 %v934, 29
          %v943 = vpop.permute.xlu0 %942
          %vm944 = vcmask 236544
          %v945 = vsel %vm944, %v939, %v941
          %v946 = vsel %vm944, %v941, %v943
          %v949 = vadd.f32 %v929, %v945
          %v950 = vadd.f32 %v930, %v946
          %951 = vrot.lane.b32.xlu0 %v446, 124
          %v952 = vpop.permute.xlu0 %951
          %953 = vrot.lane.b32.xlu0 %v442, 124
          %v954 = vpop.permute.xlu0 %953
          %955 = vrot.lane.b32.xlu0 %v447, 124
          %v956 = vpop.permute.xlu0 %955
          %vm957 = vcmask 1014784
          %v958 = vsel %vm957, %v952, %v954
          %v959 = vsel %vm957, %v954, %v956
          %v962 = vsel %vm425, %v958, 0.0
          %v963 = vsel %vm425, %v959, 0.0
          %v964 = vstv %s298
          %v965 = vmul.f32 %v964, %v962
          %v966 = vmul.f32 %v964, %v963
          %v967 = vadd.f32 %v949, %v965
          %v968 = vadd.f32 %v950, %v966
          %969 = vrot.lane.b32.xlu0 %v446, 108
          %v970 = vpop.permute.xlu0 %969
          %971 = vrot.lane.b32.xlu0 %v442, 108
          %v972 = vpop.permute.xlu0 %971
          %973 = vrot.lane.b32.xlu0 %v447, 108
          %v974 = vpop.permute.xlu0 %973
          %vm975 = vcmask 883712
          %v976 = vsel %vm975, %v970, %v972
          %v977 = vsel %vm975, %v972, %v974
          %v980 = vsel %vm425, %v976, 0.0
          %v981 = vsel %vm425, %v977, 0.0
          %v982 = vstv %s305
          %v983 = vmul.f32 %v982, %v980
          %v984 = vmul.f32 %v982, %v981
          %v985 = vadd.f32 %v967, %v983
          %v986 = vadd.f32 %v968, %v984
          %987 = vrot.lane.b32.xlu0 %v446, 92
          %v988 = vpop.permute.xlu0 %987
          %989 = vrot.lane.b32.xlu0 %v442, 92
          %v990 = vpop.permute.xlu0 %989
          %991 = vrot.lane.b32.xlu0 %v447, 92
          %v992 = vpop.permute.xlu0 %991
          %vm993 = vcmask 752640
          %v994 = vsel %vm993, %v988, %v990
          %v995 = vsel %vm993, %v990, %v992
          %v998 = vsel %vm425, %v994, 0.0
          %v999 = vsel %vm425, %v995, 0.0
          %v1000 = vstv %s312
          %v1001 = vmul.f32 %v1000, %v998
          %v1002 = vmul.f32 %v1000, %v999
          %v1003 = vadd.f32 %v985, %v1001
          %v1004 = vadd.f32 %v986, %v1002
          %1005 = vrot.lane.b32.xlu0 %v446, 76
          %v1006 = vpop.permute.xlu0 %1005
          %1007 = vrot.lane.b32.xlu0 %v442, 76
          %v1008 = vpop.permute.xlu0 %1007
          %1009 = vrot.lane.b32.xlu0 %v447, 76
          %v1010 = vpop.permute.xlu0 %1009
          %vm1011 = vcmask 621568
          %v1012 = vsel %vm1011, %v1006, %v1008
          %v1013 = vsel %vm1011, %v1008, %v1010
          %v1016 = vsel %vm425, %v1012, 0.0
          %v1017 = vsel %vm425, %v1013, 0.0
          %v1018 = vstv %s319
          %v1019 = vmul.f32 %v1018, %v1016
          %v1020 = vmul.f32 %v1018, %v1017
          %v1021 = vadd.f32 %v1003, %v1019
          %v1022 = vadd.f32 %v1004, %v1020
          %1023 = vrot.lane.b32.xlu0 %v446, 60
          %v1024 = vpop.permute.xlu0 %1023
          %1025 = vrot.lane.b32.xlu0 %v442, 60
          %v1026 = vpop.permute.xlu0 %1025
          %1027 = vrot.lane.b32.xlu0 %v447, 60
          %v1028 = vpop.permute.xlu0 %1027
          %vm1029 = vcmask 490496
          %v1030 = vsel %vm1029, %v1024, %v1026
          %v1031 = vsel %vm1029, %v1026, %v1028
          %v1034 = vsel %vm425, %v1030, 0.0
          %v1035 = vsel %vm425, %v1031, 0.0
          %v1036 = vstv %s326
          %v1037 = vmul.f32 %v1036, %v1034
          %v1038 = vmul.f32 %v1036, %v1035
          %v1039 = vadd.f32 %v1021, %v1037
          %v1040 = vadd.f32 %v1022, %v1038
          %1041 = vrot.lane.b32.xlu0 %v446, 44
          %v1042 = vpop.permute.xlu0 %1041
          %1043 = vrot.lane.b32.xlu0 %v442, 44
          %v1044 = vpop.permute.xlu0 %1043
          %1045 = vrot.lane.b32.xlu0 %v447, 44
          %v1046 = vpop.permute.xlu0 %1045
          %vm1047 = vcmask 359424
          %v1048 = vsel %vm1047, %v1042, %v1044
          %v1049 = vsel %vm1047, %v1044, %v1046
          %v1052 = vsel %vm425, %v1048, 0.0
          %v1053 = vsel %vm425, %v1049, 0.0
          %v1054 = vstv %s333
          %v1055 = vmul.f32 %v1054, %v1052
          %v1056 = vmul.f32 %v1054, %v1053
          %v1057 = vadd.f32 %v1039, %v1055
          %v1058 = vadd.f32 %v1040, %v1056
          %1059 = vrot.lane.b32.xlu0 %v446, 28
          %v1060 = vpop.permute.xlu0 %1059
          %1061 = vrot.lane.b32.xlu0 %v442, 28
          %v1062 = vpop.permute.xlu0 %1061
          %1063 = vrot.lane.b32.xlu0 %v447, 28
          %v1064 = vpop.permute.xlu0 %1063
          %vm1065 = vcmask 228352
          %v1066 = vsel %vm1065, %v1060, %v1062
          %v1067 = vsel %vm1065, %v1062, %v1064
          %v1070 = vsel %vm425, %v1066, 0.0
          %v1071 = vsel %vm425, %v1067, 0.0
          %v1072 = vstv %s340
          %v1073 = vmul.f32 %v1072, %v1070
          %v1074 = vmul.f32 %v1072, %v1071
          %v1075 = vadd.f32 %v1057, %v1073
          %v1076 = vadd.f32 %v1058, %v1074
          %1077 = vrot.lane.b32.xlu0 %v446, 123
          %v1078 = vpop.permute.xlu0 %1077
          %1079 = vrot.lane.b32.xlu0 %v442, 123
          %v1080 = vpop.permute.xlu0 %1079
          %1081 = vrot.lane.b32.xlu0 %v447, 123
          %v1082 = vpop.permute.xlu0 %1081
          %vm1083 = vcmask 1006592
          %v1084 = vsel %vm1083, %v1078, %v1080
          %v1085 = vsel %vm1083, %v1080, %v1082
          %v1088 = vsel %vm426, %v1084, 0.0
          %v1089 = vsel %vm426, %v1085, 0.0
          %v1090 = vstv %s299
          %v1091 = vmul.f32 %v1090, %v1088
          %v1092 = vmul.f32 %v1090, %v1089
          %v1093 = vadd.f32 %v1075, %v1091
          %v1094 = vadd.f32 %v1076, %v1092
          %1095 = vrot.lane.b32.xlu0 %v446, 107
          %v1096 = vpop.permute.xlu0 %1095
          %1097 = vrot.lane.b32.xlu0 %v442, 107
          %v1098 = vpop.permute.xlu0 %1097
          %1099 = vrot.lane.b32.xlu0 %v447, 107
          %v1100 = vpop.permute.xlu0 %1099
          %vm1101 = vcmask 875520
          %v1102 = vsel %vm1101, %v1096, %v1098
          %v1103 = vsel %vm1101, %v1098, %v1100
          %v1106 = vsel %vm426, %v1102, 0.0
          %v1107 = vsel %vm426, %v1103, 0.0
          %v1108 = vstv %s306
          %v1109 = vmul.f32 %v1108, %v1106
          %v1110 = vmul.f32 %v1108, %v1107
          %v1111 = vadd.f32 %v1093, %v1109
          %v1112 = vadd.f32 %v1094, %v1110
          %1113 = vrot.lane.b32.xlu0 %v446, 91
          %v1114 = vpop.permute.xlu0 %1113
          %1115 = vrot.lane.b32.xlu0 %v442, 91
          %v1116 = vpop.permute.xlu0 %1115
          %1117 = vrot.lane.b32.xlu0 %v447, 91
          %v1118 = vpop.permute.xlu0 %1117
          %vm1119 = vcmask 744448
          %v1120 = vsel %vm1119, %v1114, %v1116
          %v1121 = vsel %vm1119, %v1116, %v1118
          %v1124 = vsel %vm426, %v1120, 0.0
          %v1125 = vsel %vm426, %v1121, 0.0
          %v1126 = vstv %s313
          %v1127 = vmul.f32 %v1126, %v1124
          %v1128 = vmul.f32 %v1126, %v1125
          %v1129 = vadd.f32 %v1111, %v1127
          %v1130 = vadd.f32 %v1112, %v1128
          %1131 = vrot.lane.b32.xlu0 %v446, 75
          %v1132 = vpop.permute.xlu0 %1131
          %1133 = vrot.lane.b32.xlu0 %v442, 75
          %v1134 = vpop.permute.xlu0 %1133
          %1135 = vrot.lane.b32.xlu0 %v447, 75
          %v1136 = vpop.permute.xlu0 %1135
          %vm1137 = vcmask 613376
          %v1138 = vsel %vm1137, %v1132, %v1134
          %v1139 = vsel %vm1137, %v1134, %v1136
          %v1142 = vsel %vm426, %v1138, 0.0
          %v1143 = vsel %vm426, %v1139, 0.0
          %v1144 = vstv %s320
          %v1145 = vmul.f32 %v1144, %v1142
          %v1146 = vmul.f32 %v1144, %v1143
          %v1147 = vadd.f32 %v1129, %v1145
          %v1148 = vadd.f32 %v1130, %v1146
          %1149 = vrot.lane.b32.xlu0 %v446, 59
          %v1150 = vpop.permute.xlu0 %1149
          %1151 = vrot.lane.b32.xlu0 %v442, 59
          %v1152 = vpop.permute.xlu0 %1151
          %1153 = vrot.lane.b32.xlu0 %v447, 59
          %v1154 = vpop.permute.xlu0 %1153
          %vm1155 = vcmask 482304
          %v1156 = vsel %vm1155, %v1150, %v1152
          %v1157 = vsel %vm1155, %v1152, %v1154
          %v1160 = vsel %vm426, %v1156, 0.0
          %v1161 = vsel %vm426, %v1157, 0.0
          %v1162 = vstv %s327
          %v1163 = vmul.f32 %v1162, %v1160
          %v1164 = vmul.f32 %v1162, %v1161
          %v1165 = vadd.f32 %v1147, %v1163
          %v1166 = vadd.f32 %v1148, %v1164
          %1167 = vrot.lane.b32.xlu0 %v446, 43
          %v1168 = vpop.permute.xlu0 %1167
          %1169 = vrot.lane.b32.xlu0 %v442, 43
          %v1170 = vpop.permute.xlu0 %1169
          %1171 = vrot.lane.b32.xlu0 %v447, 43
          %v1172 = vpop.permute.xlu0 %1171
          %vm1173 = vcmask 351232
          %v1174 = vsel %vm1173, %v1168, %v1170
          %v1175 = vsel %vm1173, %v1170, %v1172
          %v1178 = vsel %vm426, %v1174, 0.0
          %v1179 = vsel %vm426, %v1175, 0.0
          %v1180 = vstv %s334
          %v1181 = vmul.f32 %v1180, %v1178
          %v1182 = vmul.f32 %v1180, %v1179
          %v1183 = vadd.f32 %v1165, %v1181
          %v1184 = vadd.f32 %v1166, %v1182
          %1185 = vrot.lane.b32.xlu0 %v446, 27
          %v1186 = vpop.permute.xlu0 %1185
          %1187 = vrot.lane.b32.xlu0 %v442, 27
          %v1188 = vpop.permute.xlu0 %1187
          %1189 = vrot.lane.b32.xlu0 %v447, 27
          %v1190 = vpop.permute.xlu0 %1189
          %vm1191 = vcmask 220160
          %v1192 = vsel %vm1191, %v1186, %v1188
          %v1193 = vsel %vm1191, %v1188, %v1190
          %v1196 = vsel %vm426, %v1192, 0.0
          %v1197 = vsel %vm426, %v1193, 0.0
          %v1198 = vstv %s341
          %v1199 = vmul.f32 %v1198, %v1196
          %v1200 = vmul.f32 %v1198, %v1197
          %v1201 = vadd.f32 %v1183, %v1199
          %v1202 = vadd.f32 %v1184, %v1200
          %1203 = vrot.lane.b32.xlu0 %v446, 122
          %v1204 = vpop.permute.xlu0 %1203
          %1205 = vrot.lane.b32.xlu0 %v442, 122
          %v1206 = vpop.permute.xlu0 %1205
          %1207 = vrot.lane.b32.xlu0 %v447, 122
          %v1208 = vpop.permute.xlu0 %1207
          %vm1209 = vcmask 998400
          %v1210 = vsel %vm1209, %v1204, %v1206
          %v1211 = vsel %vm1209, %v1206, %v1208
          %v1214 = vsel %vm427, %v1210, 0.0
          %v1215 = vsel %vm427, %v1211, 0.0
          %v1216 = vstv %s300
          %v1217 = vmul.f32 %v1216, %v1214
          %v1218 = vmul.f32 %v1216, %v1215
          %v1219 = vadd.f32 %v1201, %v1217
          %v1220 = vadd.f32 %v1202, %v1218
          %1221 = vrot.lane.b32.xlu0 %v446, 106
          %v1222 = vpop.permute.xlu0 %1221
          %1223 = vrot.lane.b32.xlu0 %v442, 106
          %v1224 = vpop.permute.xlu0 %1223
          %1225 = vrot.lane.b32.xlu0 %v447, 106
          %v1226 = vpop.permute.xlu0 %1225
          %vm1227 = vcmask 867328
          %v1228 = vsel %vm1227, %v1222, %v1224
          %v1229 = vsel %vm1227, %v1224, %v1226
          %v1232 = vsel %vm427, %v1228, 0.0
          %v1233 = vsel %vm427, %v1229, 0.0
          %v1234 = vstv %s307
          %v1235 = vmul.f32 %v1234, %v1232
          %v1236 = vmul.f32 %v1234, %v1233
          %v1237 = vadd.f32 %v1219, %v1235
          %v1238 = vadd.f32 %v1220, %v1236
          %1239 = vrot.lane.b32.xlu0 %v446, 90
          %v1240 = vpop.permute.xlu0 %1239
          %1241 = vrot.lane.b32.xlu0 %v442, 90
          %v1242 = vpop.permute.xlu0 %1241
          %1243 = vrot.lane.b32.xlu0 %v447, 90
          %v1244 = vpop.permute.xlu0 %1243
          %vm1245 = vcmask 736256
          %v1246 = vsel %vm1245, %v1240, %v1242
          %v1247 = vsel %vm1245, %v1242, %v1244
          %v1250 = vsel %vm427, %v1246, 0.0
          %v1251 = vsel %vm427, %v1247, 0.0
          %v1252 = vstv %s314
          %v1253 = vmul.f32 %v1252, %v1250
          %v1254 = vmul.f32 %v1252, %v1251
          %v1255 = vadd.f32 %v1237, %v1253
          %v1256 = vadd.f32 %v1238, %v1254
          %1257 = vrot.lane.b32.xlu0 %v446, 74
          %v1258 = vpop.permute.xlu0 %1257
          %1259 = vrot.lane.b32.xlu0 %v442, 74
          %v1260 = vpop.permute.xlu0 %1259
          %1261 = vrot.lane.b32.xlu0 %v447, 74
          %v1262 = vpop.permute.xlu0 %1261
          %vm1263 = vcmask 605184
          %v1264 = vsel %vm1263, %v1258, %v1260
          %v1265 = vsel %vm1263, %v1260, %v1262
          %v1268 = vsel %vm427, %v1264, 0.0
          %v1269 = vsel %vm427, %v1265, 0.0
          %v1270 = vstv %s321
          %v1271 = vmul.f32 %v1270, %v1268
          %v1272 = vmul.f32 %v1270, %v1269
          %v1273 = vadd.f32 %v1255, %v1271
          %v1274 = vadd.f32 %v1256, %v1272
          %1275 = vrot.lane.b32.xlu0 %v446, 58
          %v1276 = vpop.permute.xlu0 %1275
          %1277 = vrot.lane.b32.xlu0 %v442, 58
          %v1278 = vpop.permute.xlu0 %1277
          %1279 = vrot.lane.b32.xlu0 %v447, 58
          %v1280 = vpop.permute.xlu0 %1279
          %vm1281 = vcmask 474112
          %v1282 = vsel %vm1281, %v1276, %v1278
          %v1283 = vsel %vm1281, %v1278, %v1280
          %v1286 = vsel %vm427, %v1282, 0.0
          %v1287 = vsel %vm427, %v1283, 0.0
          %v1288 = vstv %s328
          %v1289 = vmul.f32 %v1288, %v1286
          %v1290 = vmul.f32 %v1288, %v1287
          %v1291 = vadd.f32 %v1273, %v1289
          %v1292 = vadd.f32 %v1274, %v1290
          %1293 = vrot.lane.b32.xlu0 %v446, 42
          %v1294 = vpop.permute.xlu0 %1293
          %1295 = vrot.lane.b32.xlu0 %v442, 42
          %v1296 = vpop.permute.xlu0 %1295
          %1297 = vrot.lane.b32.xlu0 %v447, 42
          %v1298 = vpop.permute.xlu0 %1297
          %vm1299 = vcmask 343040
          %v1300 = vsel %vm1299, %v1294, %v1296
          %v1301 = vsel %vm1299, %v1296, %v1298
          %v1304 = vsel %vm427, %v1300, 0.0
          %v1305 = vsel %vm427, %v1301, 0.0
          %v1306 = vstv %s335
          %v1307 = vmul.f32 %v1306, %v1304
          %v1308 = vmul.f32 %v1306, %v1305
          %v1309 = vadd.f32 %v1291, %v1307
          %v1310 = vadd.f32 %v1292, %v1308
          %1311 = vrot.lane.b32.xlu0 %v446, 26
          %v1312 = vpop.permute.xlu0 %1311
          %1313 = vrot.lane.b32.xlu0 %v442, 26
          %v1314 = vpop.permute.xlu0 %1313
          %1315 = vrot.lane.b32.xlu0 %v447, 26
          %v1316 = vpop.permute.xlu0 %1315
          %vm1317 = vcmask 211968
          %v1318 = vsel %vm1317, %v1312, %v1314
          %v1319 = vsel %vm1317, %v1314, %v1316
          %v1322 = vsel %vm427, %v1318, 0.0
          %v1323 = vsel %vm427, %v1319, 0.0
          %v1324 = vstv %s342
          %v1325 = vmul.f32 %v1324, %v1322
          %v1326 = vmul.f32 %v1324, %v1323
          %v1327 = vadd.f32 %v1309, %v1325
          %v1328 = vadd.f32 %v1310, %v1326
          %v1330 = vlaneseq
          %v1331 = vshrl.u32 %v1330, 7
          %v1332 = vsub.s32 0, %v1331
          %v1333 = vrot.slane %v293, %v1332
          %v1334 = vlaneseq
          %v1335 = vshrl.u32 %v1334, 7
          %v1336 = vsub.s32 1, %v1335
          %v1337 = vrot.slane %v293, %v1336
          %1338 = vrot.lane.b32.xlu0 %v1333, 51
          %v1339 = vpop.permute.xlu0 %1338
          %1340 = vrot.lane.b32.xlu0 %v1337, 51
          %v1341 = vpop.permute.xlu0 %1340
          %v1342 = vsel %vm441, %v1339, %v1341
          %v1346 = vsel %vm441, 0.0, %v1339
          %v1347 = vsel %vm441, %v1341, 0.0
          %v1348 = vsel %vm422, %v1346, 0.0
          %v1349 = vsel %vm422, %v1342, 0.0
          %v1350 = vstv %s343
          %v1351 = vmul.f32 %v1350, %v1348
          %v1352 = vmul.f32 %v1350, %v1349
          %v1353 = vadd.f32 %v1327, %v1351
          %v1354 = vadd.f32 %v1328, %v1352
          %1357 = vrot.lane.b32.xlu0 %v1346, 112
          %v1358 = vpop.permute.xlu0 %1357
          %1359 = vrot.lane.b32.xlu0 %v1342, 112
          %v1360 = vpop.permute.xlu0 %1359
          %1361 = vrot.lane.b32.xlu0 %v1347, 112
          %v1362 = vpop.permute.xlu0 %1361
          %v1363 = vsel %vm420, %v1358, %v1360
          %v1364 = vsel %vm420, %v1360, %v1362
          %v1367 = vsel %vm422, %v1363, 0.0
          %v1368 = vsel %vm422, %v1364, 0.0
          %v1369 = vstv %s350
          %v1370 = vmul.f32 %v1369, %v1367
          %v1371 = vmul.f32 %v1369, %v1368
          %v1372 = vadd.f32 %v1353, %v1370
          %v1373 = vadd.f32 %v1354, %v1371
          %1374 = vrot.lane.b32.xlu0 %v1346, 96
          %v1375 = vpop.permute.xlu0 %1374
          %1376 = vrot.lane.b32.xlu0 %v1342, 96
          %v1377 = vpop.permute.xlu0 %1376
          %1378 = vrot.lane.b32.xlu0 %v1347, 96
          %v1379 = vpop.permute.xlu0 %1378
          %v1380 = vsel %vm418, %v1375, %v1377
          %v1381 = vsel %vm418, %v1377, %v1379
          %v1384 = vsel %vm422, %v1380, 0.0
          %v1385 = vsel %vm422, %v1381, 0.0
          %v1386 = vstv %s357
          %v1387 = vmul.f32 %v1386, %v1384
          %v1388 = vmul.f32 %v1386, %v1385
          %v1389 = vadd.f32 %v1372, %v1387
          %v1390 = vadd.f32 %v1373, %v1388
          %1391 = vrot.lane.b32.xlu0 %v1346, 80
          %v1392 = vpop.permute.xlu0 %1391
          %1393 = vrot.lane.b32.xlu0 %v1342, 80
          %v1394 = vpop.permute.xlu0 %1393
          %1395 = vrot.lane.b32.xlu0 %v1347, 80
          %v1396 = vpop.permute.xlu0 %1395
          %v1397 = vsel %vm416, %v1392, %v1394
          %v1398 = vsel %vm416, %v1394, %v1396
          %v1401 = vsel %vm422, %v1397, 0.0
          %v1402 = vsel %vm422, %v1398, 0.0
          %v1403 = vstv %s364
          %v1404 = vmul.f32 %v1403, %v1401
          %v1405 = vmul.f32 %v1403, %v1402
          %v1406 = vadd.f32 %v1389, %v1404
          %v1407 = vadd.f32 %v1390, %v1405
          %1408 = vrot.lane.b32.xlu0 %v1346, 64
          %v1409 = vpop.permute.xlu0 %1408
          %1410 = vrot.lane.b32.xlu0 %v1342, 64
          %v1411 = vpop.permute.xlu0 %1410
          %1412 = vrot.lane.b32.xlu0 %v1347, 64
          %v1413 = vpop.permute.xlu0 %1412
          %v1414 = vsel %vm414, %v1409, %v1411
          %v1415 = vsel %vm414, %v1411, %v1413
          %v1418 = vsel %vm422, %v1414, 0.0
          %v1419 = vsel %vm422, %v1415, 0.0
          %v1420 = vstv %s371
          %v1421 = vmul.f32 %v1420, %v1418
          %v1422 = vmul.f32 %v1420, %v1419
          %v1423 = vadd.f32 %v1406, %v1421
          %v1424 = vadd.f32 %v1407, %v1422
          %1425 = vrot.lane.b32.xlu0 %v1346, 48
          %v1426 = vpop.permute.xlu0 %1425
          %1427 = vrot.lane.b32.xlu0 %v1342, 48
          %v1428 = vpop.permute.xlu0 %1427
          %1429 = vrot.lane.b32.xlu0 %v1347, 48
          %v1430 = vpop.permute.xlu0 %1429
          %v1431 = vsel %vm412, %v1426, %v1428
          %v1432 = vsel %vm412, %v1428, %v1430
          %v1435 = vsel %vm422, %v1431, 0.0
          %v1436 = vsel %vm422, %v1432, 0.0
          %v1437 = vstv %s378
          %v1438 = vmul.f32 %v1437, %v1435
          %v1439 = vmul.f32 %v1437, %v1436
          %v1440 = vadd.f32 %v1423, %v1438
          %v1441 = vadd.f32 %v1424, %v1439
          %1442 = vrot.lane.b32.xlu0 %v1346, 32
          %v1443 = vpop.permute.xlu0 %1442
          %1444 = vrot.lane.b32.xlu0 %v1342, 32
          %v1445 = vpop.permute.xlu0 %1444
          %1446 = vrot.lane.b32.xlu0 %v1347, 32
          %v1447 = vpop.permute.xlu0 %1446
          %v1448 = vsel %vm410, %v1443, %v1445
          %v1449 = vsel %vm410, %v1445, %v1447
          %v1452 = vsel %vm422, %v1448, 0.0
          %v1453 = vsel %vm422, %v1449, 0.0
          %v1454 = vstv %s385
          %v1455 = vmul.f32 %v1454, %v1452
          %v1456 = vmul.f32 %v1454, %v1453
          %v1457 = vadd.f32 %v1440, %v1455
          %v1458 = vadd.f32 %v1441, %v1456
          %1459 = vrot.lane.b32.xlu0 %v1346, 127
          %v1460 = vpop.permute.xlu0 %1459
          %1461 = vrot.lane.b32.xlu0 %v1342, 127
          %v1462 = vpop.permute.xlu0 %1461
          %1463 = vrot.lane.b32.xlu0 %v1347, 127
          %v1464 = vpop.permute.xlu0 %1463
          %v1465 = vsel %vm565, %v1460, %v1462
          %v1466 = vsel %vm565, %v1462, %v1464
          %v1469 = vsel %vm423, %v1465, 0.0
          %v1470 = vsel %vm423, %v1466, 0.0
          %v1471 = vstv %s344
          %v1472 = vmul.f32 %v1471, %v1469
          %v1473 = vmul.f32 %v1471, %v1470
          %v1474 = vadd.f32 %v1457, %v1472
          %v1475 = vadd.f32 %v1458, %v1473
          %1476 = vrot.lane.b32.xlu0 %v1346, 111
          %v1477 = vpop.permute.xlu0 %1476
          %1478 = vrot.lane.b32.xlu0 %v1342, 111
          %v1479 = vpop.permute.xlu0 %1478
          %1480 = vrot.lane.b32.xlu0 %v1347, 111
          %v1481 = vpop.permute.xlu0 %1480
          %v1482 = vsel %vm583, %v1477, %v1479
          %v1483 = vsel %vm583, %v1479, %v1481
          %v1486 = vsel %vm423, %v1482, 0.0
          %v1487 = vsel %vm423, %v1483, 0.0
          %v1488 = vstv %s351
          %v1489 = vmul.f32 %v1488, %v1486
          %v1490 = vmul.f32 %v1488, %v1487
          %v1491 = vadd.f32 %v1474, %v1489
          %v1492 = vadd.f32 %v1475, %v1490
          %1493 = vrot.lane.b32.xlu0 %v1346, 95
          %v1494 = vpop.permute.xlu0 %1493
          %1495 = vrot.lane.b32.xlu0 %v1342, 95
          %v1496 = vpop.permute.xlu0 %1495
          %1497 = vrot.lane.b32.xlu0 %v1347, 95
          %v1498 = vpop.permute.xlu0 %1497
          %v1499 = vsel %vm601, %v1494, %v1496
          %v1500 = vsel %vm601, %v1496, %v1498
          %v1503 = vsel %vm423, %v1499, 0.0
          %v1504 = vsel %vm423, %v1500, 0.0
          %v1505 = vstv %s358
          %v1506 = vmul.f32 %v1505, %v1503
          %v1507 = vmul.f32 %v1505, %v1504
          %v1508 = vadd.f32 %v1491, %v1506
          %v1509 = vadd.f32 %v1492, %v1507
          %1510 = vrot.lane.b32.xlu0 %v1346, 79
          %v1511 = vpop.permute.xlu0 %1510
          %1512 = vrot.lane.b32.xlu0 %v1342, 79
          %v1513 = vpop.permute.xlu0 %1512
          %1514 = vrot.lane.b32.xlu0 %v1347, 79
          %v1515 = vpop.permute.xlu0 %1514
          %v1516 = vsel %vm619, %v1511, %v1513
          %v1517 = vsel %vm619, %v1513, %v1515
          %v1520 = vsel %vm423, %v1516, 0.0
          %v1521 = vsel %vm423, %v1517, 0.0
          %v1522 = vstv %s365
          %v1523 = vmul.f32 %v1522, %v1520
          %v1524 = vmul.f32 %v1522, %v1521
          %v1525 = vadd.f32 %v1508, %v1523
          %v1526 = vadd.f32 %v1509, %v1524
          %1527 = vrot.lane.b32.xlu0 %v1346, 63
          %v1528 = vpop.permute.xlu0 %1527
          %1529 = vrot.lane.b32.xlu0 %v1342, 63
          %v1530 = vpop.permute.xlu0 %1529
          %1531 = vrot.lane.b32.xlu0 %v1347, 63
          %v1532 = vpop.permute.xlu0 %1531
          %v1533 = vsel %vm637, %v1528, %v1530
          %v1534 = vsel %vm637, %v1530, %v1532
          %v1537 = vsel %vm423, %v1533, 0.0
          %v1538 = vsel %vm423, %v1534, 0.0
          %v1539 = vstv %s372
          %v1540 = vmul.f32 %v1539, %v1537
          %v1541 = vmul.f32 %v1539, %v1538
          %v1542 = vadd.f32 %v1525, %v1540
          %v1543 = vadd.f32 %v1526, %v1541
          %1544 = vrot.lane.b32.xlu0 %v1346, 47
          %v1545 = vpop.permute.xlu0 %1544
          %1546 = vrot.lane.b32.xlu0 %v1342, 47
          %v1547 = vpop.permute.xlu0 %1546
          %1548 = vrot.lane.b32.xlu0 %v1347, 47
          %v1549 = vpop.permute.xlu0 %1548
          %v1550 = vsel %vm655, %v1545, %v1547
          %v1551 = vsel %vm655, %v1547, %v1549
          %v1554 = vsel %vm423, %v1550, 0.0
          %v1555 = vsel %vm423, %v1551, 0.0
          %v1556 = vstv %s379
          %v1557 = vmul.f32 %v1556, %v1554
          %v1558 = vmul.f32 %v1556, %v1555
          %v1559 = vadd.f32 %v1542, %v1557
          %v1560 = vadd.f32 %v1543, %v1558
          %1561 = vrot.lane.b32.xlu0 %v1346, 31
          %v1562 = vpop.permute.xlu0 %1561
          %1563 = vrot.lane.b32.xlu0 %v1342, 31
          %v1564 = vpop.permute.xlu0 %1563
          %1565 = vrot.lane.b32.xlu0 %v1347, 31
          %v1566 = vpop.permute.xlu0 %1565
          %v1567 = vsel %vm673, %v1562, %v1564
          %v1568 = vsel %vm673, %v1564, %v1566
          %v1571 = vsel %vm423, %v1567, 0.0
          %v1572 = vsel %vm423, %v1568, 0.0
          %v1573 = vstv %s386
          %v1574 = vmul.f32 %v1573, %v1571
          %v1575 = vmul.f32 %v1573, %v1572
          %v1576 = vadd.f32 %v1559, %v1574
          %v1577 = vadd.f32 %v1560, %v1575
          %1578 = vrot.lane.b32.xlu0 %v1346, 126
          %v1579 = vpop.permute.xlu0 %1578
          %1580 = vrot.lane.b32.xlu0 %v1342, 126
          %v1581 = vpop.permute.xlu0 %1580
          %1582 = vrot.lane.b32.xlu0 %v1347, 126
          %v1583 = vpop.permute.xlu0 %1582
          %v1584 = vsel %vm691, %v1579, %v1581
          %v1585 = vsel %vm691, %v1581, %v1583
          %v1588 = vsel %vm424, %v1584, 0.0
          %v1589 = vsel %vm424, %v1585, 0.0
          %v1590 = vstv %s345
          %v1591 = vmul.f32 %v1590, %v1588
          %v1592 = vmul.f32 %v1590, %v1589
          %v1593 = vadd.f32 %v1576, %v1591
          %v1594 = vadd.f32 %v1577, %v1592
          %1595 = vrot.lane.b32.xlu0 %v1346, 110
          %v1596 = vpop.permute.xlu0 %1595
          %1597 = vrot.lane.b32.xlu0 %v1342, 110
          %v1598 = vpop.permute.xlu0 %1597
          %1599 = vrot.lane.b32.xlu0 %v1347, 110
          %v1600 = vpop.permute.xlu0 %1599
          %v1601 = vsel %vm709, %v1596, %v1598
          %v1602 = vsel %vm709, %v1598, %v1600
          %v1605 = vsel %vm424, %v1601, 0.0
          %v1606 = vsel %vm424, %v1602, 0.0
          %v1607 = vstv %s352
          %v1608 = vmul.f32 %v1607, %v1605
          %v1609 = vmul.f32 %v1607, %v1606
          %v1610 = vadd.f32 %v1593, %v1608
          %v1611 = vadd.f32 %v1594, %v1609
          %1612 = vrot.lane.b32.xlu0 %v1346, 94
          %v1613 = vpop.permute.xlu0 %1612
          %1614 = vrot.lane.b32.xlu0 %v1342, 94
          %v1615 = vpop.permute.xlu0 %1614
          %1616 = vrot.lane.b32.xlu0 %v1347, 94
          %v1617 = vpop.permute.xlu0 %1616
          %v1618 = vsel %vm727, %v1613, %v1615
          %v1619 = vsel %vm727, %v1615, %v1617
          %v1622 = vsel %vm424, %v1618, 0.0
          %v1623 = vsel %vm424, %v1619, 0.0
          %v1624 = vstv %s359
          %v1625 = vmul.f32 %v1624, %v1622
          %v1626 = vmul.f32 %v1624, %v1623
          %v1627 = vadd.f32 %v1610, %v1625
          %v1628 = vadd.f32 %v1611, %v1626
          %1629 = vrot.lane.b32.xlu0 %v1346, 78
          %v1630 = vpop.permute.xlu0 %1629
          %1631 = vrot.lane.b32.xlu0 %v1342, 78
          %v1632 = vpop.permute.xlu0 %1631
          %1633 = vrot.lane.b32.xlu0 %v1347, 78
          %v1634 = vpop.permute.xlu0 %1633
          %v1635 = vsel %vm745, %v1630, %v1632
          %v1636 = vsel %vm745, %v1632, %v1634
          %v1639 = vsel %vm424, %v1635, 0.0
          %v1640 = vsel %vm424, %v1636, 0.0
          %v1641 = vstv %s366
          %v1642 = vmul.f32 %v1641, %v1639
          %v1643 = vmul.f32 %v1641, %v1640
          %v1644 = vadd.f32 %v1627, %v1642
          %v1645 = vadd.f32 %v1628, %v1643
          %1646 = vrot.lane.b32.xlu0 %v1346, 62
          %v1647 = vpop.permute.xlu0 %1646
          %1648 = vrot.lane.b32.xlu0 %v1342, 62
          %v1649 = vpop.permute.xlu0 %1648
          %1650 = vrot.lane.b32.xlu0 %v1347, 62
          %v1651 = vpop.permute.xlu0 %1650
          %v1652 = vsel %vm763, %v1647, %v1649
          %v1653 = vsel %vm763, %v1649, %v1651
          %v1656 = vsel %vm424, %v1652, 0.0
          %v1657 = vsel %vm424, %v1653, 0.0
          %v1658 = vstv %s373
          %v1659 = vmul.f32 %v1658, %v1656
          %v1660 = vmul.f32 %v1658, %v1657
          %v1661 = vadd.f32 %v1644, %v1659
          %v1662 = vadd.f32 %v1645, %v1660
          %1663 = vrot.lane.b32.xlu0 %v1346, 46
          %v1664 = vpop.permute.xlu0 %1663
          %1665 = vrot.lane.b32.xlu0 %v1342, 46
          %v1666 = vpop.permute.xlu0 %1665
          %1667 = vrot.lane.b32.xlu0 %v1347, 46
          %v1668 = vpop.permute.xlu0 %1667
          %v1669 = vsel %vm781, %v1664, %v1666
          %v1670 = vsel %vm781, %v1666, %v1668
          %v1673 = vsel %vm424, %v1669, 0.0
          %v1674 = vsel %vm424, %v1670, 0.0
          %v1675 = vstv %s380
          %v1676 = vmul.f32 %v1675, %v1673
          %v1677 = vmul.f32 %v1675, %v1674
          %v1678 = vadd.f32 %v1661, %v1676
          %v1679 = vadd.f32 %v1662, %v1677
          %1680 = vrot.lane.b32.xlu0 %v1346, 30
          %v1681 = vpop.permute.xlu0 %1680
          %1682 = vrot.lane.b32.xlu0 %v1342, 30
          %v1683 = vpop.permute.xlu0 %1682
          %1684 = vrot.lane.b32.xlu0 %v1347, 30
          %v1685 = vpop.permute.xlu0 %1684
          %v1686 = vsel %vm799, %v1681, %v1683
          %v1687 = vsel %vm799, %v1683, %v1685
          %v1690 = vsel %vm424, %v1686, 0.0
          %v1691 = vsel %vm424, %v1687, 0.0
          %v1692 = vstv %s387
          %v1693 = vmul.f32 %v1692, %v1690
          %v1694 = vmul.f32 %v1692, %v1691
          %v1695 = vadd.f32 %v1678, %v1693
          %v1696 = vadd.f32 %v1679, %v1694
          %v1697 = vstv %s346
          %v1698 = vmul.f32 %v1697, %v1346
          %v1699 = vmul.f32 %v1697, %v1342
          %v1700 = vmul.f32 %v1697, %v1347
          %1704 = vrot.lane.b32.xlu0 %v1698, 125
          %v1705 = vpop.permute.xlu0 %1704
          %1706 = vrot.lane.b32.xlu0 %v1699, 125
          %v1707 = vpop.permute.xlu0 %1706
          %1708 = vrot.lane.b32.xlu0 %v1700, 125
          %v1709 = vpop.permute.xlu0 %1708
          %v1710 = vsel %vm824, %v1705, %v1707
          %v1711 = vsel %vm824, %v1707, %v1709
          %v1714 = vadd.f32 %v1695, %v1710
          %v1715 = vadd.f32 %v1696, %v1711
          %v1716 = vstv %s353
          %v1717 = vmul.f32 %v1716, %v1346
          %v1718 = vmul.f32 %v1716, %v1342
          %v1719 = vmul.f32 %v1716, %v1347
          %1723 = vrot.lane.b32.xlu0 %v1717, 109
          %v1724 = vpop.permute.xlu0 %1723
          %1725 = vrot.lane.b32.xlu0 %v1718, 109
          %v1726 = vpop.permute.xlu0 %1725
          %1727 = vrot.lane.b32.xlu0 %v1719, 109
          %v1728 = vpop.permute.xlu0 %1727
          %v1729 = vsel %vm844, %v1724, %v1726
          %v1730 = vsel %vm844, %v1726, %v1728
          %v1733 = vadd.f32 %v1714, %v1729
          %v1734 = vadd.f32 %v1715, %v1730
          %v1735 = vstv %s360
          %v1736 = vmul.f32 %v1735, %v1346
          %v1737 = vmul.f32 %v1735, %v1342
          %v1738 = vmul.f32 %v1735, %v1347
          %1742 = vrot.lane.b32.xlu0 %v1736, 93
          %v1743 = vpop.permute.xlu0 %1742
          %1744 = vrot.lane.b32.xlu0 %v1737, 93
          %v1745 = vpop.permute.xlu0 %1744
          %1746 = vrot.lane.b32.xlu0 %v1738, 93
          %v1747 = vpop.permute.xlu0 %1746
          %v1748 = vsel %vm864, %v1743, %v1745
          %v1749 = vsel %vm864, %v1745, %v1747
          %v1752 = vadd.f32 %v1733, %v1748
          %v1753 = vadd.f32 %v1734, %v1749
          %v1754 = vstv %s367
          %v1755 = vmul.f32 %v1754, %v1346
          %v1756 = vmul.f32 %v1754, %v1342
          %v1757 = vmul.f32 %v1754, %v1347
          %1761 = vrot.lane.b32.xlu0 %v1755, 77
          %v1762 = vpop.permute.xlu0 %1761
          %1763 = vrot.lane.b32.xlu0 %v1756, 77
          %v1764 = vpop.permute.xlu0 %1763
          %1765 = vrot.lane.b32.xlu0 %v1757, 77
          %v1766 = vpop.permute.xlu0 %1765
          %v1767 = vsel %vm884, %v1762, %v1764
          %v1768 = vsel %vm884, %v1764, %v1766
          %v1771 = vadd.f32 %v1752, %v1767
          %v1772 = vadd.f32 %v1753, %v1768
          %v1773 = vstv %s374
          %v1774 = vmul.f32 %v1773, %v1346
          %v1775 = vmul.f32 %v1773, %v1342
          %v1776 = vmul.f32 %v1773, %v1347
          %1780 = vrot.lane.b32.xlu0 %v1774, 61
          %v1781 = vpop.permute.xlu0 %1780
          %1782 = vrot.lane.b32.xlu0 %v1775, 61
          %v1783 = vpop.permute.xlu0 %1782
          %1784 = vrot.lane.b32.xlu0 %v1776, 61
          %v1785 = vpop.permute.xlu0 %1784
          %v1786 = vsel %vm904, %v1781, %v1783
          %v1787 = vsel %vm904, %v1783, %v1785
          %v1790 = vadd.f32 %v1771, %v1786
          %v1791 = vadd.f32 %v1772, %v1787
          %v1792 = vstv %s381
          %v1793 = vmul.f32 %v1792, %v1346
          %v1794 = vmul.f32 %v1792, %v1342
          %v1795 = vmul.f32 %v1792, %v1347
          %1799 = vrot.lane.b32.xlu0 %v1793, 45
          %v1800 = vpop.permute.xlu0 %1799
          %1801 = vrot.lane.b32.xlu0 %v1794, 45
          %v1802 = vpop.permute.xlu0 %1801
          %1803 = vrot.lane.b32.xlu0 %v1795, 45
          %v1804 = vpop.permute.xlu0 %1803
          %v1805 = vsel %vm924, %v1800, %v1802
          %v1806 = vsel %vm924, %v1802, %v1804
          %v1809 = vadd.f32 %v1790, %v1805
          %v1810 = vadd.f32 %v1791, %v1806
          %v1811 = vstv %s388
          %v1812 = vmul.f32 %v1811, %v1346
          %v1813 = vmul.f32 %v1811, %v1342
          %v1814 = vmul.f32 %v1811, %v1347
          %1818 = vrot.lane.b32.xlu0 %v1812, 29
          %v1819 = vpop.permute.xlu0 %1818
          %1820 = vrot.lane.b32.xlu0 %v1813, 29
          %v1821 = vpop.permute.xlu0 %1820
          %1822 = vrot.lane.b32.xlu0 %v1814, 29
          %v1823 = vpop.permute.xlu0 %1822
          %v1824 = vsel %vm944, %v1819, %v1821
          %v1825 = vsel %vm944, %v1821, %v1823
          %v1828 = vadd.f32 %v1809, %v1824
          %v1829 = vadd.f32 %v1810, %v1825
          %1830 = vrot.lane.b32.xlu0 %v1346, 124
          %v1831 = vpop.permute.xlu0 %1830
          %1832 = vrot.lane.b32.xlu0 %v1342, 124
          %v1833 = vpop.permute.xlu0 %1832
          %1834 = vrot.lane.b32.xlu0 %v1347, 124
          %v1835 = vpop.permute.xlu0 %1834
          %v1836 = vsel %vm957, %v1831, %v1833
          %v1837 = vsel %vm957, %v1833, %v1835
          %v1840 = vsel %vm425, %v1836, 0.0
          %v1841 = vsel %vm425, %v1837, 0.0
          %v1842 = vstv %s347
          %v1843 = vmul.f32 %v1842, %v1840
          %v1844 = vmul.f32 %v1842, %v1841
          %v1845 = vadd.f32 %v1828, %v1843
          %v1846 = vadd.f32 %v1829, %v1844
          %1847 = vrot.lane.b32.xlu0 %v1346, 108
          %v1848 = vpop.permute.xlu0 %1847
          %1849 = vrot.lane.b32.xlu0 %v1342, 108
          %v1850 = vpop.permute.xlu0 %1849
          %1851 = vrot.lane.b32.xlu0 %v1347, 108
          %v1852 = vpop.permute.xlu0 %1851
          %v1853 = vsel %vm975, %v1848, %v1850
          %v1854 = vsel %vm975, %v1850, %v1852
          %v1857 = vsel %vm425, %v1853, 0.0
          %v1858 = vsel %vm425, %v1854, 0.0
          %v1859 = vstv %s354
          %v1860 = vmul.f32 %v1859, %v1857
          %v1861 = vmul.f32 %v1859, %v1858
          %v1862 = vadd.f32 %v1845, %v1860
          %v1863 = vadd.f32 %v1846, %v1861
          %1864 = vrot.lane.b32.xlu0 %v1346, 92
          %v1865 = vpop.permute.xlu0 %1864
          %1866 = vrot.lane.b32.xlu0 %v1342, 92
          %v1867 = vpop.permute.xlu0 %1866
          %1868 = vrot.lane.b32.xlu0 %v1347, 92
          %v1869 = vpop.permute.xlu0 %1868
          %v1870 = vsel %vm993, %v1865, %v1867
          %v1871 = vsel %vm993, %v1867, %v1869
          %v1874 = vsel %vm425, %v1870, 0.0
          %v1875 = vsel %vm425, %v1871, 0.0
          %v1876 = vstv %s361
          %v1877 = vmul.f32 %v1876, %v1874
          %v1878 = vmul.f32 %v1876, %v1875
          %v1879 = vadd.f32 %v1862, %v1877
          %v1880 = vadd.f32 %v1863, %v1878
          %1881 = vrot.lane.b32.xlu0 %v1346, 76
          %v1882 = vpop.permute.xlu0 %1881
          %1883 = vrot.lane.b32.xlu0 %v1342, 76
          %v1884 = vpop.permute.xlu0 %1883
          %1885 = vrot.lane.b32.xlu0 %v1347, 76
          %v1886 = vpop.permute.xlu0 %1885
          %v1887 = vsel %vm1011, %v1882, %v1884
          %v1888 = vsel %vm1011, %v1884, %v1886
          %v1891 = vsel %vm425, %v1887, 0.0
          %v1892 = vsel %vm425, %v1888, 0.0
          %v1893 = vstv %s368
          %v1894 = vmul.f32 %v1893, %v1891
          %v1895 = vmul.f32 %v1893, %v1892
          %v1896 = vadd.f32 %v1879, %v1894
          %v1897 = vadd.f32 %v1880, %v1895
          %1898 = vrot.lane.b32.xlu0 %v1346, 60
          %v1899 = vpop.permute.xlu0 %1898
          %1900 = vrot.lane.b32.xlu0 %v1342, 60
          %v1901 = vpop.permute.xlu0 %1900
          %1902 = vrot.lane.b32.xlu0 %v1347, 60
          %v1903 = vpop.permute.xlu0 %1902
          %v1904 = vsel %vm1029, %v1899, %v1901
          %v1905 = vsel %vm1029, %v1901, %v1903
          %v1908 = vsel %vm425, %v1904, 0.0
          %v1909 = vsel %vm425, %v1905, 0.0
          %v1910 = vstv %s375
          %v1911 = vmul.f32 %v1910, %v1908
          %v1912 = vmul.f32 %v1910, %v1909
          %v1913 = vadd.f32 %v1896, %v1911
          %v1914 = vadd.f32 %v1897, %v1912
          %1915 = vrot.lane.b32.xlu0 %v1346, 44
          %v1916 = vpop.permute.xlu0 %1915
          %1917 = vrot.lane.b32.xlu0 %v1342, 44
          %v1918 = vpop.permute.xlu0 %1917
          %1919 = vrot.lane.b32.xlu0 %v1347, 44
          %v1920 = vpop.permute.xlu0 %1919
          %v1921 = vsel %vm1047, %v1916, %v1918
          %v1922 = vsel %vm1047, %v1918, %v1920
          %v1925 = vsel %vm425, %v1921, 0.0
          %v1926 = vsel %vm425, %v1922, 0.0
          %v1927 = vstv %s382
          %v1928 = vmul.f32 %v1927, %v1925
          %v1929 = vmul.f32 %v1927, %v1926
          %v1930 = vadd.f32 %v1913, %v1928
          %v1931 = vadd.f32 %v1914, %v1929
          %1932 = vrot.lane.b32.xlu0 %v1346, 28
          %v1933 = vpop.permute.xlu0 %1932
          %1934 = vrot.lane.b32.xlu0 %v1342, 28
          %v1935 = vpop.permute.xlu0 %1934
          %1936 = vrot.lane.b32.xlu0 %v1347, 28
          %v1937 = vpop.permute.xlu0 %1936
          %v1938 = vsel %vm1065, %v1933, %v1935
          %v1939 = vsel %vm1065, %v1935, %v1937
          %v1942 = vsel %vm425, %v1938, 0.0
          %v1943 = vsel %vm425, %v1939, 0.0
          %v1944 = vstv %s389
          %v1945 = vmul.f32 %v1944, %v1942
          %v1946 = vmul.f32 %v1944, %v1943
          %v1947 = vadd.f32 %v1930, %v1945
          %v1948 = vadd.f32 %v1931, %v1946
          %1949 = vrot.lane.b32.xlu0 %v1346, 123
          %v1950 = vpop.permute.xlu0 %1949
          %1951 = vrot.lane.b32.xlu0 %v1342, 123
          %v1952 = vpop.permute.xlu0 %1951
          %1953 = vrot.lane.b32.xlu0 %v1347, 123
          %v1954 = vpop.permute.xlu0 %1953
          %v1955 = vsel %vm1083, %v1950, %v1952
          %v1956 = vsel %vm1083, %v1952, %v1954
          %v1959 = vsel %vm426, %v1955, 0.0
          %v1960 = vsel %vm426, %v1956, 0.0
          %v1961 = vstv %s348
          %v1962 = vmul.f32 %v1961, %v1959
          %v1963 = vmul.f32 %v1961, %v1960
          %v1964 = vadd.f32 %v1947, %v1962
          %v1965 = vadd.f32 %v1948, %v1963
          %1966 = vrot.lane.b32.xlu0 %v1346, 107
          %v1967 = vpop.permute.xlu0 %1966
          %1968 = vrot.lane.b32.xlu0 %v1342, 107
          %v1969 = vpop.permute.xlu0 %1968
          %1970 = vrot.lane.b32.xlu0 %v1347, 107
          %v1971 = vpop.permute.xlu0 %1970
          %v1972 = vsel %vm1101, %v1967, %v1969
          %v1973 = vsel %vm1101, %v1969, %v1971
          %v1976 = vsel %vm426, %v1972, 0.0
          %v1977 = vsel %vm426, %v1973, 0.0
          %v1978 = vstv %s355
          %v1979 = vmul.f32 %v1978, %v1976
          %v1980 = vmul.f32 %v1978, %v1977
          %v1981 = vadd.f32 %v1964, %v1979
          %v1982 = vadd.f32 %v1965, %v1980
          %1983 = vrot.lane.b32.xlu0 %v1346, 91
          %v1984 = vpop.permute.xlu0 %1983
          %1985 = vrot.lane.b32.xlu0 %v1342, 91
          %v1986 = vpop.permute.xlu0 %1985
          %1987 = vrot.lane.b32.xlu0 %v1347, 91
          %v1988 = vpop.permute.xlu0 %1987
          %v1989 = vsel %vm1119, %v1984, %v1986
          %v1990 = vsel %vm1119, %v1986, %v1988
          %v1993 = vsel %vm426, %v1989, 0.0
          %v1994 = vsel %vm426, %v1990, 0.0
          %v1995 = vstv %s362
          %v1996 = vmul.f32 %v1995, %v1993
          %v1997 = vmul.f32 %v1995, %v1994
          %v1998 = vadd.f32 %v1981, %v1996
          %v1999 = vadd.f32 %v1982, %v1997
          %2000 = vrot.lane.b32.xlu0 %v1346, 75
          %v2001 = vpop.permute.xlu0 %2000
          %2002 = vrot.lane.b32.xlu0 %v1342, 75
          %v2003 = vpop.permute.xlu0 %2002
          %2004 = vrot.lane.b32.xlu0 %v1347, 75
          %v2005 = vpop.permute.xlu0 %2004
          %v2006 = vsel %vm1137, %v2001, %v2003
          %v2007 = vsel %vm1137, %v2003, %v2005
          %v2010 = vsel %vm426, %v2006, 0.0
          %v2011 = vsel %vm426, %v2007, 0.0
          %v2012 = vstv %s369
          %v2013 = vmul.f32 %v2012, %v2010
          %v2014 = vmul.f32 %v2012, %v2011
          %v2015 = vadd.f32 %v1998, %v2013
          %v2016 = vadd.f32 %v1999, %v2014
          %2017 = vrot.lane.b32.xlu0 %v1346, 59
          %v2018 = vpop.permute.xlu0 %2017
          %2019 = vrot.lane.b32.xlu0 %v1342, 59
          %v2020 = vpop.permute.xlu0 %2019
          %2021 = vrot.lane.b32.xlu0 %v1347, 59
          %v2022 = vpop.permute.xlu0 %2021
          %v2023 = vsel %vm1155, %v2018, %v2020
          %v2024 = vsel %vm1155, %v2020, %v2022
          %v2027 = vsel %vm426, %v2023, 0.0
          %v2028 = vsel %vm426, %v2024, 0.0
          %v2029 = vstv %s376
          %v2030 = vmul.f32 %v2029, %v2027
          %v2031 = vmul.f32 %v2029, %v2028
          %v2032 = vadd.f32 %v2015, %v2030
          %v2033 = vadd.f32 %v2016, %v2031
          %2034 = vrot.lane.b32.xlu0 %v1346, 43
          %v2035 = vpop.permute.xlu0 %2034
          %2036 = vrot.lane.b32.xlu0 %v1342, 43
          %v2037 = vpop.permute.xlu0 %2036
          %2038 = vrot.lane.b32.xlu0 %v1347, 43
          %v2039 = vpop.permute.xlu0 %2038
          %v2040 = vsel %vm1173, %v2035, %v2037
          %v2041 = vsel %vm1173, %v2037, %v2039
          %v2044 = vsel %vm426, %v2040, 0.0
          %v2045 = vsel %vm426, %v2041, 0.0
          %v2046 = vstv %s383
          %v2047 = vmul.f32 %v2046, %v2044
          %v2048 = vmul.f32 %v2046, %v2045
          %v2049 = vadd.f32 %v2032, %v2047
          %v2050 = vadd.f32 %v2033, %v2048
          %2051 = vrot.lane.b32.xlu0 %v1346, 27
          %v2052 = vpop.permute.xlu0 %2051
          %2053 = vrot.lane.b32.xlu0 %v1342, 27
          %v2054 = vpop.permute.xlu0 %2053
          %2055 = vrot.lane.b32.xlu0 %v1347, 27
          %v2056 = vpop.permute.xlu0 %2055
          %v2057 = vsel %vm1191, %v2052, %v2054
          %v2058 = vsel %vm1191, %v2054, %v2056
          %v2061 = vsel %vm426, %v2057, 0.0
          %v2062 = vsel %vm426, %v2058, 0.0
          %v2063 = vstv %s390
          %v2064 = vmul.f32 %v2063, %v2061
          %v2065 = vmul.f32 %v2063, %v2062
          %v2066 = vadd.f32 %v2049, %v2064
          %v2067 = vadd.f32 %v2050, %v2065
          %2068 = vrot.lane.b32.xlu0 %v1346, 122
          %v2069 = vpop.permute.xlu0 %2068
          %2070 = vrot.lane.b32.xlu0 %v1342, 122
          %v2071 = vpop.permute.xlu0 %2070
          %2072 = vrot.lane.b32.xlu0 %v1347, 122
          %v2073 = vpop.permute.xlu0 %2072
          %v2074 = vsel %vm1209, %v2069, %v2071
          %v2075 = vsel %vm1209, %v2071, %v2073
          %v2078 = vsel %vm427, %v2074, 0.0
          %v2079 = vsel %vm427, %v2075, 0.0
          %v2080 = vstv %s349
          %v2081 = vmul.f32 %v2080, %v2078
          %v2082 = vmul.f32 %v2080, %v2079
          %v2083 = vadd.f32 %v2066, %v2081
          %v2084 = vadd.f32 %v2067, %v2082
          %2085 = vrot.lane.b32.xlu0 %v1346, 106
          %v2086 = vpop.permute.xlu0 %2085
          %2087 = vrot.lane.b32.xlu0 %v1342, 106
          %v2088 = vpop.permute.xlu0 %2087
          %2089 = vrot.lane.b32.xlu0 %v1347, 106
          %v2090 = vpop.permute.xlu0 %2089
          %v2091 = vsel %vm1227, %v2086, %v2088
          %v2092 = vsel %vm1227, %v2088, %v2090
          %v2095 = vsel %vm427, %v2091, 0.0
          %v2096 = vsel %vm427, %v2092, 0.0
          %v2097 = vstv %s356
          %v2098 = vmul.f32 %v2097, %v2095
          %v2099 = vmul.f32 %v2097, %v2096
          %v2100 = vadd.f32 %v2083, %v2098
          %v2101 = vadd.f32 %v2084, %v2099
          %2102 = vrot.lane.b32.xlu0 %v1346, 90
          %v2103 = vpop.permute.xlu0 %2102
          %2104 = vrot.lane.b32.xlu0 %v1342, 90
          %v2105 = vpop.permute.xlu0 %2104
          %2106 = vrot.lane.b32.xlu0 %v1347, 90
          %v2107 = vpop.permute.xlu0 %2106
          %v2108 = vsel %vm1245, %v2103, %v2105
          %v2109 = vsel %vm1245, %v2105, %v2107
          %v2112 = vsel %vm427, %v2108, 0.0
          %v2113 = vsel %vm427, %v2109, 0.0
          %v2114 = vstv %s363
          %v2115 = vmul.f32 %v2114, %v2112
          %v2116 = vmul.f32 %v2114, %v2113
          %v2117 = vadd.f32 %v2100, %v2115
          %v2118 = vadd.f32 %v2101, %v2116
          %2119 = vrot.lane.b32.xlu0 %v1346, 74
          %v2120 = vpop.permute.xlu0 %2119
          %2121 = vrot.lane.b32.xlu0 %v1342, 74
          %v2122 = vpop.permute.xlu0 %2121
          %2123 = vrot.lane.b32.xlu0 %v1347, 74
          %v2124 = vpop.permute.xlu0 %2123
          %v2125 = vsel %vm1263, %v2120, %v2122
          %v2126 = vsel %vm1263, %v2122, %v2124
          %v2129 = vsel %vm427, %v2125, 0.0
          %v2130 = vsel %vm427, %v2126, 0.0
          %v2131 = vstv %s370
          %v2132 = vmul.f32 %v2131, %v2129
          %v2133 = vmul.f32 %v2131, %v2130
          %v2134 = vadd.f32 %v2117, %v2132
          %v2135 = vadd.f32 %v2118, %v2133
          %2136 = vrot.lane.b32.xlu0 %v1346, 58
          %v2137 = vpop.permute.xlu0 %2136
          %2138 = vrot.lane.b32.xlu0 %v1342, 58
          %v2139 = vpop.permute.xlu0 %2138
          %2140 = vrot.lane.b32.xlu0 %v1347, 58
          %v2141 = vpop.permute.xlu0 %2140
          %v2142 = vsel %vm1281, %v2137, %v2139
          %v2143 = vsel %vm1281, %v2139, %v2141
          %v2146 = vsel %vm427, %v2142, 0.0
          %v2147 = vsel %vm427, %v2143, 0.0
          %v2148 = vstv %s377
          %v2149 = vmul.f32 %v2148, %v2146
          %v2150 = vmul.f32 %v2148, %v2147
          %v2151 = vadd.f32 %v2134, %v2149
          %v2152 = vadd.f32 %v2135, %v2150
          %2153 = vrot.lane.b32.xlu0 %v1346, 42
          %v2154 = vpop.permute.xlu0 %2153
          %2155 = vrot.lane.b32.xlu0 %v1342, 42
          %v2156 = vpop.permute.xlu0 %2155
          %2157 = vrot.lane.b32.xlu0 %v1347, 42
          %v2158 = vpop.permute.xlu0 %2157
          %v2159 = vsel %vm1299, %v2154, %v2156
          %v2160 = vsel %vm1299, %v2156, %v2158
          %v2163 = vsel %vm427, %v2159, 0.0
          %v2164 = vsel %vm427, %v2160, 0.0
          %v2165 = vstv %s384
          %v2166 = vmul.f32 %v2165, %v2163
          %v2167 = vmul.f32 %v2165, %v2164
          %v2168 = vadd.f32 %v2151, %v2166
          %v2169 = vadd.f32 %v2152, %v2167
          %2170 = vrot.lane.b32.xlu0 %v1346, 26
          %v2171 = vpop.permute.xlu0 %2170
          %2172 = vrot.lane.b32.xlu0 %v1342, 26
          %v2173 = vpop.permute.xlu0 %2172
          %2174 = vrot.lane.b32.xlu0 %v1347, 26
          %v2175 = vpop.permute.xlu0 %2174
          %v2176 = vsel %vm1317, %v2171, %v2173
          %v2177 = vsel %vm1317, %v2173, %v2175
          %v2180 = vsel %vm427, %v2176, 0.0
          %v2181 = vsel %vm427, %v2177, 0.0
          %v2182 = vstv %s391
          %v2183 = vmul.f32 %v2182, %v2180
          %v2184 = vmul.f32 %v2182, %v2181
          %v2185 = vadd.f32 %v2168, %v2183
          %v2186 = vadd.f32 %v2169, %v2184
          %v2187 = vxor.u32 %v2185, 2147483648
          %v2188 = vxor.u32 %v2186, 2147483648
          %v2189 = vmul.f32 %v2187, 1.442695
          %v2190 = vpow.pop %v2189
          %v2191 = vmul.f32 %v2188, 1.442695
          %v2192 = vpow.pop %v2191
          %v2193 = vadd.f32 %v2190, 1.0
          %v2194 = vadd.f32 %v2192, 1.0
          %v2195 = vrcp.pop %v2193
          %v2196 = vmul.f32 1.0, %v2195
          %v2197 = vrcp.pop %v2194
          %v2198 = vmul.f32 1.0, %v2197
          %v2201 = vcombine.low %v2196, %v2198
          %v2203 = vunpack.c.l.s4 1966171168
          %v2204 = vunpack.c.0.s8 %v2203
          %v2205 = vlaneseq
          %v2206 = vshrl.u32 %v2205, 7
          %v2207 = vsub.s32 %v2204, %v2206
          %v2208 = vrot.slane %v2201, %v2207
          %v2210 = vunpack.c.l.s4 1966171168
          %v2211 = vunpack.c.0.s8 %v2210
          %v2212 = vlaneseq
          %v2213 = vshrl.u32 %v2212, 7
          %v2214 = vsub.s32 %v2211, %v2213
          %v2215 = vrot.slane %v2208, %v2214
          %v2217 = vlaneseq
          %vm2218 = vcmp.ge.s32.totalorder %v2217, 0
          %vm2219 = vcmp.lt.s32.totalorder %v2217, 256
          %vm2220 = vmand %vm2218, %vm2219
          %2221 = vst.msk [vmem:[%s153] sm:$0x3] %vm2220, %v2215
        $region40: #{tpu_custom_call.1} parent=23 // pred_fallthru
          _
        %s2222 = sand.u32 %s71, 1
        %s2223 = scalar_lea.sflag [#allocation8], %s2222
        %s2224 = sand.u32 %s71, 1
        %s2225 = smul.addr %s2224, 2
        %s2226 = scalar_lea.vmem [#allocation9], %s2225
        // Predicated region
        $region41: #{tpu_custom_call.1} parent=23 // pred_check
          %p2227 = pneg %p81
        $region42: #{tpu_custom_call.1} parent=23 // pred_check_branch
          %2229 = sbr.rel (%p2227) target = $region44
        $region43: #{tpu_custom_call.1} parent=23 // pred_region
          %s2231 = ssub.s32 32, 32
          %2232 = vsyncadd %s2223, %s2231
          %s2233 = smul.addr %s27, 2
          %s2234 = smul.addr %s2233, 16
          %s2235 = scalar_lea.hbm %s2, %s2234
          %s2237 = sshll.u32 %s2226, 4
          %s2238 = int_to_ptr.vmem [resolvable:$true] %s2237
          %2240 = dma.vmem_to_hbm [thread:$0]  %s2238, 32, %s2235, %s2223
        $region44: #{tpu_custom_call.1} parent=23 // pred_fallthru
          _
      $region24: #{tpu_custom_call.1} parent=5 // pred_fallthru
        _
      %p2241 = scmp.le.s32.totalorder 2, %s18
      // Predicated region
      $region45: #{tpu_custom_call.1} parent=5 // pred_check
        %p2242 = pneg %p2241
      $region46: #{tpu_custom_call.1} parent=5 // pred_check_branch
        %2244 = sbr.rel (%p2242) target = $region48
      $region47: #{tpu_custom_call.1} parent=5 // pred_region
        %s2245 = ssub.s32 %s18, 2
        // Predicated region
        $region49: #{tpu_custom_call.1} parent=47 // pred_check
          %p2246 = pneg %p87
        $region50: #{tpu_custom_call.1} parent=47 // pred_check_branch
          %2248 = sbr.rel (%p2246) target = $region52
        $region51: #{tpu_custom_call.1} parent=47 // pred_region
          %s2249 = sand.u32 %s72, 1
          %s2250 = scalar_lea.sflag [#allocation8], %s2249
          %s2251 = sand.u32 %s72, 1
          %s2252 = smul.addr %s2251, 2
          %s2253 = scalar_lea.vmem [#allocation9], %s2252
          %2254 = dma.done %s2250, 32
        $region52: #{tpu_custom_call.1} parent=47 // pred_fallthru
          _
      $region48: #{tpu_custom_call.1} parent=5 // pred_fallthru
        _
    $region6: #{tpu_custom_call.1} parent=1 // loop_footer
      %s22 = sadd.s32 1, %s18
    $region7: #{tpu_custom_call.1} parent=1 // loop_footer_branch
      %17 = sbr.rel target = $region3
    $region8: #{tpu_custom_call.1} parent=1 // loop_exit
      _
    %2255 = vsyncpa [#allocation7], 1
    %s2256 = scalar_lea.sflag [#allocation7], 1
    %2257 = vsyncpa %s2256, 1
    %2258 = vsyncpa [#allocation8], 1
    %s2259 = scalar_lea.sflag [#allocation8], 1
    %2260 = vsyncpa %s2259, 1

</llo_original>
